<compile_context>
chip_gen: v6e
topology: v6e:2x2x1
jax: 0.10.0
libtpu: 0.0.40
codegen_flags: <defaults>
</compile_context>

<pallas_src>
import functools

import jax
import jax.numpy as jnp
from jax.experimental import pallas as pl
from jax.experimental.pallas import tpu as pltpu

LN_EPS = 1e-5          # PyTorch nn.LayerNorm default
_NEG_INF = -1e30       # additive mask for padded keys


def _layernorm(v, g, b):
    mu = jnp.mean(v, axis=-1, keepdims=True)
    var = jnp.mean((v - mu) ** 2, axis=-1, keepdims=True)
    return (v - mu) * jax.lax.rsqrt(var + LN_EPS) * g + b


def _gelu_exact(x):
    # nn.GELU() default in PyTorch is the exact erf-based GELU.
    return 0.5 * x * (1.0 + jax.lax.erf(x * 0.7071067811865476))


def block_kernel(kbias_ref, x_ref,
                 g1_ref, be1_ref,
                 wqkv_ref, wproj_ref, bproj_ref,
                 g2_ref, be2_ref,
                 w1_ref, bm1_ref, w2_ref, bm2_ref,
                 o_ref,
                 qkv_ref, ctx_ref,
                 *, num_heads, head_dim, tokens, imgs, masked, hidden_chunk):
    bf16 = jnp.bfloat16
    f32 = jnp.float32

    x = x_ref[...]                                   # (M, D) f32, M = imgs * tokens
    D = x.shape[1]
    H = w1_ref.shape[1]

    # ---------------- attention branch ----------------
    h = _layernorm(x, g1_ref[0], be1_ref[0])
    # qkv_bias=False; 1/sqrt(head_dim) is pre-folded into the Q columns of wqkv.
    qkv_ref[...] = jnp.dot(h.astype(bf16), wqkv_ref[...],
                           preferred_element_type=f32).astype(bf16)   # (M, 3D)

    if masked:
        # loop-invariant key mask, broadcast ONCE (not per head / per image)
        kb = jnp.broadcast_to(kbias_ref[...], (tokens, tokens))

    # contract last dims of both operands (Q @ K^T without materializing K^T)
    qk_dims = (((1,), (1,)), ((), ()))

    def attend_one_image(r0):
        rows = pl.ds(r0, tokens)
        for hh in range(num_heads):                  # static lane offsets only
            c0 = hh * head_dim
            qh = qkv_ref[rows, c0:c0 + head_dim]
            kh = qkv_ref[rows, D + c0:D + c0 + head_dim]
            vh = qkv_ref[rows, 2 * D + c0:2 * D + c0 + head_dim]
            s = jax.lax.dot_general(qh, kh, qk_dims,
                                    preferred_element_type=f32)       # (tokens, tokens)
            if masked:
                s = s + kb
            s = s - jnp.max(s, axis=-1, keepdims=True)
            p = jnp.exp(s)
            p = p * pl.reciprocal(jnp.sum(p, axis=-1, keepdims=True), approx=True)
            ctx = jnp.dot(p.astype(bf16), vh,
                          preferred_element_type=f32)                 # (tokens, head_dim)
            # write straight into this head's lane slab of the (M, D) scratch
            ctx_ref[rows, c0:c0 + head_dim] = ctx

    if imgs == 1:
        attend_one_image(0)
    else:
        def img_body(bi, carry):
            attend_one_image(pl.multiple_of(bi * tokens, 8))
            return carry
        jax.lax.fori_loop(0, imgs, img_body, 0)

    # ONE full-depth projection matmul (K = D) instead of num_heads K=head_dim ones.
    attn = jnp.dot(ctx_ref[...].astype(bf16), wproj_ref[...],
                   preferred_element_type=f32)                         # (M, D)
    x = x + attn + bproj_ref[0]                      # residual 1 (+ proj bias)

    # ---------------- MLP branch (hidden dim chunked) ----------------
    h2 = _layernorm(x, g2_ref[0], be2_ref[0]).astype(bf16)
    out = x + bm2_ref[0]
    for c0 in range(0, H, hidden_chunk):
        a = jnp.dot(h2, w1_ref[:, c0:c0 + hidden_chunk],
                    preferred_element_type=f32) + bm1_ref[:, c0:c0 + hidden_chunk]
        a = _gelu_exact(a)                           # exact erf GELU, f32
        out = out + jnp.dot(a.astype(bf16), w2_ref[c0:c0 + hidden_chunk, :],
                            preferred_element_type=f32)
    o_ref[...] = out                                 # residual 2


def prepare_params(params, *, num_heads):
    """One-time host-side transform: fold 1/sqrt(head_dim) into the Q columns of
    wqkv and cast the large matrices to bf16 (matmuls still accumulate in f32)."""
    D = params["wqkv"].shape[0]
    scale = jnp.float32((D // num_heads) ** -0.5)
    wqkv = params["wqkv"]
    wqkv = jnp.concatenate([wqkv[:, :D] * scale, wqkv[:, D:]], axis=1)
    out = dict(params)
    out["wqkv"] = wqkv.astype(jnp.bfloat16)
    out["wproj"] = params["wproj"].astype(jnp.bfloat16)
    out["w1"] = params["w1"].astype(jnp.bfloat16)
    out["w2"] = params["w2"].astype(jnp.bfloat16)
    return out


def _pick_hidden_chunk(H, target=1024):
    """Largest 128-multiple divisor of H that is <= target (or H if none)."""
    if H <= target:
        return H
    for hc in range(target, 0, -128):
        if H % hc == 0:
            return hc
    return H


def _buffered_supported():
    """Explicit construction-time probe for pl.Buffered / pipeline_mode support."""
    try:
        pl.BlockSpec((8, 128), lambda b: (0, 0), pipeline_mode=pl.Buffered(1))
        return True
    except Exception:
        return False


def _vmem_capacity_bytes():
    try:
        return int(pltpu.get_tpu_info().vmem_capacity_bytes)
    except Exception:
        return 64 * 1024 * 1024   # conservative fallback: v7x per-TensorCore VMEM


def _step_activation_bytes(M, D, H, hc, Np):
    return (2 * 2 * M * D * 4        # x in + out blocks, double-buffered, f32
            + M * 3 * D * 2          # qkv scratch (bf16)
            + M * D * 4              # per-head context scratch (f32)
            + 4 * M * D * 4          # h / h2 / residual / attn temporaries (f32)
            + 2 * M * hc * 4         # MLP chunk activation + GELU temp (f32)
            + 2 * Np * Np * 4)       # attention score / prob tiles (f32)


def _pick_imgs_per_block(B, Np, D, H, hc, weight_bytes, budget):
    best = 1
    for bt in range(1, min(B, 8) + 1):
        if B % bt:
            continue
        if B >= 2 and B // bt < 2:
            continue                 # keep grid >= 2 so both TCs get work (v7x)
        if weight_bytes + _step_activation_bytes(bt * Np, D, H, hc, Np) <= budget:
            best = bt
    return best


def vit_block(x, params, *, num_heads, imgs_per_block=None):
    """x: (B, N, D) f32. params: output of prepare_params()."""
    B, N, D = x.shape
    H = params["w1"].shape[1]
    assert D % num_heads == 0
    head_dim = D // num_heads

    # Pad the token dim to a sublane multiple (8); padded keys are masked out.
    Np = ((N + 7) // 8) * 8
    n_pad = Np - N
    masked = n_pad > 0
    if masked:
        x = jnp.pad(x, ((0, 0), (0, n_pad), (0, 0)))
    kbias = jnp.where(jnp.arange(Np)[None, :] < N, 0.0, _NEG_INF).astype(jnp.float32)
    x2d = x.reshape(B * Np, D)                      # lane-dense 2-D token slab

    hc = _pick_hidden_chunk(H)
    use_buffered = _buffered_supported()
    weight_bytes = sum(int(v.size) * v.dtype.itemsize for v in params.values())
    if not use_buffered:
        weight_bytes *= 2                           # default double buffering of weights

    # Per-generation VMEM budget (v5e/v6e: 128 MiB -> 96; v7x: 64 MiB/TC -> 48).
    vmem_cap = _vmem_capacity_bytes()
    vmem_limit = int(min((vmem_cap * 3) // 4, 112 * 1024 * 1024))

    if imgs_per_block is None:
        imgs_per_block = _pick_imgs_per_block(
            B, Np, D, H, hc, weight_bytes, int(vmem_limit * 0.8))
    assert B % imgs_per_block == 0
    Bt = imgs_per_block
    M = Bt * Np

    kernel = functools.partial(
        block_kernel, num_heads=num_heads, head_dim=head_dim,
        tokens=Np, imgs=Bt, masked=masked, hidden_chunk=hc)

    flops = 2 * B * Np * (4 * D * D + 2 * D * H) + 4 * B * num_heads * Np * Np * head_dim
    transc = B * num_heads * Np * Np + B * Np * H
    bytes_acc = (2 * B * Np * D * 4 + Np * 4
                 + sum(int(v.size) * v.dtype.itemsize for v in params.values()))

    def moving_spec():
        return pl.BlockSpec((M, D), lambda b: (b, 0))

    def run(single_buffer_weights):
        if single_buffer_weights:
            # grid-invariant operands: no double buffering needed
            def cs(shape):
                return pl.BlockSpec(shape, lambda b: (0,) * len(shape),
                                    pipeline_mode=pl.Buffered(1))
        else:
            def cs(shape):
                return pl.BlockSpec(shape, lambda b: (0,) * len(shape))

        call = pl.pallas_call(
            kernel,
            out_shape=jax.ShapeDtypeStruct((B * Np, D), jnp.float32),
            grid_spec=pltpu.PrefetchScalarGridSpec(
                num_scalar_prefetch=0,
                grid=(B // Bt,),
                in_specs=[
                    cs((1, Np)),                     # key mask bias
                    moving_spec(),                   # x rows (Bt images per step)
                    cs((1, D)), cs((1, D)),          # norm1 gamma / beta
                    cs((D, 3 * D)),                  # qkv weight (bf16, Q pre-scaled)
                    cs((D, D)), cs((1, D)),          # proj weight (bf16) / bias
                    cs((1, D)), cs((1, D)),          # norm2 gamma / beta
                    cs((D, H)), cs((1, H)),          # fc1 weight (bf16) / bias
                    cs((H, D)), cs((1, D)),          # fc2 weight (bf16) / bias
                ],
                out_specs=moving_spec(),
                scratch_shapes=[
                    pltpu.VMEM((M, 3 * D), jnp.bfloat16),   # qkv staging
                    pltpu.VMEM((M, D), jnp.float32),        # per-head context staging
                ]),
            compiler_params=pltpu.CompilerParams(
                dimension_semantics=("parallel",),
                vmem_limit_bytes=vmem_limit),
            cost_estimate=pl.CostEstimate(
                flops=int(flops), transcendentals=int(transc),
                bytes_accessed=int(bytes_acc)),
        )
        return call(kbias, x2d,
                    params["g1"], params["be1"],
                    params["wqkv"],
                    params["wproj"], params["bproj"],
                    params["g2"], params["be2"],
                    params["w1"], params["bm1"],
                    params["w2"], params["bm2"])

    if use_buffered:
        try:
            out2d = run(single_buffer_weights=True)
        except Exception:
            # probe passed but lowering rejected Buffered(1) -> double-buffered weights
            out2d = run(single_buffer_weights=False)
    else:
        out2d = run(single_buffer_weights=False)

    out = out2d.reshape(B, Np, D)
    if masked:
        out = out[:, :N, :]
    return out


# ----------------- pure-JAX reference for validation -----------------
def vit_block_ref(x, params, *, num_heads):
    B, N, D = x.shape
    hd = D // num_heads

    def ln(v, g, b):
        mu = jnp.mean(v, axis=-1, keepdims=True)
        var = jnp.mean((v - mu) ** 2, axis=-1, keepdims=True)
        return (v - mu) / jnp.sqrt(var + LN_EPS) * g[0] + b[0]

    h = ln(x, params["g1"], params["be1"])
    qkv = h @ params["wqkv"]                                   # (B, N, 3D)
    q, k, v = jnp.split(qkv, 3, axis=-1)
    q = q.reshape(B, N, num_heads, hd).transpose(0, 2, 1, 3)
    k = k.reshape(B, N, num_heads, hd).transpose(0, 2, 1, 3)
    v = v.reshape(B, N, num_heads, hd).transpose(0, 2, 1, 3)
    logits = (q * hd ** -0.5) @ k.transpose(0, 1, 3, 2)
    p = jax.nn.softmax(logits, axis=-1)
    o = (p @ v).transpose(0, 2, 1, 3).reshape(B, N, D)
    o = o @ params["wproj"] + params["bproj"][0]
    x = x + o

    h2 = ln(x, params["g2"], params["be2"])
    a = h2 @ params["w1"] + params["bm1"][0]
    a = jax.nn.gelu(a, approximate=False)
    m = a @ params["w2"] + params["bm2"][0]
    return x + m


if __name__ == "__main__":
    f32 = jnp.float32

    def make_params(key, D, H):
        ks = jax.random.split(key, 8)
        p = {
            "g1": jnp.ones((1, D), f32),
            "be1": jnp.zeros((1, D), f32),
            "wqkv": 0.02 * jax.random.normal(ks[0], (D, 3 * D), f32),
            "wproj": 0.02 * jax.random.normal(ks[1], (D, D), f32),
            "bproj": 0.01 * jax.random.normal(ks[2], (1, D), f32),
            "g2": jnp.ones((1, D), f32),
            "be2": jnp.zeros((1, D), f32),
            "w1": 0.02 * jax.random.normal(ks[3], (D, H), f32),
            "bm1": 0.01 * jax.random.normal(ks[4], (1, H), f32),
            "w2": 0.02 * jax.random.normal(ks[5], (H, D), f32),
            "bm2": 0.01 * jax.random.normal(ks[6], (1, D), f32),
        }
        return p, ks[7]

    root = jax.random.PRNGKey(0)
    k1, k2 = jax.random.split(root)

    # Case 1: unmasked token dim (N multiple of 8), one image per grid step.
    B, N, D, num_heads = 2, 8, 32, 4
    H = int(D * 4.0)
    params, kx = make_params(k1, D, H)
    x = jax.random.normal(kx, (B, N, D), f32)
    out = vit_block(x, prepare_params(params, num_heads=num_heads), num_heads=num_heads)
    out = jax.block_until_ready(out)
    ref = vit_block_ref(x, params, num_heads=num_heads)
    assert out.shape == (B, N, D)
    err1 = jnp.max(jnp.abs(out - ref))
    # bf16 matmul operands with f32 accumulation -> loosened tolerance vs f32 ref
    assert jnp.allclose(out, ref, atol=2e-2, rtol=2e-2), f"case1 max abs err {err1}"

    # Case 2: padded/masked token dim + two images per grid step (fori_loop path).
    B, N, D, num_heads = 4, 10, 64, 4
    H = int(D * 4.0)
    params2, kx2 = make_params(k2, D, H)
    x2 = jax.random.normal(kx2, (B, N, D), f32)
    out2 = vit_block(x2, prepare_params(params2, num_heads=num_heads),
                     num_heads=num_heads, imgs_per_block=2)
    out2 = jax.block_until_ready(out2)
    ref2 = vit_block_ref(x2, params2, num_heads=num_heads)
    assert out2.shape == (B, N, D)
    err2 = jnp.max(jnp.abs(out2 - ref2))
    assert jnp.allclose(out2, ref2, atol=2e-2, rtol=2e-2), f"case2 max abs err {err2}"

    print("KERNEL_OK")
</pallas_src>

<mosaic_0001>
module attributes {stable_mosaic.version = 11 : i64} {
  func.func @block_kernel(%arg0: i32, %arg1: memref<1x8xf32, #tpu.memory_space<vmem>>, %arg2: memref<8x32xf32, #tpu.memory_space<vmem>>, %arg3: memref<1x32xf32, #tpu.memory_space<vmem>>, %arg4: memref<1x32xf32, #tpu.memory_space<vmem>>, %arg5: memref<32x96xbf16, #tpu.memory_space<vmem>>, %arg6: memref<32x32xbf16, #tpu.memory_space<vmem>>, %arg7: memref<1x32xf32, #tpu.memory_space<vmem>>, %arg8: memref<1x32xf32, #tpu.memory_space<vmem>>, %arg9: memref<1x32xf32, #tpu.memory_space<vmem>>, %arg10: memref<32x128xbf16, #tpu.memory_space<vmem>>, %arg11: memref<1x128xf32, #tpu.memory_space<vmem>>, %arg12: memref<128x32xbf16, #tpu.memory_space<vmem>>, %arg13: memref<1x32xf32, #tpu.memory_space<vmem>>, %arg14: memref<8x32xf32, #tpu.memory_space<vmem>>, %arg15: memref<8x96xbf16, #tpu.memory_space<vmem>>, %arg16: memref<8x32xf32, #tpu.memory_space<vmem>>) attributes {dimension_semantics = [#tpu.dimension_semantics<parallel>], iteration_bounds = array<i64: 2>, scalar_prefetch = 0 : i64, scratch_operands = 2 : i64, tpu.core_type = #tpu.core_type<tc>, window_params = [{pipeline_mode = #tpu.pipeline_mode<synchronous>, transform_indices = @transform_0, window_bounds = array<i64: 1, 8>}, {transform_indices = @transform_1, window_bounds = array<i64: 8, 32>}, {pipeline_mode = #tpu.pipeline_mode<synchronous>, transform_indices = @transform_2, window_bounds = array<i64: 1, 32>}, {pipeline_mode = #tpu.pipeline_mode<synchronous>, transform_indices = @transform_3, window_bounds = array<i64: 1, 32>}, {pipeline_mode = #tpu.pipeline_mode<synchronous>, transform_indices = @transform_4, window_bounds = array<i64: 32, 96>}, {pipeline_mode = #tpu.pipeline_mode<synchronous>, transform_indices = @transform_5, window_bounds = array<i64: 32, 32>}, {pipeline_mode = #tpu.pipeline_mode<synchronous>, transform_indices = @transform_6, window_bounds = array<i64: 1, 32>}, {pipeline_mode = #tpu.pipeline_mode<synchronous>, transform_indices = @transform_7, window_bounds = array<i64: 1, 32>}, {pipeline_mode = #tpu.pipeline_mode<synchronous>, transform_indices = @transform_8, window_bounds = array<i64: 1, 32>}, {pipeline_mode = #tpu.pipeline_mode<synchronous>, transform_indices = @transform_9, window_bounds = array<i64: 32, 128>}, {pipeline_mode = #tpu.pipeline_mode<synchronous>, transform_indices = @transform_10, window_bounds = array<i64: 1, 128>}, {pipeline_mode = #tpu.pipeline_mode<synchronous>, transform_indices = @transform_11, window_bounds = array<i64: 128, 32>}, {pipeline_mode = #tpu.pipeline_mode<synchronous>, transform_indices = @transform_12, window_bounds = array<i64: 1, 32>}, {transform_indices = @transform_13, window_bounds = array<i64: 8, 32>}]} {
    %c0 = arith.constant 0 : index
    %c0_0 = arith.constant 0 : index
    %0 = vector.load %arg2[%c0, %c0_0] : memref<8x32xf32, #tpu.memory_space<vmem>>, vector<8x32xf32>
    %c0_1 = arith.constant 0 : index
    %c0_2 = arith.constant 0 : index
    %1 = vector.load %arg3[%c0_1, %c0_2] : memref<1x32xf32, #tpu.memory_space<vmem>>, vector<1x32xf32>
    %2 = vector.shape_cast %1 : vector<1x32xf32> to vector<32xf32>
    %c0_3 = arith.constant 0 : index
    %c0_4 = arith.constant 0 : index
    %3 = vector.load %arg4[%c0_3, %c0_4] : memref<1x32xf32, #tpu.memory_space<vmem>>, vector<1x32xf32>
    %4 = vector.shape_cast %3 : vector<1x32xf32> to vector<32xf32>
    %cst = arith.constant dense<0.000000e+00> : vector<8xf32>
    %5 = vector.multi_reduction <add>, %0, %cst [1] : vector<8x32xf32> to vector<8xf32>
    %6 = vector.shape_cast %5 : vector<8xf32> to vector<8x1xf32>
    %cst_5 = arith.constant 3.200000e+01 : f32
    %7 = vector.broadcast %cst_5 : f32 to vector<8x1xf32>
    %8 = arith.divf %6, %7 : vector<8x1xf32>
    %9 = vector.broadcast %8 : vector<8x1xf32> to vector<8x32xf32>
    %10 = arith.subf %0, %9 : vector<8x32xf32>
    %11 = arith.mulf %10, %10 : vector<8x32xf32>
    %cst_6 = arith.constant dense<0.000000e+00> : vector<8xf32>
    %12 = vector.multi_reduction <add>, %11, %cst_6 [1] : vector<8x32xf32> to vector<8xf32>
    %13 = vector.shape_cast %12 : vector<8xf32> to vector<8x1xf32>
    %cst_7 = arith.constant 3.200000e+01 : f32
    %14 = vector.broadcast %cst_7 : f32 to vector<8x1xf32>
    %15 = arith.divf %13, %14 : vector<8x1xf32>
    %16 = vector.broadcast %8 : vector<8x1xf32> to vector<8x32xf32>
    %17 = arith.subf %0, %16 : vector<8x32xf32>
    %cst_8 = arith.constant 9.99999974E-6 : f32
    %18 = vector.broadcast %cst_8 : f32 to vector<8x1xf32>
    %19 = arith.addf %15, %18 : vector<8x1xf32>
    %20 = math.rsqrt %19 : vector<8x1xf32>
    %21 = vector.broadcast %20 : vector<8x1xf32> to vector<8x32xf32>
    %22 = arith.mulf %17, %21 : vector<8x32xf32>
    %23 = vector.shape_cast %2 : vector<32xf32> to vector<1x32xf32>
    %24 = vector.broadcast %23 : vector<1x32xf32> to vector<8x32xf32>
    %25 = arith.mulf %22, %24 : vector<8x32xf32>
    %26 = vector.shape_cast %4 : vector<32xf32> to vector<1x32xf32>
    %27 = vector.broadcast %26 : vector<1x32xf32> to vector<8x32xf32>
    %28 = arith.addf %25, %27 : vector<8x32xf32>
    %29 = arith.truncf %28 : vector<8x32xf32> to vector<8x32xbf16>
    %c0_9 = arith.constant 0 : index
    %c0_10 = arith.constant 0 : index
    %30 = vector.load %arg5[%c0_9, %c0_10] : memref<32x96xbf16, #tpu.memory_space<vmem>>, vector<32x96xbf16>
    %cst_11 = arith.constant dense<0.000000e+00> : vector<8x96xf32>
    %31 = tpu.matmul %29, %30, %cst_11 {dimension_numbers = #tpu.dot_dimension_numbers<[1], [0], [0], [1], [0, 0, 1, 1], [], []>} : vector<8x32xbf16>, vector<32x96xbf16>, vector<8x96xf32> -> vector<8x96xf32>
    %32 = arith.truncf %31 : vector<8x96xf32> to vector<8x96xbf16>
    %c0_12 = arith.constant 0 : index
    %c0_13 = arith.constant 0 : index
    %33 = vector.load %arg15[%c0_12, %c0_13] : memref<8x96xbf16, #tpu.memory_space<vmem>>, vector<8x96xbf16>
    tpu.vector_store %arg15[%c0_12, %c0_13], %32 {strides = array<i32>} : memref<8x96xbf16, #tpu.memory_space<vmem>>, vector<8x96xbf16>,
    %c0_14 = arith.constant 0 : index
    %c0_15 = arith.constant 0 : index
    %34 = vector.load %arg15[%c0_14, %c0_15] : memref<8x96xbf16, #tpu.memory_space<vmem>>, vector<8x8xbf16>
    %c0_16 = arith.constant 0 : index
    %c32 = arith.constant 32 : index
    %35 = vector.load %arg15[%c0_16, %c32] : memref<8x96xbf16, #tpu.memory_space<vmem>>, vector<8x8xbf16>
    %c0_17 = arith.constant 0 : index
    %c64 = arith.constant 64 : index
    %36 = vector.load %arg15[%c0_17, %c64] : memref<8x96xbf16, #tpu.memory_space<vmem>>, vector<8x8xbf16>
    %cst_18 = arith.constant dense<0.000000e+00> : vector<8x8xf32>
    %37 = tpu.matmul %34, %35, %cst_18 {dimension_numbers = #tpu.dot_dimension_numbers<[1], [1], [0], [0], [0, 0, 1, 0], [], []>} : vector<8x8xbf16>, vector<8x8xbf16>, vector<8x8xf32> -> vector<8x8xf32>
    %cst_19 = arith.constant dense<0xFF800000> : vector<8xf32>
    %38 = vector.multi_reduction <maximumf>, %37, %cst_19 [1] : vector<8x8xf32> to vector<8xf32>
    %39 = vector.shape_cast %38 : vector<8xf32> to vector<8x1xf32>
    %40 = vector.broadcast %39 : vector<8x1xf32> to vector<8x8xf32>
    %41 = arith.subf %37, %40 : vector<8x8xf32>
    %42 = math.exp %41 : vector<8x8xf32>
    %cst_20 = arith.constant dense<0.000000e+00> : vector<8xf32>
    %43 = vector.multi_reduction <add>, %42, %cst_20 [1] : vector<8x8xf32> to vector<8xf32>
    %44 = vector.shape_cast %43 : vector<8xf32> to vector<8x1xf32>
    %45 = tpu.reciprocal %44 {approx = true} : vector<8x1xf32> -> vector<8x1xf32>
    %46 = vector.broadcast %45 : vector<8x1xf32> to vector<8x8xf32>
    %47 = arith.mulf %42, %46 : vector<8x8xf32>
    %48 = arith.truncf %47 : vector<8x8xf32> to vector<8x8xbf16>
    %cst_21 = arith.constant dense<0.000000e+00> : vector<8x8xf32>
    %49 = tpu.matmul %48, %36, %cst_21 {dimension_numbers = #tpu.dot_dimension_numbers<[1], [0], [0], [1], [0, 0, 1, 1], [], []>} : vector<8x8xbf16>, vector<8x8xbf16>, vector<8x8xf32> -> vector<8x8xf32>
    %c0_22 = arith.constant 0 : index
    %c0_23 = arith.constant 0 : index
    %50 = vector.load %arg16[%c0_22, %c0_23] : memref<8x32xf32, #tpu.memory_space<vmem>>, vector<8x8xf32>
    tpu.vector_store %arg16[%c0_22, %c0_23], %49 {strides = array<i32>} : memref<8x32xf32, #tpu.memory_space<vmem>>, vector<8x8xf32>,
    %c0_24 = arith.constant 0 : index
    %c8 = arith.constant 8 : index
    %51 = vector.load %arg15[%c0_24, %c8] : memref<8x96xbf16, #tpu.memory_space<vmem>>, vector<8x8xbf16>
    %c0_25 = arith.constant 0 : index
    %c40 = arith.constant 40 : index
    %52 = vector.load %arg15[%c0_25, %c40] : memref<8x96xbf16, #tpu.memory_space<vmem>>, vector<8x8xbf16>
    %c0_26 = arith.constant 0 : index
    %c72 = arith.constant 72 : index
    %53 = vector.load %arg15[%c0_26, %c72] : memref<8x96xbf16, #tpu.memory_space<vmem>>, vector<8x8xbf16>
    %cst_27 = arith.constant dense<0.000000e+00> : vector<8x8xf32>
    %54 = tpu.matmul %51, %52, %cst_27 {dimension_numbers = #tpu.dot_dimension_numbers<[1], [1], [0], [0], [0, 0, 1, 0], [], []>} : vector<8x8xbf16>, vector<8x8xbf16>, vector<8x8xf32> -> vector<8x8xf32>
    %cst_28 = arith.constant dense<0xFF800000> : vector<8xf32>
    %55 = vector.multi_reduction <maximumf>, %54, %cst_28 [1] : vector<8x8xf32> to vector<8xf32>
    %56 = vector.shape_cast %55 : vector<8xf32> to vector<8x1xf32>
    %57 = vector.broadcast %56 : vector<8x1xf32> to vector<8x8xf32>
    %58 = arith.subf %54, %57 : vector<8x8xf32>
    %59 = math.exp %58 : vector<8x8xf32>
    %cst_29 = arith.constant dense<0.000000e+00> : vector<8xf32>
    %60 = vector.multi_reduction <add>, %59, %cst_29 [1] : vector<8x8xf32> to vector<8xf32>
    %61 = vector.shape_cast %60 : vector<8xf32> to vector<8x1xf32>
    %62 = tpu.reciprocal %61 {approx = true} : vector<8x1xf32> -> vector<8x1xf32>
    %63 = vector.broadcast %62 : vector<8x1xf32> to vector<8x8xf32>
    %64 = arith.mulf %59, %63 : vector<8x8xf32>
    %65 = arith.truncf %64 : vector<8x8xf32> to vector<8x8xbf16>
    %cst_30 = arith.constant dense<0.000000e+00> : vector<8x8xf32>
    %66 = tpu.matmul %65, %53, %cst_30 {dimension_numbers = #tpu.dot_dimension_numbers<[1], [0], [0], [1], [0, 0, 1, 1], [], []>} : vector<8x8xbf16>, vector<8x8xbf16>, vector<8x8xf32> -> vector<8x8xf32>
    %c0_31 = arith.constant 0 : index
    %c8_32 = arith.constant 8 : index
    %67 = vector.load %arg16[%c0_31, %c8_32] : memref<8x32xf32, #tpu.memory_space<vmem>>, vector<8x8xf32>
    tpu.vector_store %arg16[%c0_31, %c8_32], %66 {strides = array<i32>} : memref<8x32xf32, #tpu.memory_space<vmem>>, vector<8x8xf32>,
    %c0_33 = arith.constant 0 : index
    %c16 = arith.constant 16 : index
    %68 = vector.load %arg15[%c0_33, %c16] : memref<8x96xbf16, #tpu.memory_space<vmem>>, vector<8x8xbf16>
    %c0_34 = arith.constant 0 : index
    %c48 = arith.constant 48 : index
    %69 = vector.load %arg15[%c0_34, %c48] : memref<8x96xbf16, #tpu.memory_space<vmem>>, vector<8x8xbf16>
    %c0_35 = arith.constant 0 : index
    %c80 = arith.constant 80 : index
    %70 = vector.load %arg15[%c0_35, %c80] : memref<8x96xbf16, #tpu.memory_space<vmem>>, vector<8x8xbf16>
    %cst_36 = arith.constant dense<0.000000e+00> : vector<8x8xf32>
    %71 = tpu.matmul %68, %69, %cst_36 {dimension_numbers = #tpu.dot_dimension_numbers<[1], [1], [0], [0], [0, 0, 1, 0], [], []>} : vector<8x8xbf16>, vector<8x8xbf16>, vector<8x8xf32> -> vector<8x8xf32>
    %cst_37 = arith.constant dense<0xFF800000> : vector<8xf32>
    %72 = vector.multi_reduction <maximumf>, %71, %cst_37 [1] : vector<8x8xf32> to vector<8xf32>
    %73 = vector.shape_cast %72 : vector<8xf32> to vector<8x1xf32>
    %74 = vector.broadcast %73 : vector<8x1xf32> to vector<8x8xf32>
    %75 = arith.subf %71, %74 : vector<8x8xf32>
    %76 = math.exp %75 : vector<8x8xf32>
    %cst_38 = arith.constant dense<0.000000e+00> : vector<8xf32>
    %77 = vector.multi_reduction <add>, %76, %cst_38 [1] : vector<8x8xf32> to vector<8xf32>
    %78 = vector.shape_cast %77 : vector<8xf32> to vector<8x1xf32>
    %79 = tpu.reciprocal %78 {approx = true} : vector<8x1xf32> -> vector<8x1xf32>
    %80 = vector.broadcast %79 : vector<8x1xf32> to vector<8x8xf32>
    %81 = arith.mulf %76, %80 : vector<8x8xf32>
    %82 = arith.truncf %81 : vector<8x8xf32> to vector<8x8xbf16>
    %cst_39 = arith.constant dense<0.000000e+00> : vector<8x8xf32>
    %83 = tpu.matmul %82, %70, %cst_39 {dimension_numbers = #tpu.dot_dimension_numbers<[1], [0], [0], [1], [0, 0, 1, 1], [], []>} : vector<8x8xbf16>, vector<8x8xbf16>, vector<8x8xf32> -> vector<8x8xf32>
    %c0_40 = arith.constant 0 : index
    %c16_41 = arith.constant 16 : index
    %84 = vector.load %arg16[%c0_40, %c16_41] : memref<8x32xf32, #tpu.memory_space<vmem>>, vector<8x8xf32>
    tpu.vector_store %arg16[%c0_40, %c16_41], %83 {strides = array<i32>} : memref<8x32xf32, #tpu.memory_space<vmem>>, vector<8x8xf32>,
    %c0_42 = arith.constant 0 : index
    %c24 = arith.constant 24 : index
    %85 = vector.load %arg15[%c0_42, %c24] : memref<8x96xbf16, #tpu.memory_space<vmem>>, vector<8x8xbf16>
    %c0_43 = arith.constant 0 : index
    %c56 = arith.constant 56 : index
    %86 = vector.load %arg15[%c0_43, %c56] : memref<8x96xbf16, #tpu.memory_space<vmem>>, vector<8x8xbf16>
    %c0_44 = arith.constant 0 : index
    %c88 = arith.constant 88 : index
    %87 = vector.load %arg15[%c0_44, %c88] : memref<8x96xbf16, #tpu.memory_space<vmem>>, vector<8x8xbf16>
    %cst_45 = arith.constant dense<0.000000e+00> : vector<8x8xf32>
    %88 = tpu.matmul %85, %86, %cst_45 {dimension_numbers = #tpu.dot_dimension_numbers<[1], [1], [0], [0], [0, 0, 1, 0], [], []>} : vector<8x8xbf16>, vector<8x8xbf16>, vector<8x8xf32> -> vector<8x8xf32>
    %cst_46 = arith.constant dense<0xFF800000> : vector<8xf32>
    %89 = vector.multi_reduction <maximumf>, %88, %cst_46 [1] : vector<8x8xf32> to vector<8xf32>
    %90 = vector.shape_cast %89 : vector<8xf32> to vector<8x1xf32>
    %91 = vector.broadcast %90 : vector<8x1xf32> to vector<8x8xf32>
    %92 = arith.subf %88, %91 : vector<8x8xf32>
    %93 = math.exp %92 : vector<8x8xf32>
    %cst_47 = arith.constant dense<0.000000e+00> : vector<8xf32>
    %94 = vector.multi_reduction <add>, %93, %cst_47 [1] : vector<8x8xf32> to vector<8xf32>
    %95 = vector.shape_cast %94 : vector<8xf32> to vector<8x1xf32>
    %96 = tpu.reciprocal %95 {approx = true} : vector<8x1xf32> -> vector<8x1xf32>
    %97 = vector.broadcast %96 : vector<8x1xf32> to vector<8x8xf32>
    %98 = arith.mulf %93, %97 : vector<8x8xf32>
    %99 = arith.truncf %98 : vector<8x8xf32> to vector<8x8xbf16>
    %cst_48 = arith.constant dense<0.000000e+00> : vector<8x8xf32>
    %100 = tpu.matmul %99, %87, %cst_48 {dimension_numbers = #tpu.dot_dimension_numbers<[1], [0], [0], [1], [0, 0, 1, 1], [], []>} : vector<8x8xbf16>, vector<8x8xbf16>, vector<8x8xf32> -> vector<8x8xf32>
    %c0_49 = arith.constant 0 : index
    %c24_50 = arith.constant 24 : index
    %101 = vector.load %arg16[%c0_49, %c24_50] : memref<8x32xf32, #tpu.memory_space<vmem>>, vector<8x8xf32>
    tpu.vector_store %arg16[%c0_49, %c24_50], %100 {strides = array<i32>} : memref<8x32xf32, #tpu.memory_space<vmem>>, vector<8x8xf32>,
    %c0_51 = arith.constant 0 : index
    %c0_52 = arith.constant 0 : index
    %102 = vector.load %arg16[%c0_51, %c0_52] : memref<8x32xf32, #tpu.memory_space<vmem>>, vector<8x32xf32>
    %103 = arith.truncf %102 : vector<8x32xf32> to vector<8x32xbf16>
    %c0_53 = arith.constant 0 : index
    %c0_54 = arith.constant 0 : index
    %104 = vector.load %arg6[%c0_53, %c0_54] : memref<32x32xbf16, #tpu.memory_space<vmem>>, vector<32x32xbf16>
    %cst_55 = arith.constant dense<0.000000e+00> : vector<8x32xf32>
    %105 = tpu.matmul %103, %104, %cst_55 {dimension_numbers = #tpu.dot_dimension_numbers<[1], [0], [0], [1], [0, 0, 1, 1], [], []>} : vector<8x32xbf16>, vector<32x32xbf16>, vector<8x32xf32> -> vector<8x32xf32>
    %106 = arith.addf %0, %105 : vector<8x32xf32>
    %c0_56 = arith.constant 0 : index
    %c0_57 = arith.constant 0 : index
    %107 = vector.load %arg7[%c0_56, %c0_57] : memref<1x32xf32, #tpu.memory_space<vmem>>, vector<1x32xf32>
    %108 = vector.shape_cast %107 : vector<1x32xf32> to vector<32xf32>
    %109 = vector.shape_cast %108 : vector<32xf32> to vector<1x32xf32>
    %110 = vector.broadcast %109 : vector<1x32xf32> to vector<8x32xf32>
    %111 = arith.addf %106, %110 : vector<8x32xf32>
    %c0_58 = arith.constant 0 : index
    %c0_59 = arith.constant 0 : index
    %112 = vector.load %arg8[%c0_58, %c0_59] : memref<1x32xf32, #tpu.memory_space<vmem>>, vector<1x32xf32>
    %113 = vector.shape_cast %112 : vector<1x32xf32> to vector<32xf32>
    %c0_60 = arith.constant 0 : index
    %c0_61 = arith.constant 0 : index
    %114 = vector.load %arg9[%c0_60, %c0_61] : memref<1x32xf32, #tpu.memory_space<vmem>>, vector<1x32xf32>
    %115 = vector.shape_cast %114 : vector<1x32xf32> to vector<32xf32>
    %cst_62 = arith.constant dense<0.000000e+00> : vector<8xf32>
    %116 = vector.multi_reduction <add>, %111, %cst_62 [1] : vector<8x32xf32> to vector<8xf32>
    %117 = vector.shape_cast %116 : vector<8xf32> to vector<8x1xf32>
    %cst_63 = arith.constant 3.200000e+01 : f32
    %118 = vector.broadcast %cst_63 : f32 to vector<8x1xf32>
    %119 = arith.divf %117, %118 : vector<8x1xf32>
    %120 = vector.broadcast %119 : vector<8x1xf32> to vector<8x32xf32>
    %121 = arith.subf %111, %120 : vector<8x32xf32>
    %122 = arith.mulf %121, %121 : vector<8x32xf32>
    %cst_64 = arith.constant dense<0.000000e+00> : vector<8xf32>
    %123 = vector.multi_reduction <add>, %122, %cst_64 [1] : vector<8x32xf32> to vector<8xf32>
    %124 = vector.shape_cast %123 : vector<8xf32> to vector<8x1xf32>
    %cst_65 = arith.constant 3.200000e+01 : f32
    %125 = vector.broadcast %cst_65 : f32 to vector<8x1xf32>
    %126 = arith.divf %124, %125 : vector<8x1xf32>
    %127 = vector.broadcast %119 : vector<8x1xf32> to vector<8x32xf32>
    %128 = arith.subf %111, %127 : vector<8x32xf32>
    %cst_66 = arith.constant 9.99999974E-6 : f32
    %129 = vector.broadcast %cst_66 : f32 to vector<8x1xf32>
    %130 = arith.addf %126, %129 : vector<8x1xf32>
    %131 = math.rsqrt %130 : vector<8x1xf32>
    %132 = vector.broadcast %131 : vector<8x1xf32> to vector<8x32xf32>
    %133 = arith.mulf %128, %132 : vector<8x32xf32>
    %134 = vector.shape_cast %113 : vector<32xf32> to vector<1x32xf32>
    %135 = vector.broadcast %134 : vector<1x32xf32> to vector<8x32xf32>
    %136 = arith.mulf %133, %135 : vector<8x32xf32>
    %137 = vector.shape_cast %115 : vector<32xf32> to vector<1x32xf32>
    %138 = vector.broadcast %137 : vector<1x32xf32> to vector<8x32xf32>
    %139 = arith.addf %136, %138 : vector<8x32xf32>
    %140 = arith.truncf %139 : vector<8x32xf32> to vector<8x32xbf16>
    %c0_67 = arith.constant 0 : index
    %c0_68 = arith.constant 0 : index
    %141 = vector.load %arg13[%c0_67, %c0_68] : memref<1x32xf32, #tpu.memory_space<vmem>>, vector<1x32xf32>
    %142 = vector.shape_cast %141 : vector<1x32xf32> to vector<32xf32>
    %143 = vector.shape_cast %142 : vector<32xf32> to vector<1x32xf32>
    %144 = vector.broadcast %143 : vector<1x32xf32> to vector<8x32xf32>
    %145 = arith.addf %111, %144 : vector<8x32xf32>
    %c0_69 = arith.constant 0 : index
    %c0_70 = arith.constant 0 : index
    %146 = vector.load %arg10[%c0_69, %c0_70] : memref<32x128xbf16, #tpu.memory_space<vmem>>, vector<32x128xbf16>
    %cst_71 = arith.constant dense<0.000000e+00> : vector<8x128xf32>
    %147 = tpu.matmul %140, %146, %cst_71 {dimension_numbers = #tpu.dot_dimension_numbers<[1], [0], [0], [1], [0, 0, 1, 1], [], []>} : vector<8x32xbf16>, vector<32x128xbf16>, vector<8x128xf32> -> vector<8x128xf32>
    %c0_72 = arith.constant 0 : index
    %c0_73 = arith.constant 0 : index
    %148 = vector.load %arg11[%c0_72, %c0_73] : memref<1x128xf32, #tpu.memory_space<vmem>>, vector<1x128xf32>
    %149 = vector.broadcast %148 : vector<1x128xf32> to vector<8x128xf32>
    %150 = arith.addf %147, %149 : vector<8x128xf32>
    %cst_74 = arith.constant 5.000000e-01 : f32
    %151 = vector.broadcast %cst_74 : f32 to vector<8x128xf32>
    %152 = arith.mulf %151, %150 : vector<8x128xf32>
    %cst_75 = arith.constant 0.707106769 : f32
    %153 = vector.broadcast %cst_75 : f32 to vector<8x128xf32>
    %154 = arith.mulf %150, %153 : vector<8x128xf32>
    %155 = math.erf %154 : vector<8x128xf32>
    %cst_76 = arith.constant 1.000000e+00 : f32
    %156 = vector.broadcast %cst_76 : f32 to vector<8x128xf32>
    %157 = arith.addf %156, %155 : vector<8x128xf32>
    %158 = arith.mulf %152, %157 : vector<8x128xf32>
    %159 = arith.truncf %158 : vector<8x128xf32> to vector<8x128xbf16>
    %c0_77 = arith.constant 0 : index
    %c0_78 = arith.constant 0 : index
    %160 = vector.load %arg12[%c0_77, %c0_78] : memref<128x32xbf16, #tpu.memory_space<vmem>>, vector<128x32xbf16>
    %cst_79 = arith.constant dense<0.000000e+00> : vector<8x32xf32>
    %161 = tpu.matmul %159, %160, %cst_79 {dimension_numbers = #tpu.dot_dimension_numbers<[1], [0], [0], [1], [0, 0, 1, 1], [], []>} : vector<8x128xbf16>, vector<128x32xbf16>, vector<8x32xf32> -> vector<8x32xf32>
    %162 = arith.addf %145, %161 : vector<8x32xf32>
    %c0_80 = arith.constant 0 : index
    %c0_81 = arith.constant 0 : index
    %163 = vector.load %arg14[%c0_80, %c0_81] : memref<8x32xf32, #tpu.memory_space<vmem>>, vector<8x32xf32>
    tpu.vector_store %arg14[%c0_80, %c0_81], %162 {strides = array<i32>} : memref<8x32xf32, #tpu.memory_space<vmem>>, vector<8x32xf32>,
    return
  }
  func.func @transform_0(%arg0: i32) -> (i32, i32) {
    %c0_i32 = arith.constant 0 : i32
    %c0_i32_0 = arith.constant 0 : i32
    %c0_i32_1 = arith.constant 0 : i32
    return %c0_i32, %c0_i32_0 : i32, i32
  }
  func.func @transform_1(%arg0: i32) -> (i32, i32) {
    %c0_i32 = arith.constant 0 : i32
    %c0_i32_0 = arith.constant 0 : i32
    return %arg0, %c0_i32 : i32, i32
  }
  func.func @transform_2(%arg0: i32) -> (i32, i32) {
    %c0_i32 = arith.constant 0 : i32
    %c0_i32_0 = arith.constant 0 : i32
    %c0_i32_1 = arith.constant 0 : i32
    return %c0_i32, %c0_i32_0 : i32, i32
  }
  func.func @transform_3(%arg0: i32) -> (i32, i32) {
    %c0_i32 = arith.constant 0 : i32
    %c0_i32_0 = arith.constant 0 : i32
    %c0_i32_1 = arith.constant 0 : i32
    return %c0_i32, %c0_i32_0 : i32, i32
  }
  func.func @transform_4(%arg0: i32) -> (i32, i32) {
    %c0_i32 = arith.constant 0 : i32
    %c0_i32_0 = arith.constant 0 : i32
    %c0_i32_1 = arith.constant 0 : i32
    return %c0_i32, %c0_i32_0 : i32, i32
  }
  func.func @transform_5(%arg0: i32) -> (i32, i32) {
    %c0_i32 = arith.constant 0 : i32
    %c0_i32_0 = arith.constant 0 : i32
    %c0_i32_1 = arith.constant 0 : i32
    return %c0_i32, %c0_i32_0 : i32, i32
  }
  func.func @transform_6(%arg0: i32) -> (i32, i32) {
    %c0_i32 = arith.constant 0 : i32
    %c0_i32_0 = arith.constant 0 : i32
    %c0_i32_1 = arith.constant 0 : i32
    return %c0_i32, %c0_i32_0 : i32, i32
  }
  func.func @transform_7(%arg0: i32) -> (i32, i32) {
    %c0_i32 = arith.constant 0 : i32
    %c0_i32_0 = arith.constant 0 : i32
    %c0_i32_1 = arith.constant 0 : i32
    return %c0_i32, %c0_i32_0 : i32, i32
  }
  func.func @transform_8(%arg0: i32) -> (i32, i32) {
    %c0_i32 = arith.constant 0 : i32
    %c0_i32_0 = arith.constant 0 : i32
    %c0_i32_1 = arith.constant 0 : i32
    return %c0_i32, %c0_i32_0 : i32, i32
  }
  func.func @transform_9(%arg0: i32) -> (i32, i32) {
    %c0_i32 = arith.constant 0 : i32
    %c0_i32_0 = arith.constant 0 : i32
    %c0_i32_1 = arith.constant 0 : i32
    return %c0_i32, %c0_i32_0 : i32, i32
  }
  func.func @transform_10(%arg0: i32) -> (i32, i32) {
    %c0_i32 = arith.constant 0 : i32
    %c0_i32_0 = arith.constant 0 : i32
    %c0_i32_1 = arith.constant 0 : i32
    return %c0_i32, %c0_i32_0 : i32, i32
  }
  func.func @transform_11(%arg0: i32) -> (i32, i32) {
    %c0_i32 = arith.constant 0 : i32
    %c0_i32_0 = arith.constant 0 : i32
    %c0_i32_1 = arith.constant 0 : i32
    return %c0_i32, %c0_i32_0 : i32, i32
  }
  func.func @transform_12(%arg0: i32) -> (i32, i32) {
    %c0_i32 = arith.constant 0 : i32
    %c0_i32_0 = arith.constant 0 : i32
    %c0_i32_1 = arith.constant 0 : i32
    return %c0_i32, %c0_i32_0 : i32, i32
  }
  func.func @transform_13(%arg0: i32) -> (i32, i32) {
    %c0_i32 = arith.constant 0 : i32
    %c0_i32_0 = arith.constant 0 : i32
    return %arg0, %c0_i32 : i32, i32
  }
}

module attributes {stable_mosaic.version = 11 : i64} {
  func.func @block_kernel(%arg0: i32, %arg1: memref<1x8xf32, #tpu.memory_space<vmem>>, %arg2: memref<8x32xf32, #tpu.memory_space<vmem>>, %arg3: memref<1x32xf32, #tpu.memory_space<vmem>>, %arg4: memref<1x32xf32, #tpu.memory_space<vmem>>, %arg5: memref<32x96xbf16, #tpu.memory_space<vmem>>, %arg6: memref<32x32xbf16, #tpu.memory_space<vmem>>, %arg7: memref<1x32xf32, #tpu.memory_space<vmem>>, %arg8: memref<1x32xf32, #tpu.memory_space<vmem>>, %arg9: memref<1x32xf32, #tpu.memory_space<vmem>>, %arg10: memref<32x128xbf16, #tpu.memory_space<vmem>>, %arg11: memref<1x128xf32, #tpu.memory_space<vmem>>, %arg12: memref<128x32xbf16, #tpu.memory_space<vmem>>, %arg13: memref<1x32xf32, #tpu.memory_space<vmem>>, %arg14: memref<8x32xf32, #tpu.memory_space<vmem>>, %arg15: memref<8x96xbf16, #tpu.memory_space<vmem>>, %arg16: memref<8x32xf32, #tpu.memory_space<vmem>>) attributes {dimension_semantics = [#tpu.dimension_semantics<parallel>], iteration_bounds = array<i64: 2>, scalar_prefetch = 0 : i64, scratch_operands = 2 : i64, tpu.core_type = #tpu.core_type<tc>, window_params = [{pipeline_mode = #tpu.pipeline_mode<synchronous>, transform_indices = @transform_0, window_bounds = array<i64: 1, 8>}, {transform_indices = @transform_1, window_bounds = array<i64: 8, 32>}, {pipeline_mode = #tpu.pipeline_mode<synchronous>, transform_indices = @transform_2, window_bounds = array<i64: 1, 32>}, {pipeline_mode = #tpu.pipeline_mode<synchronous>, transform_indices = @transform_3, window_bounds = array<i64: 1, 32>}, {pipeline_mode = #tpu.pipeline_mode<synchronous>, transform_indices = @transform_4, window_bounds = array<i64: 32, 96>}, {pipeline_mode = #tpu.pipeline_mode<synchronous>, transform_indices = @transform_5, window_bounds = array<i64: 32, 32>}, {pipeline_mode = #tpu.pipeline_mode<synchronous>, transform_indices = @transform_6, window_bounds = array<i64: 1, 32>}, {pipeline_mode = #tpu.pipeline_mode<synchronous>, transform_indices = @transform_7, window_bounds = array<i64: 1, 32>}, {pipeline_mode = #tpu.pipeline_mode<synchronous>, transform_indices = @transform_8, window_bounds = array<i64: 1, 32>}, {pipeline_mode = #tpu.pipeline_mode<synchronous>, transform_indices = @transform_9, window_bounds = array<i64: 32, 128>}, {pipeline_mode = #tpu.pipeline_mode<synchronous>, transform_indices = @transform_10, window_bounds = array<i64: 1, 128>}, {pipeline_mode = #tpu.pipeline_mode<synchronous>, transform_indices = @transform_11, window_bounds = array<i64: 128, 32>}, {pipeline_mode = #tpu.pipeline_mode<synchronous>, transform_indices = @transform_12, window_bounds = array<i64: 1, 32>}, {transform_indices = @transform_13, window_bounds = array<i64: 8, 32>}]} {
    %c0 = arith.constant 0 : index
    %c0_0 = arith.constant 0 : index
    %0 = vector.load %arg2[%c0, %c0_0] : memref<8x32xf32, #tpu.memory_space<vmem>>, vector<8x32xf32>
    %c0_1 = arith.constant 0 : index
    %c0_2 = arith.constant 0 : index
    %1 = vector.load %arg3[%c0_1, %c0_2] : memref<1x32xf32, #tpu.memory_space<vmem>>, vector<1x32xf32>
    %2 = vector.shape_cast %1 : vector<1x32xf32> to vector<32xf32>
    %c0_3 = arith.constant 0 : index
    %c0_4 = arith.constant 0 : index
    %3 = vector.load %arg4[%c0_3, %c0_4] : memref<1x32xf32, #tpu.memory_space<vmem>>, vector<1x32xf32>
    %4 = vector.shape_cast %3 : vector<1x32xf32> to vector<32xf32>
    %cst = arith.constant dense<0.000000e+00> : vector<8xf32>
    %5 = vector.multi_reduction <add>, %0, %cst [1] : vector<8x32xf32> to vector<8xf32>
    %6 = vector.shape_cast %5 : vector<8xf32> to vector<8x1xf32>
    %cst_5 = arith.constant 3.200000e+01 : f32
    %7 = vector.broadcast %cst_5 : f32 to vector<8x1xf32>
    %8 = arith.divf %6, %7 : vector<8x1xf32>
    %9 = vector.broadcast %8 : vector<8x1xf32> to vector<8x32xf32>
    %10 = arith.subf %0, %9 : vector<8x32xf32>
    %11 = arith.mulf %10, %10 : vector<8x32xf32>
    %cst_6 = arith.constant dense<0.000000e+00> : vector<8xf32>
    %12 = vector.multi_reduction <add>, %11, %cst_6 [1] : vector<8x32xf32> to vector<8xf32>
    %13 = vector.shape_cast %12 : vector<8xf32> to vector<8x1xf32>
    %cst_7 = arith.constant 3.200000e+01 : f32
    %14 = vector.broadcast %cst_7 : f32 to vector<8x1xf32>
    %15 = arith.divf %13, %14 : vector<8x1xf32>
    %16 = vector.broadcast %8 : vector<8x1xf32> to vector<8x32xf32>
    %17 = arith.subf %0, %16 : vector<8x32xf32>
    %cst_8 = arith.constant 9.99999974E-6 : f32
    %18 = vector.broadcast %cst_8 : f32 to vector<8x1xf32>
    %19 = arith.addf %15, %18 : vector<8x1xf32>
    %20 = math.rsqrt %19 : vector<8x1xf32>
    %21 = vector.broadcast %20 : vector<8x1xf32> to vector<8x32xf32>
    %22 = arith.mulf %17, %21 : vector<8x32xf32>
    %23 = vector.shape_cast %2 : vector<32xf32> to vector<1x32xf32>
    %24 = vector.broadcast %23 : vector<1x32xf32> to vector<8x32xf32>
    %25 = arith.mulf %22, %24 : vector<8x32xf32>
    %26 = vector.shape_cast %4 : vector<32xf32> to vector<1x32xf32>
    %27 = vector.broadcast %26 : vector<1x32xf32> to vector<8x32xf32>
    %28 = arith.addf %25, %27 : vector<8x32xf32>
    %29 = arith.truncf %28 : vector<8x32xf32> to vector<8x32xbf16>
    %c0_9 = arith.constant 0 : index
    %c0_10 = arith.constant 0 : index
    %30 = vector.load %arg5[%c0_9, %c0_10] : memref<32x96xbf16, #tpu.memory_space<vmem>>, vector<32x96xbf16>
    %cst_11 = arith.constant dense<0.000000e+00> : vector<8x96xf32>
    %31 = tpu.matmul %29, %30, %cst_11 {dimension_numbers = #tpu.dot_dimension_numbers<[1], [0], [0], [1], [0, 0, 1, 1], [], []>} : vector<8x32xbf16>, vector<32x96xbf16>, vector<8x96xf32> -> vector<8x96xf32>
    %32 = arith.truncf %31 : vector<8x96xf32> to vector<8x96xbf16>
    %c0_12 = arith.constant 0 : index
    %c0_13 = arith.constant 0 : index
    %33 = vector.load %arg15[%c0_12, %c0_13] : memref<8x96xbf16, #tpu.memory_space<vmem>>, vector<8x96xbf16>
    tpu.vector_store %arg15[%c0_12, %c0_13], %32 {strides = array<i32>} : memref<8x96xbf16, #tpu.memory_space<vmem>>, vector<8x96xbf16>,
    %c0_14 = arith.constant 0 : index
    %c0_15 = arith.constant 0 : index
    %34 = vector.load %arg15[%c0_14, %c0_15] : memref<8x96xbf16, #tpu.memory_space<vmem>>, vector<8x8xbf16>
    %c0_16 = arith.constant 0 : index
    %c32 = arith.constant 32 : index
    %35 = vector.load %arg15[%c0_16, %c32] : memref<8x96xbf16, #tpu.memory_space<vmem>>, vector<8x8xbf16>
    %c0_17 = arith.constant 0 : index
    %c64 = arith.constant 64 : index
    %36 = vector.load %arg15[%c0_17, %c64] : memref<8x96xbf16, #tpu.memory_space<vmem>>, vector<8x8xbf16>
    %cst_18 = arith.constant dense<0.000000e+00> : vector<8x8xf32>
    %37 = tpu.matmul %34, %35, %cst_18 {dimension_numbers = #tpu.dot_dimension_numbers<[1], [1], [0], [0], [0, 0, 1, 0], [], []>} : vector<8x8xbf16>, vector<8x8xbf16>, vector<8x8xf32> -> vector<8x8xf32>
    %cst_19 = arith.constant dense<0xFF800000> : vector<8xf32>
    %38 = vector.multi_reduction <maximumf>, %37, %cst_19 [1] : vector<8x8xf32> to vector<8xf32>
    %39 = vector.shape_cast %38 : vector<8xf32> to vector<8x1xf32>
    %40 = vector.broadcast %39 : vector<8x1xf32> to vector<8x8xf32>
    %41 = arith.subf %37, %40 : vector<8x8xf32>
    %42 = math.exp %41 : vector<8x8xf32>
    %cst_20 = arith.constant dense<0.000000e+00> : vector<8xf32>
    %43 = vector.multi_reduction <add>, %42, %cst_20 [1] : vector<8x8xf32> to vector<8xf32>
    %44 = vector.shape_cast %43 : vector<8xf32> to vector<8x1xf32>
    %45 = tpu.reciprocal %44 {approx = true} : vector<8x1xf32> -> vector<8x1xf32>
    %46 = vector.broadcast %45 : vector<8x1xf32> to vector<8x8xf32>
    %47 = arith.mulf %42, %46 : vector<8x8xf32>
    %48 = arith.truncf %47 : vector<8x8xf32> to vector<8x8xbf16>
    %cst_21 = arith.constant dense<0.000000e+00> : vector<8x8xf32>
    %49 = tpu.matmul %48, %36, %cst_21 {dimension_numbers = #tpu.dot_dimension_numbers<[1], [0], [0], [1], [0, 0, 1, 1], [], []>} : vector<8x8xbf16>, vector<8x8xbf16>, vector<8x8xf32> -> vector<8x8xf32>
    %c0_22 = arith.constant 0 : index
    %c0_23 = arith.constant 0 : index
    %50 = vector.load %arg16[%c0_22, %c0_23] : memref<8x32xf32, #tpu.memory_space<vmem>>, vector<8x8xf32>
    tpu.vector_store %arg16[%c0_22, %c0_23], %49 {strides = array<i32>} : memref<8x32xf32, #tpu.memory_space<vmem>>, vector<8x8xf32>,
    %c0_24 = arith.constant 0 : index
    %c8 = arith.constant 8 : index
    %51 = vector.load %arg15[%c0_24, %c8] : memref<8x96xbf16, #tpu.memory_space<vmem>>, vector<8x8xbf16>
    %c0_25 = arith.constant 0 : index
    %c40 = arith.constant 40 : index
    %52 = vector.load %arg15[%c0_25, %c40] : memref<8x96xbf16, #tpu.memory_space<vmem>>, vector<8x8xbf16>
    %c0_26 = arith.constant 0 : index
    %c72 = arith.constant 72 : index
    %53 = vector.load %arg15[%c0_26, %c72] : memref<8x96xbf16, #tpu.memory_space<vmem>>, vector<8x8xbf16>
    %cst_27 = arith.constant dense<0.000000e+00> : vector<8x8xf32>
    %54 = tpu.matmul %51, %52, %cst_27 {dimension_numbers = #tpu.dot_dimension_numbers<[1], [1], [0], [0], [0, 0, 1, 0], [], []>} : vector<8x8xbf16>, vector<8x8xbf16>, vector<8x8xf32> -> vector<8x8xf32>
    %cst_28 = arith.constant dense<0xFF800000> : vector<8xf32>
    %55 = vector.multi_reduction <maximumf>, %54, %cst_28 [1] : vector<8x8xf32> to vector<8xf32>
    %56 = vector.shape_cast %55 : vector<8xf32> to vector<8x1xf32>
    %57 = vector.broadcast %56 : vector<8x1xf32> to vector<8x8xf32>
    %58 = arith.subf %54, %57 : vector<8x8xf32>
    %59 = math.exp %58 : vector<8x8xf32>
    %cst_29 = arith.constant dense<0.000000e+00> : vector<8xf32>
    %60 = vector.multi_reduction <add>, %59, %cst_29 [1] : vector<8x8xf32> to vector<8xf32>
    %61 = vector.shape_cast %60 : vector<8xf32> to vector<8x1xf32>
    %62 = tpu.reciprocal %61 {approx = true} : vector<8x1xf32> -> vector<8x1xf32>
    %63 = vector.broadcast %62 : vector<8x1xf32> to vector<8x8xf32>
    %64 = arith.mulf %59, %63 : vector<8x8xf32>
    %65 = arith.truncf %64 : vector<8x8xf32> to vector<8x8xbf16>
    %cst_30 = arith.constant dense<0.000000e+00> : vector<8x8xf32>
    %66 = tpu.matmul %65, %53, %cst_30 {dimension_numbers = #tpu.dot_dimension_numbers<[1], [0], [0], [1], [0, 0, 1, 1], [], []>} : vector<8x8xbf16>, vector<8x8xbf16>, vector<8x8xf32> -> vector<8x8xf32>
    %c0_31 = arith.constant 0 : index
    %c8_32 = arith.constant 8 : index
    %67 = vector.load %arg16[%c0_31, %c8_32] : memref<8x32xf32, #tpu.memory_space<vmem>>, vector<8x8xf32>
    tpu.vector_store %arg16[%c0_31, %c8_32], %66 {strides = array<i32>} : memref<8x32xf32, #tpu.memory_space<vmem>>, vector<8x8xf32>,
    %c0_33 = arith.constant 0 : index
    %c16 = arith.constant 16 : index
    %68 = vector.load %arg15[%c0_33, %c16] : memref<8x96xbf16, #tpu.memory_space<vmem>>, vector<8x8xbf16>
    %c0_34 = arith.constant 0 : index
    %c48 = arith.constant 48 : index
    %69 = vector.load %arg15[%c0_34, %c48] : memref<8x96xbf16, #tpu.memory_space<vmem>>, vector<8x8xbf16>
    %c0_35 = arith.constant 0 : index
    %c80 = arith.constant 80 : index
    %70 = vector.load %arg15[%c0_35, %c80] : memref<8x96xbf16, #tpu.memory_space<vmem>>, vector<8x8xbf16>
    %cst_36 = arith.constant dense<0.000000e+00> : vector<8x8xf32>
    %71 = tpu.matmul %68, %69, %cst_36 {dimension_numbers = #tpu.dot_dimension_numbers<[1], [1], [0], [0], [0, 0, 1, 0], [], []>} : vector<8x8xbf16>, vector<8x8xbf16>, vector<8x8xf32> -> vector<8x8xf32>
    %cst_37 = arith.constant dense<0xFF800000> : vector<8xf32>
    %72 = vector.multi_reduction <maximumf>, %71, %cst_37 [1] : vector<8x8xf32> to vector<8xf32>
    %73 = vector.shape_cast %72 : vector<8xf32> to vector<8x1xf32>
    %74 = vector.broadcast %73 : vector<8x1xf32> to vector<8x8xf32>
    %75 = arith.subf %71, %74 : vector<8x8xf32>
    %76 = math.exp %75 : vector<8x8xf32>
    %cst_38 = arith.constant dense<0.000000e+00> : vector<8xf32>
    %77 = vector.multi_reduction <add>, %76, %cst_38 [1] : vector<8x8xf32> to vector<8xf32>
    %78 = vector.shape_cast %77 : vector<8xf32> to vector<8x1xf32>
    %79 = tpu.reciprocal %78 {approx = true} : vector<8x1xf32> -> vector<8x1xf32>
    %80 = vector.broadcast %79 : vector<8x1xf32> to vector<8x8xf32>
    %81 = arith.mulf %76, %80 : vector<8x8xf32>
    %82 = arith.truncf %81 : vector<8x8xf32> to vector<8x8xbf16>
    %cst_39 = arith.constant dense<0.000000e+00> : vector<8x8xf32>
    %83 = tpu.matmul %82, %70, %cst_39 {dimension_numbers = #tpu.dot_dimension_numbers<[1], [0], [0], [1], [0, 0, 1, 1], [], []>} : vector<8x8xbf16>, vector<8x8xbf16>, vector<8x8xf32> -> vector<8x8xf32>
    %c0_40 = arith.constant 0 : index
    %c16_41 = arith.constant 16 : index
    %84 = vector.load %arg16[%c0_40, %c16_41] : memref<8x32xf32, #tpu.memory_space<vmem>>, vector<8x8xf32>
    tpu.vector_store %arg16[%c0_40, %c16_41], %83 {strides = array<i32>} : memref<8x32xf32, #tpu.memory_space<vmem>>, vector<8x8xf32>,
    %c0_42 = arith.constant 0 : index
    %c24 = arith.constant 24 : index
    %85 = vector.load %arg15[%c0_42, %c24] : memref<8x96xbf16, #tpu.memory_space<vmem>>, vector<8x8xbf16>
    %c0_43 = arith.constant 0 : index
    %c56 = arith.constant 56 : index
    %86 = vector.load %arg15[%c0_43, %c56] : memref<8x96xbf16, #tpu.memory_space<vmem>>, vector<8x8xbf16>
    %c0_44 = arith.constant 0 : index
    %c88 = arith.constant 88 : index
    %87 = vector.load %arg15[%c0_44, %c88] : memref<8x96xbf16, #tpu.memory_space<vmem>>, vector<8x8xbf16>
    %cst_45 = arith.constant dense<0.000000e+00> : vector<8x8xf32>
    %88 = tpu.matmul %85, %86, %cst_45 {dimension_numbers = #tpu.dot_dimension_numbers<[1], [1], [0], [0], [0, 0, 1, 0], [], []>} : vector<8x8xbf16>, vector<8x8xbf16>, vector<8x8xf32> -> vector<8x8xf32>
    %cst_46 = arith.constant dense<0xFF800000> : vector<8xf32>
    %89 = vector.multi_reduction <maximumf>, %88, %cst_46 [1] : vector<8x8xf32> to vector<8xf32>
    %90 = vector.shape_cast %89 : vector<8xf32> to vector<8x1xf32>
    %91 = vector.broadcast %90 : vector<8x1xf32> to vector<8x8xf32>
    %92 = arith.subf %88, %91 : vector<8x8xf32>
    %93 = math.exp %92 : vector<8x8xf32>
    %cst_47 = arith.constant dense<0.000000e+00> : vector<8xf32>
    %94 = vector.multi_reduction <add>, %93, %cst_47 [1] : vector<8x8xf32> to vector<8xf32>
    %95 = vector.shape_cast %94 : vector<8xf32> to vector<8x1xf32>
    %96 = tpu.reciprocal %95 {approx = true} : vector<8x1xf32> -> vector<8x1xf32>
    %97 = vector.broadcast %96 : vector<8x1xf32> to vector<8x8xf32>
    %98 = arith.mulf %93, %97 : vector<8x8xf32>
    %99 = arith.truncf %98 : vector<8x8xf32> to vector<8x8xbf16>
    %cst_48 = arith.constant dense<0.000000e+00> : vector<8x8xf32>
    %100 = tpu.matmul %99, %87, %cst_48 {dimension_numbers = #tpu.dot_dimension_numbers<[1], [0], [0], [1], [0, 0, 1, 1], [], []>} : vector<8x8xbf16>, vector<8x8xbf16>, vector<8x8xf32> -> vector<8x8xf32>
    %c0_49 = arith.constant 0 : index
    %c24_50 = arith.constant 24 : index
    %101 = vector.load %arg16[%c0_49, %c24_50] : memref<8x32xf32, #tpu.memory_space<vmem>>, vector<8x8xf32>
    tpu.vector_store %arg16[%c0_49, %c24_50], %100 {strides = array<i32>} : memref<8x32xf32, #tpu.memory_space<vmem>>, vector<8x8xf32>,
    %c0_51 = arith.constant 0 : index
    %c0_52 = arith.constant 0 : index
    %102 = vector.load %arg16[%c0_51, %c0_52] : memref<8x32xf32, #tpu.memory_space<vmem>>, vector<8x32xf32>
    %103 = arith.truncf %102 : vector<8x32xf32> to vector<8x32xbf16>
    %c0_53 = arith.constant 0 : index
    %c0_54 = arith.constant 0 : index
    %104 = vector.load %arg6[%c0_53, %c0_54] : memref<32x32xbf16, #tpu.memory_space<vmem>>, vector<32x32xbf16>
    %cst_55 = arith.constant dense<0.000000e+00> : vector<8x32xf32>
    %105 = tpu.matmul %103, %104, %cst_55 {dimension_numbers = #tpu.dot_dimension_numbers<[1], [0], [0], [1], [0, 0, 1, 1], [], []>} : vector<8x32xbf16>, vector<32x32xbf16>, vector<8x32xf32> -> vector<8x32xf32>
    %106 = arith.addf %0, %105 : vector<8x32xf32>
    %c0_56 = arith.constant 0 : index
    %c0_57 = arith.constant 0 : index
    %107 = vector.load %arg7[%c0_56, %c0_57] : memref<1x32xf32, #tpu.memory_space<vmem>>, vector<1x32xf32>
    %108 = vector.shape_cast %107 : vector<1x32xf32> to vector<32xf32>
    %109 = vector.shape_cast %108 : vector<32xf32> to vector<1x32xf32>
    %110 = vector.broadcast %109 : vector<1x32xf32> to vector<8x32xf32>
    %111 = arith.addf %106, %110 : vector<8x32xf32>
    %c0_58 = arith.constant 0 : index
    %c0_59 = arith.constant 0 : index
    %112 = vector.load %arg8[%c0_58, %c0_59] : memref<1x32xf32, #tpu.memory_space<vmem>>, vector<1x32xf32>
    %113 = vector.shape_cast %112 : vector<1x32xf32> to vector<32xf32>
    %c0_60 = arith.constant 0 : index
    %c0_61 = arith.constant 0 : index
    %114 = vector.load %arg9[%c0_60, %c0_61] : memref<1x32xf32, #tpu.memory_space<vmem>>, vector<1x32xf32>
    %115 = vector.shape_cast %114 : vector<1x32xf32> to vector<32xf32>
    %cst_62 = arith.constant dense<0.000000e+00> : vector<8xf32>
    %116 = vector.multi_reduction <add>, %111, %cst_62 [1] : vector<8x32xf32> to vector<8xf32>
    %117 = vector.shape_cast %116 : vector<8xf32> to vector<8x1xf32>
    %cst_63 = arith.constant 3.200000e+01 : f32
    %118 = vector.broadcast %cst_63 : f32 to vector<8x1xf32>
    %119 = arith.divf %117, %118 : vector<8x1xf32>
    %120 = vector.broadcast %119 : vector<8x1xf32> to vector<8x32xf32>
    %121 = arith.subf %111, %120 : vector<8x32xf32>
    %122 = arith.mulf %121, %121 : vector<8x32xf32>
    %cst_64 = arith.constant dense<0.000000e+00> : vector<8xf32>
    %123 = vector.multi_reduction <add>, %122, %cst_64 [1] : vector<8x32xf32> to vector<8xf32>
    %124 = vector.shape_cast %123 : vector<8xf32> to vector<8x1xf32>
    %cst_65 = arith.constant 3.200000e+01 : f32
    %125 = vector.broadcast %cst_65 : f32 to vector<8x1xf32>
    %126 = arith.divf %124, %125 : vector<8x1xf32>
    %127 = vector.broadcast %119 : vector<8x1xf32> to vector<8x32xf32>
    %128 = arith.subf %111, %127 : vector<8x32xf32>
    %cst_66 = arith.constant 9.99999974E-6 : f32
    %129 = vector.broadcast %cst_66 : f32 to vector<8x1xf32>
    %130 = arith.addf %126, %129 : vector<8x1xf32>
    %131 = math.rsqrt %130 : vector<8x1xf32>
    %132 = vector.broadcast %131 : vector<8x1xf32> to vector<8x32xf32>
    %133 = arith.mulf %128, %132 : vector<8x32xf32>
    %134 = vector.shape_cast %113 : vector<32xf32> to vector<1x32xf32>
    %135 = vector.broadcast %134 : vector<1x32xf32> to vector<8x32xf32>
    %136 = arith.mulf %133, %135 : vector<8x32xf32>
    %137 = vector.shape_cast %115 : vector<32xf32> to vector<1x32xf32>
    %138 = vector.broadcast %137 : vector<1x32xf32> to vector<8x32xf32>
    %139 = arith.addf %136, %138 : vector<8x32xf32>
    %140 = arith.truncf %139 : vector<8x32xf32> to vector<8x32xbf16>
    %c0_67 = arith.constant 0 : index
    %c0_68 = arith.constant 0 : index
    %141 = vector.load %arg13[%c0_67, %c0_68] : memref<1x32xf32, #tpu.memory_space<vmem>>, vector<1x32xf32>
    %142 = vector.shape_cast %141 : vector<1x32xf32> to vector<32xf32>
    %143 = vector.shape_cast %142 : vector<32xf32> to vector<1x32xf32>
    %144 = vector.broadcast %143 : vector<1x32xf32> to vector<8x32xf32>
    %145 = arith.addf %111, %144 : vector<8x32xf32>
    %c0_69 = arith.constant 0 : index
    %c0_70 = arith.constant 0 : index
    %146 = vector.load %arg10[%c0_69, %c0_70] : memref<32x128xbf16, #tpu.memory_space<vmem>>, vector<32x128xbf16>
    %cst_71 = arith.constant dense<0.000000e+00> : vector<8x128xf32>
    %147 = tpu.matmul %140, %146, %cst_71 {dimension_numbers = #tpu.dot_dimension_numbers<[1], [0], [0], [1], [0, 0, 1, 1], [], []>} : vector<8x32xbf16>, vector<32x128xbf16>, vector<8x128xf32> -> vector<8x128xf32>
    %c0_72 = arith.constant 0 : index
    %c0_73 = arith.constant 0 : index
    %148 = vector.load %arg11[%c0_72, %c0_73] : memref<1x128xf32, #tpu.memory_space<vmem>>, vector<1x128xf32>
    %149 = vector.broadcast %148 : vector<1x128xf32> to vector<8x128xf32>
    %150 = arith.addf %147, %149 : vector<8x128xf32>
    %cst_74 = arith.constant 5.000000e-01 : f32
    %151 = vector.broadcast %cst_74 : f32 to vector<8x128xf32>
    %152 = arith.mulf %151, %150 : vector<8x128xf32>
    %cst_75 = arith.constant 0.707106769 : f32
    %153 = vector.broadcast %cst_75 : f32 to vector<8x128xf32>
    %154 = arith.mulf %150, %153 : vector<8x128xf32>
    %155 = math.erf %154 : vector<8x128xf32>
    %cst_76 = arith.constant 1.000000e+00 : f32
    %156 = vector.broadcast %cst_76 : f32 to vector<8x128xf32>
    %157 = arith.addf %156, %155 : vector<8x128xf32>
    %158 = arith.mulf %152, %157 : vector<8x128xf32>
    %159 = arith.truncf %158 : vector<8x128xf32> to vector<8x128xbf16>
    %c0_77 = arith.constant 0 : index
    %c0_78 = arith.constant 0 : index
    %160 = vector.load %arg12[%c0_77, %c0_78] : memref<128x32xbf16, #tpu.memory_space<vmem>>, vector<128x32xbf16>
    %cst_79 = arith.constant dense<0.000000e+00> : vector<8x32xf32>
    %161 = tpu.matmul %159, %160, %cst_79 {dimension_numbers = #tpu.dot_dimension_numbers<[1], [0], [0], [1], [0, 0, 1, 1], [], []>} : vector<8x128xbf16>, vector<128x32xbf16>, vector<8x32xf32> -> vector<8x32xf32>
    %162 = arith.addf %145, %161 : vector<8x32xf32>
    %c0_80 = arith.constant 0 : index
    %c0_81 = arith.constant 0 : index
    %163 = vector.load %arg14[%c0_80, %c0_81] : memref<8x32xf32, #tpu.memory_space<vmem>>, vector<8x32xf32>
    tpu.vector_store %arg14[%c0_80, %c0_81], %162 {strides = array<i32>} : memref<8x32xf32, #tpu.memory_space<vmem>>, vector<8x32xf32>,
    return
  }
  func.func @transform_0(%arg0: i32) -> (i32, i32) {
    %c0_i32 = arith.constant 0 : i32
    %c0_i32_0 = arith.constant 0 : i32
    %c0_i32_1 = arith.constant 0 : i32
    return %c0_i32, %c0_i32_0 : i32, i32
  }
  func.func @transform_1(%arg0: i32) -> (i32, i32) {
    %c0_i32 = arith.constant 0 : i32
    %c0_i32_0 = arith.constant 0 : i32
    return %arg0, %c0_i32 : i32, i32
  }
  func.func @transform_2(%arg0: i32) -> (i32, i32) {
    %c0_i32 = arith.constant 0 : i32
    %c0_i32_0 = arith.constant 0 : i32
    %c0_i32_1 = arith.constant 0 : i32
    return %c0_i32, %c0_i32_0 : i32, i32
  }
  func.func @transform_3(%arg0: i32) -> (i32, i32) {
    %c0_i32 = arith.constant 0 : i32
    %c0_i32_0 = arith.constant 0 : i32
    %c0_i32_1 = arith.constant 0 : i32
    return %c0_i32, %c0_i32_0 : i32, i32
  }
  func.func @transform_4(%arg0: i32) -> (i32, i32) {
    %c0_i32 = arith.constant 0 : i32
    %c0_i32_0 = arith.constant 0 : i32
    %c0_i32_1 = arith.constant 0 : i32
    return %c0_i32, %c0_i32_0 : i32, i32
  }
  func.func @transform_5(%arg0: i32) -> (i32, i32) {
    %c0_i32 = arith.constant 0 : i32
    %c0_i32_0 = arith.constant 0 : i32
    %c0_i32_1 = arith.constant 0 : i32
    return %c0_i32, %c0_i32_0 : i32, i32
  }
  func.func @transform_6(%arg0: i32) -> (i32, i32) {
    %c0_i32 = arith.constant 0 : i32
    %c0_i32_0 = arith.constant 0 : i32
    %c0_i32_1 = arith.constant 0 : i32
    return %c0_i32, %c0_i32_0 : i32, i32
  }
  func.func @transform_7(%arg0: i32) -> (i32, i32) {
    %c0_i32 = arith.constant 0 : i32
    %c0_i32_0 = arith.constant 0 : i32
    %c0_i32_1 = arith.constant 0 : i32
    return %c0_i32, %c0_i32_0 : i32, i32
  }
  func.func @transform_8(%arg0: i32) -> (i32, i32) {
    %c0_i32 = arith.constant 0 : i32
    %c0_i32_0 = arith.constant 0 : i32
    %c0_i32_1 = arith.constant 0 : i32
    return %c0_i32, %c0_i32_0 : i32, i32
  }
  func.func @transform_9(%arg0: i32) -> (i32, i32) {
    %c0_i32 = arith.constant 0 : i32
    %c0_i32_0 = arith.constant 0 : i32
    %c0_i32_1 = arith.constant 0 : i32
    return %c0_i32, %c0_i32_0 : i32, i32
  }
  func.func @transform_10(%arg0: i32) -> (i32, i32) {
    %c0_i32 = arith.constant 0 : i32
    %c0_i32_0 = arith.constant 0 : i32
    %c0_i32_1 = arith.constant 0 : i32
    return %c0_i32, %c0_i32_0 : i32, i32
  }
  func.func @transform_11(%arg0: i32) -> (i32, i32) {
    %c0_i32 = arith.constant 0 : i32
    %c0_i32_0 = arith.constant 0 : i32
    %c0_i32_1 = arith.constant 0 : i32
    return %c0_i32, %c0_i32_0 : i32, i32
  }
  func.func @transform_12(%arg0: i32) -> (i32, i32) {
    %c0_i32 = arith.constant 0 : i32
    %c0_i32_0 = arith.constant 0 : i32
    %c0_i32_1 = arith.constant 0 : i32
    return %c0_i32, %c0_i32_0 : i32, i32
  }
  func.func @transform_13(%arg0: i32) -> (i32, i32) {
    %c0_i32 = arith.constant 0 : i32
    %c0_i32_0 = arith.constant 0 : i32
    return %arg0, %c0_i32 : i32, i32
  }
}

</mosaic_0001>

<llo_original>
// kernel: tpu_custom_call.1
$region0: #{tpu_custom_call.1}
  #allocation0 [shape = 'u32[]', space=smem, size = 0x4, offset = 0x4, fixed_abs, tag = 'smem constant byte address 0x4 - core index']
  #allocation1 [shape = 'u32[144,128]{1,0:T(1,128)}', space=vmem, size = 0x12000, scoped, tag = 'internal scratch']
  #allocation2 [shape = 'bf16[8,96]{1,0:T(8,128)(2,1)}', space=vmem, size = 0x800, scoped, tag = 'scratch operand']
  #allocation3 [shape = 'f32[8,32]{1,0:T(8,128)}', space=vmem, size = 0x1000, scoped, tag = 'scratch operand']
  %s0 = inlined_call_operand.vmem [shape: f32[1,8], index: 0, kind: input, shape index: {}]
  %s1 = inlined_call_operand.vmem [shape: f32[16,32], index: 1, kind: input, shape index: {}]
  %s2 = inlined_call_operand.vmem [shape: f32[1,32], index: 2, kind: input, shape index: {}]
  %s3 = inlined_call_operand.vmem [shape: f32[1,32], index: 3, kind: input, shape index: {}]
  %s4 = inlined_call_operand.vmem [shape: bf16[32,96], index: 4, kind: input, shape index: {}]
  %s5 = inlined_call_operand.vmem [shape: bf16[32,32], index: 5, kind: input, shape index: {}]
  %s6 = inlined_call_operand.vmem [shape: f32[1,32], index: 6, kind: input, shape index: {}]
  %s7 = inlined_call_operand.vmem [shape: f32[1,32], index: 7, kind: input, shape index: {}]
  %s8 = inlined_call_operand.vmem [shape: f32[1,32], index: 8, kind: input, shape index: {}]
  %s9 = inlined_call_operand.vmem [shape: bf16[32,128], index: 9, kind: input, shape index: {}]
  %s10 = inlined_call_operand.vmem [shape: f32[1,128], index: 10, kind: input, shape index: {}]
  %s11 = inlined_call_operand.vmem [shape: bf16[128,32], index: 11, kind: input, shape index: {}]
  %s12 = inlined_call_operand.vmem [shape: f32[1,32], index: 12, kind: input, shape index: {}]
  %s13 = inlined_call_operand.hbm [shape: f32[16,32], index: 13, kind: output, shape index: {}]
  %s14 = sld [smem:[#allocation0]]
  $region85: #{tpu_custom_call.1} parent=0
    _
  %s16 = ssub.s32 1, %s14
  %s17 = scalar_select 0, %s16, %s14
  $region1: #{tpu_custom_call.1} parent=0
    #allocation4 [shape = 'u8[8192]{0}', space=vmem, size = 0x2000, scoped, tag = 'output window, operand 0']
    #allocation5 [shape = 's32[2]{0}', space=sflag, size = 0x8, scoped, tag = 'scoped memory for tpu_custom_call.1']
    %18 = vsyncpa [#allocation5], 0
    %s19 = scalar_lea.sflag [#allocation5], 1
    %20 = vsyncpa %s19, 0
    loop: start=0, step=1, limit=4
    $region2: #{tpu_custom_call.1} parent=1 // loop_pre_header
      _
    $region3: #{tpu_custom_call.1} parent=1 // loop_header
      %s22 = sphi 0, %s26
      %p23 = scmp.ge.s32.totalorder %s22, 4
      %s30 = sphi 0, %s30
      %s32 = sphi 0, %s30
      %s33 = sphi 0, %s32
      %s47 = sphi 0, %s33
      %s53 = sphi 0, %s55
      %s56 = sphi 0, %s53
      %s57 = sphi 0, %s56
      %s73 = sphi 0, %s57
      %s77 = sphi 0, %s77
      %s79 = sphi 0, %s77
      %s80 = sphi 0, %s79
      %s94 = sphi 0, %s80
      %s98 = sphi 0, %s98
      %s100 = sphi 0, %s98
      %s101 = sphi 0, %s100
      %s115 = sphi 0, %s101
      %s119 = sphi 0, %s119
      %s121 = sphi 0, %s119
      %s122 = sphi 0, %s121
      %s136 = sphi 0, %s122
      %s140 = sphi 0, %s140
      %s142 = sphi 0, %s140
      %s143 = sphi 0, %s142
      %s157 = sphi 0, %s143
      %s161 = sphi 0, %s161
      %s163 = sphi 0, %s161
      %s164 = sphi 0, %s163
      %s178 = sphi 0, %s164
      %s182 = sphi 0, %s182
      %s184 = sphi 0, %s182
      %s185 = sphi 0, %s184
      %s199 = sphi 0, %s185
      %s203 = sphi 0, %s203
      %s205 = sphi 0, %s203
      %s206 = sphi 0, %s205
      %s220 = sphi 0, %s206
      %s224 = sphi 0, %s224
      %s226 = sphi 0, %s224
      %s227 = sphi 0, %s226
      %s241 = sphi 0, %s227
      %s245 = sphi 0, %s245
      %s247 = sphi 0, %s245
      %s248 = sphi 0, %s247
      %s262 = sphi 0, %s248
      %s266 = sphi 0, %s266
      %s268 = sphi 0, %s266
      %s269 = sphi 0, %s268
      %s283 = sphi 0, %s269
      %s287 = sphi 0, %s287
      %s289 = sphi 0, %s287
      %s290 = sphi 0, %s289
      %s304 = sphi 0, %s290
      %s310 = sphi 0, %s312
      %s313 = sphi 0, %s310
      %s314 = sphi 0, %s313
      %s330 = sphi 0, %s314
    $region4: #{tpu_custom_call.1} parent=1 // loop_header_branch
      %25 = sbr.rel (%p23) target = $region8
    $region5: #{tpu_custom_call.1} parent=1 // loop_body
      %s27 = ssub.s32 %s22, 1
      %s28 = ssub.s32 %s22, 2
      %s29 = sadd.s32 %s22, 1
      %s31 = sadd.s32 %s30, 1
      %p34 = scmp.eq.s32.totalorder %s22, 1
      %p35 = scmp.ne.s32.totalorder %s30, %s32
      %p36 = scmp.eq.s32.totalorder %s22, 0
      %p37 = por %p35, %p36
      %p38 = scmp.ne.s32.totalorder %s30, %s32
      %p39 = scmp.eq.s32.totalorder %s27, 1
      %p40 = por %p38, %p39
      %p41 = scmp.ne.s32.totalorder %s32, %s33
      %p42 = scmp.eq.s32.totalorder %s27, 0
      %p43 = por %p41, %p42
      %p44 = scmp.ne.s32.totalorder %s32, %s33
      %p45 = scmp.eq.s32.totalorder %s28, 1
      %p46 = por %p44, %p45
      %p48 = scmp.ne.s32.totalorder %s33, %s47
      %p49 = scmp.eq.s32.totalorder %s28, 0
      %p50 = por %p48, %p49
      %s51 = ssub.s32 %s22, %s29
      %p52 = scmp.eq.s32.totalorder %s51, 0
      %s54 = sadd.s32 %s53, 1
      %s55 = scalar_select %p52, %s53, %s54
      %p58 = pneg %p52
      %p59 = scmp.eq.s32.totalorder %s22, 1
      %p60 = por %p58, %p59
      %p61 = scmp.ne.s32.totalorder %s53, %s56
      %p62 = scmp.eq.s32.totalorder %s22, 0
      %p63 = por %p61, %p62
      %p64 = scmp.ne.s32.totalorder %s53, %s56
      %p65 = scmp.eq.s32.totalorder %s27, 1
      %p66 = por %p64, %p65
      %p67 = scmp.ne.s32.totalorder %s56, %s57
      %p68 = scmp.eq.s32.totalorder %s27, 0
      %p69 = por %p67, %p68
      %p70 = scmp.ne.s32.totalorder %s56, %s57
      %p71 = scmp.eq.s32.totalorder %s28, 1
      %p72 = por %p70, %p71
      %p74 = scmp.ne.s32.totalorder %s57, %s73
      %p75 = scmp.eq.s32.totalorder %s28, 0
      %p76 = por %p74, %p75
      %s78 = sadd.s32 %s77, 1
      %p81 = scmp.eq.s32.totalorder %s22, 1
      %p82 = scmp.ne.s32.totalorder %s77, %s79
      %p83 = scmp.eq.s32.totalorder %s22, 0
      %p84 = por %p82, %p83
      %p85 = scmp.ne.s32.totalorder %s77, %s79
      %p86 = scmp.eq.s32.totalorder %s27, 1
      %p87 = por %p85, %p86
      %p88 = scmp.ne.s32.totalorder %s79, %s80
      %p89 = scmp.eq.s32.totalorder %s27, 0
      %p90 = por %p88, %p89
      %p91 = scmp.ne.s32.totalorder %s79, %s80
      %p92 = scmp.eq.s32.totalorder %s28, 1
      %p93 = por %p91, %p92
      %p95 = scmp.ne.s32.totalorder %s80, %s94
      %p96 = scmp.eq.s32.totalorder %s28, 0
      %p97 = por %p95, %p96
      %s99 = sadd.s32 %s98, 1
      %p102 = scmp.eq.s32.totalorder %s22, 1
      %p103 = scmp.ne.s32.totalorder %s98, %s100
      %p104 = scmp.eq.s32.totalorder %s22, 0
      %p105 = por %p103, %p104
      %p106 = scmp.ne.s32.totalorder %s98, %s100
      %p107 = scmp.eq.s32.totalorder %s27, 1
      %p108 = por %p106, %p107
      %p109 = scmp.ne.s32.totalorder %s100, %s101
      %p110 = scmp.eq.s32.totalorder %s27, 0
      %p111 = por %p109, %p110
      %p112 = scmp.ne.s32.totalorder %s100, %s101
      %p113 = scmp.eq.s32.totalorder %s28, 1
      %p114 = por %p112, %p113
      %p116 = scmp.ne.s32.totalorder %s101, %s115
      %p117 = scmp.eq.s32.totalorder %s28, 0
      %p118 = por %p116, %p117
      %s120 = sadd.s32 %s119, 1
      %p123 = scmp.eq.s32.totalorder %s22, 1
      %p124 = scmp.ne.s32.totalorder %s119, %s121
      %p125 = scmp.eq.s32.totalorder %s22, 0
      %p126 = por %p124, %p125
      %p127 = scmp.ne.s32.totalorder %s119, %s121
      %p128 = scmp.eq.s32.totalorder %s27, 1
      %p129 = por %p127, %p128
      %p130 = scmp.ne.s32.totalorder %s121, %s122
      %p131 = scmp.eq.s32.totalorder %s27, 0
      %p132 = por %p130, %p131
      %p133 = scmp.ne.s32.totalorder %s121, %s122
      %p134 = scmp.eq.s32.totalorder %s28, 1
      %p135 = por %p133, %p134
      %p137 = scmp.ne.s32.totalorder %s122, %s136
      %p138 = scmp.eq.s32.totalorder %s28, 0
      %p139 = por %p137, %p138
      %s141 = sadd.s32 %s140, 1
      %p144 = scmp.eq.s32.totalorder %s22, 1
      %p145 = scmp.ne.s32.totalorder %s140, %s142
      %p146 = scmp.eq.s32.totalorder %s22, 0
      %p147 = por %p145, %p146
      %p148 = scmp.ne.s32.totalorder %s140, %s142
      %p149 = scmp.eq.s32.totalorder %s27, 1
      %p150 = por %p148, %p149
      %p151 = scmp.ne.s32.totalorder %s142, %s143
      %p152 = scmp.eq.s32.totalorder %s27, 0
      %p153 = por %p151, %p152
      %p154 = scmp.ne.s32.totalorder %s142, %s143
      %p155 = scmp.eq.s32.totalorder %s28, 1
      %p156 = por %p154, %p155
      %p158 = scmp.ne.s32.totalorder %s143, %s157
      %p159 = scmp.eq.s32.totalorder %s28, 0
      %p160 = por %p158, %p159
      %s162 = sadd.s32 %s161, 1
      %p165 = scmp.eq.s32.totalorder %s22, 1
      %p166 = scmp.ne.s32.totalorder %s161, %s163
      %p167 = scmp.eq.s32.totalorder %s22, 0
      %p168 = por %p166, %p167
      %p169 = scmp.ne.s32.totalorder %s161, %s163
      %p170 = scmp.eq.s32.totalorder %s27, 1
      %p171 = por %p169, %p170
      %p172 = scmp.ne.s32.totalorder %s163, %s164
      %p173 = scmp.eq.s32.totalorder %s27, 0
      %p174 = por %p172, %p173
      %p175 = scmp.ne.s32.totalorder %s163, %s164
      %p176 = scmp.eq.s32.totalorder %s28, 1
      %p177 = por %p175, %p176
      %p179 = scmp.ne.s32.totalorder %s164, %s178
      %p180 = scmp.eq.s32.totalorder %s28, 0
      %p181 = por %p179, %p180
      %s183 = sadd.s32 %s182, 1
      %p186 = scmp.eq.s32.totalorder %s22, 1
      %p187 = scmp.ne.s32.totalorder %s182, %s184
      %p188 = scmp.eq.s32.totalorder %s22, 0
      %p189 = por %p187, %p188
      %p190 = scmp.ne.s32.totalorder %s182, %s184
      %p191 = scmp.eq.s32.totalorder %s27, 1
      %p192 = por %p190, %p191
      %p193 = scmp.ne.s32.totalorder %s184, %s185
      %p194 = scmp.eq.s32.totalorder %s27, 0
      %p195 = por %p193, %p194
      %p196 = scmp.ne.s32.totalorder %s184, %s185
      %p197 = scmp.eq.s32.totalorder %s28, 1
      %p198 = por %p196, %p197
      %p200 = scmp.ne.s32.totalorder %s185, %s199
      %p201 = scmp.eq.s32.totalorder %s28, 0
      %p202 = por %p200, %p201
      %s204 = sadd.s32 %s203, 1
      %p207 = scmp.eq.s32.totalorder %s22, 1
      %p208 = scmp.ne.s32.totalorder %s203, %s205
      %p209 = scmp.eq.s32.totalorder %s22, 0
      %p210 = por %p208, %p209
      %p211 = scmp.ne.s32.totalorder %s203, %s205
      %p212 = scmp.eq.s32.totalorder %s27, 1
      %p213 = por %p211, %p212
      %p214 = scmp.ne.s32.totalorder %s205, %s206
      %p215 = scmp.eq.s32.totalorder %s27, 0
      %p216 = por %p214, %p215
      %p217 = scmp.ne.s32.totalorder %s205, %s206
      %p218 = scmp.eq.s32.totalorder %s28, 1
      %p219 = por %p217, %p218
      %p221 = scmp.ne.s32.totalorder %s206, %s220
      %p222 = scmp.eq.s32.totalorder %s28, 0
      %p223 = por %p221, %p222
      %s225 = sadd.s32 %s224, 1
      %p228 = scmp.eq.s32.totalorder %s22, 1
      %p229 = scmp.ne.s32.totalorder %s224, %s226
      %p230 = scmp.eq.s32.totalorder %s22, 0
      %p231 = por %p229, %p230
      %p232 = scmp.ne.s32.totalorder %s224, %s226
      %p233 = scmp.eq.s32.totalorder %s27, 1
      %p234 = por %p232, %p233
      %p235 = scmp.ne.s32.totalorder %s226, %s227
      %p236 = scmp.eq.s32.totalorder %s27, 0
      %p237 = por %p235, %p236
      %p238 = scmp.ne.s32.totalorder %s226, %s227
      %p239 = scmp.eq.s32.totalorder %s28, 1
      %p240 = por %p238, %p239
      %p242 = scmp.ne.s32.totalorder %s227, %s241
      %p243 = scmp.eq.s32.totalorder %s28, 0
      %p244 = por %p242, %p243
      %s246 = sadd.s32 %s245, 1
      %p249 = scmp.eq.s32.totalorder %s22, 1
      %p250 = scmp.ne.s32.totalorder %s245, %s247
      %p251 = scmp.eq.s32.totalorder %s22, 0
      %p252 = por %p250, %p251
      %p253 = scmp.ne.s32.totalorder %s245, %s247
      %p254 = scmp.eq.s32.totalorder %s27, 1
      %p255 = por %p253, %p254
      %p256 = scmp.ne.s32.totalorder %s247, %s248
      %p257 = scmp.eq.s32.totalorder %s27, 0
      %p258 = por %p256, %p257
      %p259 = scmp.ne.s32.totalorder %s247, %s248
      %p260 = scmp.eq.s32.totalorder %s28, 1
      %p261 = por %p259, %p260
      %p263 = scmp.ne.s32.totalorder %s248, %s262
      %p264 = scmp.eq.s32.totalorder %s28, 0
      %p265 = por %p263, %p264
      %s267 = sadd.s32 %s266, 1
      %p270 = scmp.eq.s32.totalorder %s22, 1
      %p271 = scmp.ne.s32.totalorder %s266, %s268
      %p272 = scmp.eq.s32.totalorder %s22, 0
      %p273 = por %p271, %p272
      %p274 = scmp.ne.s32.totalorder %s266, %s268
      %p275 = scmp.eq.s32.totalorder %s27, 1
      %p276 = por %p274, %p275
      %p277 = scmp.ne.s32.totalorder %s268, %s269
      %p278 = scmp.eq.s32.totalorder %s27, 0
      %p279 = por %p277, %p278
      %p280 = scmp.ne.s32.totalorder %s268, %s269
      %p281 = scmp.eq.s32.totalorder %s28, 1
      %p282 = por %p280, %p281
      %p284 = scmp.ne.s32.totalorder %s269, %s283
      %p285 = scmp.eq.s32.totalorder %s28, 0
      %p286 = por %p284, %p285
      %s288 = sadd.s32 %s287, 1
      %p291 = scmp.eq.s32.totalorder %s22, 1
      %p292 = scmp.ne.s32.totalorder %s287, %s289
      %p293 = scmp.eq.s32.totalorder %s22, 0
      %p294 = por %p292, %p293
      %p295 = scmp.ne.s32.totalorder %s287, %s289
      %p296 = scmp.eq.s32.totalorder %s27, 1
      %p297 = por %p295, %p296
      %p298 = scmp.ne.s32.totalorder %s289, %s290
      %p299 = scmp.eq.s32.totalorder %s27, 0
      %p300 = por %p298, %p299
      %p301 = scmp.ne.s32.totalorder %s289, %s290
      %p302 = scmp.eq.s32.totalorder %s28, 1
      %p303 = por %p301, %p302
      %p305 = scmp.ne.s32.totalorder %s290, %s304
      %p306 = scmp.eq.s32.totalorder %s28, 0
      %p307 = por %p305, %p306
      %s308 = ssub.s32 %s22, %s29
      %p309 = scmp.eq.s32.totalorder %s308, 0
      %s311 = sadd.s32 %s310, 1
      %s312 = scalar_select %p309, %s310, %s311
      %p315 = pneg %p309
      %p316 = scmp.eq.s32.totalorder %s22, 1
      %p317 = por %p315, %p316
      %p318 = scmp.ne.s32.totalorder %s310, %s313
      %p319 = scmp.eq.s32.totalorder %s22, 0
      %p320 = por %p318, %p319
      %p321 = scmp.ne.s32.totalorder %s310, %s313
      %p322 = scmp.eq.s32.totalorder %s27, 1
      %p323 = por %p321, %p322
      %p324 = scmp.ne.s32.totalorder %s313, %s314
      %p325 = scmp.eq.s32.totalorder %s27, 0
      %p326 = por %p324, %p325
      %p327 = scmp.ne.s32.totalorder %s313, %s314
      %p328 = scmp.eq.s32.totalorder %s28, 1
      %p329 = por %p327, %p328
      %p331 = scmp.ne.s32.totalorder %s314, %s330
      %p332 = scmp.eq.s32.totalorder %s28, 0
      %p333 = por %p331, %p332
      %p334 = scmp.le.s32.totalorder 1, %s22
      %p335 = scmp.lt.s32.totalorder %s22, 3
      %p336 = pnand %p334, %p335
      %p337 = pneg %p336
      // Predicated region
      $region9: #{tpu_custom_call.1} parent=5 // pred_check
        _
      $region10: #{tpu_custom_call.1} parent=5 // pred_check_branch
        %339 = sbr.rel (%p336) target = $region12
      $region11: #{tpu_custom_call.1} parent=5 // pred_region
        %s340 = ssub.s32 %s22, 1
        // Predicated region
        $region13: #{tpu_custom_call.1} parent=11 // pred_check
          %p341 = pneg %p43
        $region14: #{tpu_custom_call.1} parent=11 // pred_check_branch
          %343 = sbr.rel (%p341) target = $region16
        $region15: #{tpu_custom_call.1} parent=11 // pred_region
          _
        $region16: #{tpu_custom_call.1} parent=11 // pred_fallthru
          _
        // Predicated region
        $region17: #{tpu_custom_call.1} parent=11 // pred_check
          %p344 = pneg %p90
        $region18: #{tpu_custom_call.1} parent=11 // pred_check_branch
          %346 = sbr.rel (%p344) target = $region20
        $region19: #{tpu_custom_call.1} parent=11 // pred_region
          _
        $region20: #{tpu_custom_call.1} parent=11 // pred_fallthru
          _
        // Predicated region
        $region21: #{tpu_custom_call.1} parent=11 // pred_check
          %p347 = pneg %p111
        $region22: #{tpu_custom_call.1} parent=11 // pred_check_branch
          %349 = sbr.rel (%p347) target = $region24
        $region23: #{tpu_custom_call.1} parent=11 // pred_region
          _
        $region24: #{tpu_custom_call.1} parent=11 // pred_fallthru
          _
        // Predicated region
        $region25: #{tpu_custom_call.1} parent=11 // pred_check
          %p350 = pneg %p132
        $region26: #{tpu_custom_call.1} parent=11 // pred_check_branch
          %352 = sbr.rel (%p350) target = $region28
        $region27: #{tpu_custom_call.1} parent=11 // pred_region
          _
        $region28: #{tpu_custom_call.1} parent=11 // pred_fallthru
          _
        // Predicated region
        $region29: #{tpu_custom_call.1} parent=11 // pred_check
          %p353 = pneg %p153
        $region30: #{tpu_custom_call.1} parent=11 // pred_check_branch
          %355 = sbr.rel (%p353) target = $region32
        $region31: #{tpu_custom_call.1} parent=11 // pred_region
          _
        $region32: #{tpu_custom_call.1} parent=11 // pred_fallthru
          _
        // Predicated region
        $region33: #{tpu_custom_call.1} parent=11 // pred_check
          %p356 = pneg %p174
        $region34: #{tpu_custom_call.1} parent=11 // pred_check_branch
          %358 = sbr.rel (%p356) target = $region36
        $region35: #{tpu_custom_call.1} parent=11 // pred_region
          _
        $region36: #{tpu_custom_call.1} parent=11 // pred_fallthru
          _
        // Predicated region
        $region37: #{tpu_custom_call.1} parent=11 // pred_check
          %p359 = pneg %p195
        $region38: #{tpu_custom_call.1} parent=11 // pred_check_branch
          %361 = sbr.rel (%p359) target = $region40
        $region39: #{tpu_custom_call.1} parent=11 // pred_region
          _
        $region40: #{tpu_custom_call.1} parent=11 // pred_fallthru
          _
        // Predicated region
        $region41: #{tpu_custom_call.1} parent=11 // pred_check
          %p362 = pneg %p216
        $region42: #{tpu_custom_call.1} parent=11 // pred_check_branch
          %364 = sbr.rel (%p362) target = $region44
        $region43: #{tpu_custom_call.1} parent=11 // pred_region
          _
        $region44: #{tpu_custom_call.1} parent=11 // pred_fallthru
          _
        // Predicated region
        $region45: #{tpu_custom_call.1} parent=11 // pred_check
          %p365 = pneg %p237
        $region46: #{tpu_custom_call.1} parent=11 // pred_check_branch
          %367 = sbr.rel (%p365) target = $region48
        $region47: #{tpu_custom_call.1} parent=11 // pred_region
          _
        $region48: #{tpu_custom_call.1} parent=11 // pred_fallthru
          _
        // Predicated region
        $region49: #{tpu_custom_call.1} parent=11 // pred_check
          %p368 = pneg %p258
        $region50: #{tpu_custom_call.1} parent=11 // pred_check_branch
          %370 = sbr.rel (%p368) target = $region52
        $region51: #{tpu_custom_call.1} parent=11 // pred_region
          _
        $region52: #{tpu_custom_call.1} parent=11 // pred_fallthru
          _
        // Predicated region
        $region53: #{tpu_custom_call.1} parent=11 // pred_check
          %p371 = pneg %p279
        $region54: #{tpu_custom_call.1} parent=11 // pred_check_branch
          %373 = sbr.rel (%p371) target = $region56
        $region55: #{tpu_custom_call.1} parent=11 // pred_region
          _
        $region56: #{tpu_custom_call.1} parent=11 // pred_fallthru
          _
        // Predicated region
        $region57: #{tpu_custom_call.1} parent=11 // pred_check
          %p374 = pneg %p300
        $region58: #{tpu_custom_call.1} parent=11 // pred_check_branch
          %376 = sbr.rel (%p374) target = $region60
        $region59: #{tpu_custom_call.1} parent=11 // pred_region
          _
        $region60: #{tpu_custom_call.1} parent=11 // pred_fallthru
          _
      $region12: #{tpu_custom_call.1} parent=5 // pred_fallthru
        _
      %p377 = scmp.lt.s32.totalorder %s22, 2
      // Predicated region
      $region61: #{tpu_custom_call.1} parent=5 // pred_check
        %p378 = pneg %p377
      $region62: #{tpu_custom_call.1} parent=5 // pred_check_branch
        %380 = sbr.rel (%p378) target = $region64
      $region63: #{tpu_custom_call.1} parent=5 // pred_region
        // Predicated region
        $region65: #{tpu_custom_call.1} parent=63 // pred_check
          %p381 = pneg %p63
        $region66: #{tpu_custom_call.1} parent=63 // pred_check_branch
          %383 = sbr.rel (%p381) target = $region68
        $region67: #{tpu_custom_call.1} parent=63 // pred_region
          %p384 = scmp.lt.s32.totalorder %s22, 1
          %s385 = scalar_select %p384, %s22, 1
          %s386 = smul.addr %s385, 8
          %s387 = scalar_lea.vmem %s1, %s386
        $region68: #{tpu_custom_call.1} parent=63 // pred_fallthru
          _
      $region64: #{tpu_custom_call.1} parent=5 // pred_fallthru
        _
      %p388 = scmp.le.s32.totalorder 1, %s22
      %p389 = scmp.lt.s32.totalorder %s22, 3
      %p390 = pnand %p388, %p389
      %p391 = pneg %p390
      // Predicated region
      $region69: #{tpu_custom_call.1} parent=5 // pred_check
        _
      $region70: #{tpu_custom_call.1} parent=5 // pred_check_branch
        %393 = sbr.rel (%p390) target = $region72
      $region71: #{tpu_custom_call.1} parent=5 // pred_region
        %s394 = ssub.s32 %s22, 1
        %p395 = pneg %p43
        %p396 = pneg %p40
        %p397 = scmp.lt.s32.totalorder %s27, 1
        %s398 = scalar_select %p397, %s27, 1
        %s399 = smul.addr %s398, 8
        %s400 = scalar_lea.vmem %s1, %s399
        %p401 = pneg %p69
        %p402 = pneg %p66
        %p403 = pneg %p90
        %p404 = pneg %p87
        %p405 = pneg %p111
        %p406 = pneg %p108
        %p407 = pneg %p132
        %p408 = pneg %p129
        %p409 = pneg %p153
        %p410 = pneg %p150
        %p411 = pneg %p174
        %p412 = pneg %p171
        %p413 = pneg %p195
        %p414 = pneg %p192
        %p415 = pneg %p216
        %p416 = pneg %p213
        %p417 = pneg %p237
        %p418 = pneg %p234
        %p419 = pneg %p258
        %p420 = pneg %p255
        %p421 = pneg %p279
        %p422 = pneg %p276
        %p423 = pneg %p300
        %p424 = pneg %p297
        %p425 = pneg %p326
        %p426 = pneg %p323
        %s427 = sand.u32 %s313, 1
        %s428 = scalar_lea.sflag [#allocation5], %s427
        %s429 = sand.u32 %s313, 1
        %s430 = smul.addr %s429, 8
        %s431 = scalar_lea.vmem [#allocation4], %s430
        %p432 = scmp.lt.s32.totalorder %s27, 1
        %s433 = scalar_select %p432, %s27, 1
        %s434 = smul.addr %s433, 8
        %s435 = scalar_lea.vmem %s1, %s434
        %v437 = vld [vmem:[%s435] sm:$0xff]
        %v438 = vld [vmem:[%s2] sm:$0x1]
        %v439 = vld [vmem:[%s3] sm:$0x1]
        %vm440 = vcmask 261120
        %v441 = vsel %vm440, %v437, 0.0
        %442 = vadd.xlane.f32.xlu0 %v441
        %v443 = vpop.xlane.xlu0 %442
        %v444 = vrcp.pop 32.0
        %v445 = vmul.f32 %v443, %v444
        %v446 = vsub.f32 %v437, %v445
        %v447 = vmul.f32 %v446, %v446
        %v448 = vsel %vm440, %v447, 0.0
        %449 = vadd.xlane.f32.xlu0 %v448
        %v450 = vpop.xlane.xlu0 %449
        %v451 = vmul.f32 %v450, %v444
        %v452 = vadd.f32 %v451, 1e-05
        %v453 = vrsqrt.pop %v452
        %v454 = vmul.f32 %v446, %v453
        %v456 = vlaneseq
        %v457 = vshrl.u32 %v456, 7
        %v458 = vsub.s32 0, %v457
        %v459 = vrot.slane %v438, %v458
        %v461 = vmul.f32 %v454, %v459
        %v463 = vlaneseq
        %v464 = vshrl.u32 %v463, 7
        %v465 = vsub.s32 0, %v464
        %v466 = vrot.slane %v439, %v465
        %v468 = vadd.f32 %v461, %v466
        %v469 = vpack.c.bf16 %v468, %v468
        %v470 = vld [vmem:[%s4] sm:$0xf]
        %v471 = vld [vmem:[%s4 + $0x4] sm:$0xf]
        %v472 = vld [vmem:[%s4 + $0x8] sm:$0xf]
        %v473 = vld [vmem:[%s4 + $0xc] sm:$0xf]
        %v478 = vunpack.c.l.b16 %v470
        %v479 = vunpack.c.l.b16 %v471
        %v480 = vunpack.c.l.b16 %v472
        %v481 = vunpack.c.l.b16 %v473
        %v482 = vpack.c.b16 %v479, %v478
        %v483 = vpack.c.b16 %v481, %v480
        %v487 = vsel %vm440, %v469, 0
        %489 = vmatprep.subr.bf16.mxu0 0
        %490 = vmatpush1.bf16.msra.mxu0 0
        %491 = vmatprep.subr.bf16.mxu0 0
        %492 = vmatpush1.bf16.msra.mxu0 0
        %493 = vmatprep.subr.bf16.mxu0 0
        %494 = vmatpush1.bf16.msra.mxu0 0
        %495 = vmatprep.subr.bf16.mxu0 0
        %496 = vmatpush1.bf16.msra.mxu0 0
        %497 = vmatprep.subr.bf16.mxu0 0
        %498 = vmatpush1.bf16.msra.mxu0 0
        %499 = vmatprep.subr.bf16.mxu0 0
        %500 = vmatpush1.bf16.msra.mxu0 0
        %501 = vmatprep.subr.bf16.mxu0 0
        %502 = vmatpush1.bf16.msra.mxu0 %v483
        %503 = vmatprep.subr.bf16.mxu0 0
        %504 = vmatpush1.bf16.msra.mxu0 %v482
        %505 = vmatprep.subr.bf16.mxu0 0
        %506 = vmatpush2.bf16.msra.mxu0 0
        %507 = vmatprep.subr.bf16.mxu0 0
        %508 = vmatpush2.bf16.msra.mxu0 0
        %509 = vmatprep.subr.bf16.mxu0 0
        %510 = vmatpush2.bf16.msra.mxu0 0
        %511 = vmatprep.subr.bf16.mxu0 0
        %512 = vmatpush2.bf16.msra.mxu0 0
        %513 = vmatprep.subr.bf16.mxu0 0
        %514 = vmatpush2.bf16.msra.mxu0 0
        %515 = vmatprep.subr.bf16.mxu0 0
        %516 = vmatpush2.bf16.msra.mxu0 0
        %517 = vmatprep.subr.bf16.mxu0 0
        %518 = vmatpush2.bf16.msra.mxu0 0
        %519 = vmatprep.subr.bf16.mxu0 0
        %520 = vmatpush2.bf16.msra.mxu0 0
        %521 = vmatprep.mubr.bf16.mxu0 0
        %522 = vmatmul.mubr.bf16.gmra.mxu0 %v487
        %v523 = vpop.f32.mrf.mxu0
        %v524 = vadd.f32 0.0, %v523
        %v525 = vpop.f32.mrf.mxu0
        %v526 = vpop.f32.mrf.mxu0
        %v527 = vpop.f32.mrf.mxu0
        %528 = vdwg.mxu0
        %v529 = vpack.c.bf16 %v524, %v524
        %vm530 = vcmask 781312
        %531 = vst.msk [vmem:[#allocation2] sm:$0xf] %vm530, %v529
        %v532 = vld [vmem:[#allocation2] sm:$0xf]
        %v534 = vunpack.c.l.b16 %v532
        %v535 = vpack.c.b16 %v534, %v534
        %536 = vrot.lane.b32.xlu0 %v535, 96
        %v537 = vpop.permute.xlu0 %536
        %vm538 = vcmask 64512
        %v540 = vsel %vm538, %v532, 0
        %v543 = vsel %vm538, %v537, 0
        %545 = vmatprep.subr.bf16.mxu0 0
        %546 = vmatpush1.bf16.xpose.msra.mxu0 0
        %547 = vmatprep.subr.bf16.mxu0 0
        %548 = vmatpush1.bf16.xpose.msra.mxu0 0
        %549 = vmatprep.subr.bf16.mxu0 0
        %550 = vmatpush1.bf16.xpose.msra.mxu0 0
        %551 = vmatprep.subr.bf16.mxu0 0
        %552 = vmatpush1.bf16.xpose.msra.mxu0 0
        %553 = vmatprep.subr.bf16.mxu0 0
        %554 = vmatpush1.bf16.xpose.msra.mxu0 0
        %555 = vmatprep.subr.bf16.mxu0 0
        %556 = vmatpush1.bf16.xpose.msra.mxu0 0
        %557 = vmatprep.subr.bf16.mxu0 0
        %558 = vmatpush1.bf16.xpose.msra.mxu0 0
        %559 = vmatprep.subr.bf16.mxu0 0
        %560 = vmatpush1.bf16.xpose.msra.mxu0 %v543
        %561 = vmatprep.subr.bf16.mxu0 0
        %562 = vmatpush2.bf16.xpose.msra.mxu0 0
        %563 = vmatprep.subr.bf16.mxu0 0
        %564 = vmatpush2.bf16.xpose.msra.mxu0 0
        %565 = vmatprep.subr.bf16.mxu0 0
        %566 = vmatpush2.bf16.xpose.msra.mxu0 0
        %567 = vmatprep.subr.bf16.mxu0 0
        %568 = vmatpush2.bf16.xpose.msra.mxu0 0
        %569 = vmatprep.subr.bf16.mxu0 0
        %570 = vmatpush2.bf16.xpose.msra.mxu0 0
        %571 = vmatprep.subr.bf16.mxu0 0
        %572 = vmatpush2.bf16.xpose.msra.mxu0 0
        %573 = vmatprep.subr.bf16.mxu0 0
        %574 = vmatpush2.bf16.xpose.msra.mxu0 0
        %575 = vmatprep.subr.bf16.mxu0 0
        %576 = vmatpush2.bf16.xpose.msra.mxu0 0
        %577 = vmatprep.mubr.bf16.mxu0 0
        %578 = vmatmul.mubr.bf16.gmra.mxu0 %v540
        %v579 = vpop.f32.mrf.mxu0
        %v580 = vadd.f32 0.0, %v579
        %v581 = vpop.f32.mrf.mxu0
        %v582 = vpop.f32.mrf.mxu0
        %v583 = vpop.f32.mrf.mxu0
        %584 = vdwg.mxu0
        %v585 = vsel %vm538, %v580, -inf
        %586 = vmax.xlane.f32.xlu0 %v585
        %v587 = vpop.xlane.xlu0 %586
        %v588 = vsub.f32 %v580, %v587
        %v589 = vmul.f32 %v588, 1.442695
        %v590 = vpow.pop %v589
        %v591 = vsel %vm538, %v590, 0.0
        %592 = vadd.xlane.f32.xlu0 %v591
        %v593 = vpop.xlane.xlu0 %592
        %v594 = vrcp.pop %v593
        %v595 = vmul.f32 %v590, %v594
        %v596 = vpack.c.bf16 %v595, %v595
        %597 = vrot.lane.b32.xlu0 %v535, 64
        %v598 = vpop.permute.xlu0 %597
        %v600 = vsel %vm538, %v596, 0
        %vm602 = vcmask 1043456
        %v604 = vsel %vm602, %v598, 0
        %606 = vmatprep.subr.bf16.mxu0 0
        %607 = vmatpush1.bf16.msra.mxu0 0
        %608 = vmatprep.subr.bf16.mxu0 0
        %609 = vmatpush1.bf16.msra.mxu0 0
        %610 = vmatprep.subr.bf16.mxu0 0
        %611 = vmatpush1.bf16.msra.mxu0 0
        %612 = vmatprep.subr.bf16.mxu0 0
        %613 = vmatpush1.bf16.msra.mxu0 0
        %614 = vmatprep.subr.bf16.mxu0 0
        %615 = vmatpush1.bf16.msra.mxu0 0
        %616 = vmatprep.subr.bf16.mxu0 0
        %617 = vmatpush1.bf16.msra.mxu0 0
        %618 = vmatprep.subr.bf16.mxu0 0
        %619 = vmatpush1.bf16.msra.mxu0 0
        %620 = vmatprep.subr.bf16.mxu0 0
        %621 = vmatpush1.bf16.msra.mxu0 %v604
        %622 = vmatprep.subr.bf16.mxu0 0
        %623 = vmatpush2.bf16.msra.mxu0 0
        %624 = vmatprep.subr.bf16.mxu0 0
        %625 = vmatpush2.bf16.msra.mxu0 0
        %626 = vmatprep.subr.bf16.mxu0 0
        %627 = vmatpush2.bf16.msra.mxu0 0
        %628 = vmatprep.subr.bf16.mxu0 0
        %629 = vmatpush2.bf16.msra.mxu0 0
        %630 = vmatprep.subr.bf16.mxu0 0
        %631 = vmatpush2.bf16.msra.mxu0 0
        %632 = vmatprep.subr.bf16.mxu0 0
        %633 = vmatpush2.bf16.msra.mxu0 0
        %634 = vmatprep.subr.bf16.mxu0 0
        %635 = vmatpush2.bf16.msra.mxu0 0
        %636 = vmatprep.subr.bf16.mxu0 0
        %637 = vmatpush2.bf16.msra.mxu0 0
        %638 = vmatprep.mubr.bf16.mxu0 0
        %639 = vmatmul.mubr.bf16.gmra.mxu0 %v600
        %v640 = vpop.f32.mrf.mxu0
        %v641 = vadd.f32 0.0, %v640
        %v642 = vpop.f32.mrf.mxu0
        %v643 = vpop.f32.mrf.mxu0
        %v644 = vpop.f32.mrf.mxu0
        %645 = vdwg.mxu0
        %646 = vst.msk [vmem:[#allocation3] sm:$0xff] %vm538, %v641
        %v647 = vld [vmem:[#allocation2] sm:$0xf]
        %v649 = vunpack.c.l.b16 %v647
        %v650 = vpack.c.b16 %v649, %v649
        %651 = vrot.lane.b32.xlu0 %v650, 120
        %v652 = vpop.permute.xlu0 %651
        %653 = vrot.lane.b32.xlu0 %v650, 88
        %v654 = vpop.permute.xlu0 %653
        %v656 = vsel %vm538, %v652, 0
        %v659 = vsel %vm538, %v654, 0
        %661 = vmatprep.subr.bf16.mxu0 0
        %662 = vmatpush1.bf16.xpose.msra.mxu0 0
        %663 = vmatprep.subr.bf16.mxu0 0
        %664 = vmatpush1.bf16.xpose.msra.mxu0 0
        %665 = vmatprep.subr.bf16.mxu0 0
        %666 = vmatpush1.bf16.xpose.msra.mxu0 0
        %667 = vmatprep.subr.bf16.mxu0 0
        %668 = vmatpush1.bf16.xpose.msra.mxu0 0
        %669 = vmatprep.subr.bf16.mxu0 0
        %670 = vmatpush1.bf16.xpose.msra.mxu0 0
        %671 = vmatprep.subr.bf16.mxu0 0
        %672 = vmatpush1.bf16.xpose.msra.mxu0 0
        %673 = vmatprep.subr.bf16.mxu0 0
        %674 = vmatpush1.bf16.xpose.msra.mxu0 0
        %675 = vmatprep.subr.bf16.mxu0 0
        %676 = vmatpush1.bf16.xpose.msra.mxu0 %v659
        %677 = vmatprep.subr.bf16.mxu0 0
        %678 = vmatpush2.bf16.xpose.msra.mxu0 0
        %679 = vmatprep.subr.bf16.mxu0 0
        %680 = vmatpush2.bf16.xpose.msra.mxu0 0
        %681 = vmatprep.subr.bf16.mxu0 0
        %682 = vmatpush2.bf16.xpose.msra.mxu0 0
        %683 = vmatprep.subr.bf16.mxu0 0
        %684 = vmatpush2.bf16.xpose.msra.mxu0 0
        %685 = vmatprep.subr.bf16.mxu0 0
        %686 = vmatpush2.bf16.xpose.msra.mxu0 0
        %687 = vmatprep.subr.bf16.mxu0 0
        %688 = vmatpush2.bf16.xpose.msra.mxu0 0
        %689 = vmatprep.subr.bf16.mxu0 0
        %690 = vmatpush2.bf16.xpose.msra.mxu0 0
        %691 = vmatprep.subr.bf16.mxu0 0
        %692 = vmatpush2.bf16.xpose.msra.mxu0 0
        %693 = vmatprep.mubr.bf16.mxu0 0
        %694 = vmatmul.mubr.bf16.gmra.mxu0 %v656
        %v695 = vpop.f32.mrf.mxu0
        %v696 = vadd.f32 0.0, %v695
        %v697 = vpop.f32.mrf.mxu0
        %v698 = vpop.f32.mrf.mxu0
        %v699 = vpop.f32.mrf.mxu0
        %700 = vdwg.mxu0
        %v701 = vsel %vm538, %v696, -inf
        %702 = vmax.xlane.f32.xlu0 %v701
        %v703 = vpop.xlane.xlu0 %702
        %v704 = vsub.f32 %v696, %v703
        %v705 = vmul.f32 %v704, 1.442695
        %v706 = vpow.pop %v705
        %v707 = vsel %vm538, %v706, 0.0
        %708 = vadd.xlane.f32.xlu0 %v707
        %v709 = vpop.xlane.xlu0 %708
        %v710 = vrcp.pop %v709
        %v711 = vmul.f32 %v706, %v710
        %v712 = vpack.c.bf16 %v711, %v711
        %713 = vrot.lane.b32.xlu0 %v650, 56
        %v714 = vpop.permute.xlu0 %713
        %v716 = vsel %vm538, %v712, 0
        %v719 = vsel %vm602, %v714, 0
        %721 = vmatprep.subr.bf16.mxu0 0
        %722 = vmatpush1.bf16.msra.mxu0 0
        %723 = vmatprep.subr.bf16.mxu0 0
        %724 = vmatpush1.bf16.msra.mxu0 0
        %725 = vmatprep.subr.bf16.mxu0 0
        %726 = vmatpush1.bf16.msra.mxu0 0
        %727 = vmatprep.subr.bf16.mxu0 0
        %728 = vmatpush1.bf16.msra.mxu0 0
        %729 = vmatprep.subr.bf16.mxu0 0
        %730 = vmatpush1.bf16.msra.mxu0 0
        %731 = vmatprep.subr.bf16.mxu0 0
        %732 = vmatpush1.bf16.msra.mxu0 0
        %733 = vmatprep.subr.bf16.mxu0 0
        %734 = vmatpush1.bf16.msra.mxu0 0
        %735 = vmatprep.subr.bf16.mxu0 0
        %736 = vmatpush1.bf16.msra.mxu0 %v719
        %737 = vmatprep.subr.bf16.mxu0 0
        %738 = vmatpush2.bf16.msra.mxu0 0
        %739 = vmatprep.subr.bf16.mxu0 0
        %740 = vmatpush2.bf16.msra.mxu0 0
        %741 = vmatprep.subr.bf16.mxu0 0
        %742 = vmatpush2.bf16.msra.mxu0 0
        %743 = vmatprep.subr.bf16.mxu0 0
        %744 = vmatpush2.bf16.msra.mxu0 0
        %745 = vmatprep.subr.bf16.mxu0 0
        %746 = vmatpush2.bf16.msra.mxu0 0
        %747 = vmatprep.subr.bf16.mxu0 0
        %748 = vmatpush2.bf16.msra.mxu0 0
        %749 = vmatprep.subr.bf16.mxu0 0
        %750 = vmatpush2.bf16.msra.mxu0 0
        %751 = vmatprep.subr.bf16.mxu0 0
        %752 = vmatpush2.bf16.msra.mxu0 0
        %753 = vmatprep.mubr.bf16.mxu0 0
        %754 = vmatmul.mubr.bf16.gmra.mxu0 %v716
        %v755 = vpop.f32.mrf.mxu0
        %v756 = vadd.f32 0.0, %v755
        %v757 = vpop.f32.mrf.mxu0
        %v758 = vpop.f32.mrf.mxu0
        %v759 = vpop.f32.mrf.mxu0
        %760 = vdwg.mxu0
        %762 = vrot.lane.b32.xlu0 %v756, 8
        %v763 = vpop.permute.xlu0 %762
        %vm765 = vcmask 130112
        %766 = vst.msk [vmem:[#allocation3] sm:$0xff] %vm765, %v763
        %v767 = vld [vmem:[#allocation2] sm:$0xf]
        %v769 = vunpack.c.l.b16 %v767
        %v770 = vpack.c.b16 %v769, %v769
        %771 = vrot.lane.b32.xlu0 %v770, 112
        %v772 = vpop.permute.xlu0 %771
        %773 = vrot.lane.b32.xlu0 %v770, 80
        %v774 = vpop.permute.xlu0 %773
        %v776 = vsel %vm538, %v772, 0
        %v779 = vsel %vm538, %v774, 0
        %781 = vmatprep.subr.bf16.mxu0 0
        %782 = vmatpush1.bf16.xpose.msra.mxu0 0
        %783 = vmatprep.subr.bf16.mxu0 0
        %784 = vmatpush1.bf16.xpose.msra.mxu0 0
        %785 = vmatprep.subr.bf16.mxu0 0
        %786 = vmatpush1.bf16.xpose.msra.mxu0 0
        %787 = vmatprep.subr.bf16.mxu0 0
        %788 = vmatpush1.bf16.xpose.msra.mxu0 0
        %789 = vmatprep.subr.bf16.mxu0 0
        %790 = vmatpush1.bf16.xpose.msra.mxu0 0
        %791 = vmatprep.subr.bf16.mxu0 0
        %792 = vmatpush1.bf16.xpose.msra.mxu0 0
        %793 = vmatprep.subr.bf16.mxu0 0
        %794 = vmatpush1.bf16.xpose.msra.mxu0 0
        %795 = vmatprep.subr.bf16.mxu0 0
        %796 = vmatpush1.bf16.xpose.msra.mxu0 %v779
        %797 = vmatprep.subr.bf16.mxu0 0
        %798 = vmatpush2.bf16.xpose.msra.mxu0 0
        %799 = vmatprep.subr.bf16.mxu0 0
        %800 = vmatpush2.bf16.xpose.msra.mxu0 0
        %801 = vmatprep.subr.bf16.mxu0 0
        %802 = vmatpush2.bf16.xpose.msra.mxu0 0
        %803 = vmatprep.subr.bf16.mxu0 0
        %804 = vmatpush2.bf16.xpose.msra.mxu0 0
        %805 = vmatprep.subr.bf16.mxu0 0
        %806 = vmatpush2.bf16.xpose.msra.mxu0 0
        %807 = vmatprep.subr.bf16.mxu0 0
        %808 = vmatpush2.bf16.xpose.msra.mxu0 0
        %809 = vmatprep.subr.bf16.mxu0 0
        %810 = vmatpush2.bf16.xpose.msra.mxu0 0
        %811 = vmatprep.subr.bf16.mxu0 0
        %812 = vmatpush2.bf16.xpose.msra.mxu0 0
        %813 = vmatprep.mubr.bf16.mxu0 0
        %814 = vmatmul.mubr.bf16.gmra.mxu0 %v776
        %v815 = vpop.f32.mrf.mxu0
        %v816 = vadd.f32 0.0, %v815
        %v817 = vpop.f32.mrf.mxu0
        %v818 = vpop.f32.mrf.mxu0
        %v819 = vpop.f32.mrf.mxu0
        %820 = vdwg.mxu0
        %v821 = vsel %vm538, %v816, -inf
        %822 = vmax.xlane.f32.xlu0 %v821
        %v823 = vpop.xlane.xlu0 %822
        %v824 = vsub.f32 %v816, %v823
        %v825 = vmul.f32 %v824, 1.442695
        %v826 = vpow.pop %v825
        %v827 = vsel %vm538, %v826, 0.0
        %828 = vadd.xlane.f32.xlu0 %v827
        %v829 = vpop.xlane.xlu0 %828
        %v830 = vrcp.pop %v829
        %v831 = vmul.f32 %v826, %v830
        %v832 = vpack.c.bf16 %v831, %v831
        %833 = vrot.lane.b32.xlu0 %v770, 48
        %v834 = vpop.permute.xlu0 %833
        %v836 = vsel %vm538, %v832, 0
        %v839 = vsel %vm602, %v834, 0
        %841 = vmatprep.subr.bf16.mxu0 0
        %842 = vmatpush1.bf16.msra.mxu0 0
        %843 = vmatprep.subr.bf16.mxu0 0
        %844 = vmatpush1.bf16.msra.mxu0 0
        %845 = vmatprep.subr.bf16.mxu0 0
        %846 = vmatpush1.bf16.msra.mxu0 0
        %847 = vmatprep.subr.bf16.mxu0 0
        %848 = vmatpush1.bf16.msra.mxu0 0
        %849 = vmatprep.subr.bf16.mxu0 0
        %850 = vmatpush1.bf16.msra.mxu0 0
        %851 = vmatprep.subr.bf16.mxu0 0
        %852 = vmatpush1.bf16.msra.mxu0 0
        %853 = vmatprep.subr.bf16.mxu0 0
        %854 = vmatpush1.bf16.msra.mxu0 0
        %855 = vmatprep.subr.bf16.mxu0 0
        %856 = vmatpush1.bf16.msra.mxu0 %v839
        %857 = vmatprep.subr.bf16.mxu0 0
        %858 = vmatpush2.bf16.msra.mxu0 0
        %859 = vmatprep.subr.bf16.mxu0 0
        %860 = vmatpush2.bf16.msra.mxu0 0
        %861 = vmatprep.subr.bf16.mxu0 0
        %862 = vmatpush2.bf16.msra.mxu0 0
        %863 = vmatprep.subr.bf16.mxu0 0
        %864 = vmatpush2.bf16.msra.mxu0 0
        %865 = vmatprep.subr.bf16.mxu0 0
        %866 = vmatpush2.bf16.msra.mxu0 0
        %867 = vmatprep.subr.bf16.mxu0 0
        %868 = vmatpush2.bf16.msra.mxu0 0
        %869 = vmatprep.subr.bf16.mxu0 0
        %870 = vmatpush2.bf16.msra.mxu0 0
        %871 = vmatprep.subr.bf16.mxu0 0
        %872 = vmatpush2.bf16.msra.mxu0 0
        %873 = vmatprep.mubr.bf16.mxu0 0
        %874 = vmatmul.mubr.bf16.gmra.mxu0 %v836
        %v875 = vpop.f32.mrf.mxu0
        %v876 = vadd.f32 0.0, %v875
        %v877 = vpop.f32.mrf.mxu0
        %v878 = vpop.f32.mrf.mxu0
        %v879 = vpop.f32.mrf.mxu0
        %880 = vdwg.mxu0
        %882 = vrot.lane.b32.xlu0 %v876, 16
        %v883 = vpop.permute.xlu0 %882
        %vm885 = vcmask 195712
        %886 = vst.msk [vmem:[#allocation3] sm:$0xff] %vm885, %v883
        %v887 = vld [vmem:[#allocation2] sm:$0xf]
        %v889 = vunpack.c.l.b16 %v887
        %v890 = vpack.c.b16 %v889, %v889
        %891 = vrot.lane.b32.xlu0 %v890, 104
        %v892 = vpop.permute.xlu0 %891
        %893 = vrot.lane.b32.xlu0 %v890, 72
        %v894 = vpop.permute.xlu0 %893
        %v896 = vsel %vm538, %v892, 0
        %v899 = vsel %vm538, %v894, 0
        %901 = vmatprep.subr.bf16.mxu0 0
        %902 = vmatpush1.bf16.xpose.msra.mxu0 0
        %903 = vmatprep.subr.bf16.mxu0 0
        %904 = vmatpush1.bf16.xpose.msra.mxu0 0
        %905 = vmatprep.subr.bf16.mxu0 0
        %906 = vmatpush1.bf16.xpose.msra.mxu0 0
        %907 = vmatprep.subr.bf16.mxu0 0
        %908 = vmatpush1.bf16.xpose.msra.mxu0 0
        %909 = vmatprep.subr.bf16.mxu0 0
        %910 = vmatpush1.bf16.xpose.msra.mxu0 0
        %911 = vmatprep.subr.bf16.mxu0 0
        %912 = vmatpush1.bf16.xpose.msra.mxu0 0
        %913 = vmatprep.subr.bf16.mxu0 0
        %914 = vmatpush1.bf16.xpose.msra.mxu0 0
        %915 = vmatprep.subr.bf16.mxu0 0
        %916 = vmatpush1.bf16.xpose.msra.mxu0 %v899
        %917 = vmatprep.subr.bf16.mxu0 0
        %918 = vmatpush2.bf16.xpose.msra.mxu0 0
        %919 = vmatprep.subr.bf16.mxu0 0
        %920 = vmatpush2.bf16.xpose.msra.mxu0 0
        %921 = vmatprep.subr.bf16.mxu0 0
        %922 = vmatpush2.bf16.xpose.msra.mxu0 0
        %923 = vmatprep.subr.bf16.mxu0 0
        %924 = vmatpush2.bf16.xpose.msra.mxu0 0
        %925 = vmatprep.subr.bf16.mxu0 0
        %926 = vmatpush2.bf16.xpose.msra.mxu0 0
        %927 = vmatprep.subr.bf16.mxu0 0
        %928 = vmatpush2.bf16.xpose.msra.mxu0 0
        %929 = vmatprep.subr.bf16.mxu0 0
        %930 = vmatpush2.bf16.xpose.msra.mxu0 0
        %931 = vmatprep.subr.bf16.mxu0 0
        %932 = vmatpush2.bf16.xpose.msra.mxu0 0
        %933 = vmatprep.mubr.bf16.mxu0 0
        %934 = vmatmul.mubr.bf16.gmra.mxu0 %v896
        %v935 = vpop.f32.mrf.mxu0
        %v936 = vadd.f32 0.0, %v935
        %v937 = vpop.f32.mrf.mxu0
        %v938 = vpop.f32.mrf.mxu0
        %v939 = vpop.f32.mrf.mxu0
        %940 = vdwg.mxu0
        %v941 = vsel %vm538, %v936, -inf
        %942 = vmax.xlane.f32.xlu0 %v941
        %v943 = vpop.xlane.xlu0 %942
        %v944 = vsub.f32 %v936, %v943
        %v945 = vmul.f32 %v944, 1.442695
        %v946 = vpow.pop %v945
        %v947 = vsel %vm538, %v946, 0.0
        %948 = vadd.xlane.f32.xlu0 %v947
        %v949 = vpop.xlane.xlu0 %948
        %v950 = vrcp.pop %v949
        %v951 = vmul.f32 %v946, %v950
        %v952 = vpack.c.bf16 %v951, %v951
        %953 = vrot.lane.b32.xlu0 %v890, 40
        %v954 = vpop.permute.xlu0 %953
        %v956 = vsel %vm538, %v952, 0
        %v959 = vsel %vm602, %v954, 0
        %961 = vmatprep.subr.bf16.mxu0 0
        %962 = vmatpush1.bf16.msra.mxu0 0
        %963 = vmatprep.subr.bf16.mxu0 0
        %964 = vmatpush1.bf16.msra.mxu0 0
        %965 = vmatprep.subr.bf16.mxu0 0
        %966 = vmatpush1.bf16.msra.mxu0 0
        %967 = vmatprep.subr.bf16.mxu0 0
        %968 = vmatpush1.bf16.msra.mxu0 0
        %969 = vmatprep.subr.bf16.mxu0 0
        %970 = vmatpush1.bf16.msra.mxu0 0
        %971 = vmatprep.subr.bf16.mxu0 0
        %972 = vmatpush1.bf16.msra.mxu0 0
        %973 = vmatprep.subr.bf16.mxu0 0
        %974 = vmatpush1.bf16.msra.mxu0 0
        %975 = vmatprep.subr.bf16.mxu0 0
        %976 = vmatpush1.bf16.msra.mxu0 %v959
        %977 = vmatprep.subr.bf16.mxu0 0
        %978 = vmatpush2.bf16.msra.mxu0 0
        %979 = vmatprep.subr.bf16.mxu0 0
        %980 = vmatpush2.bf16.msra.mxu0 0
        %981 = vmatprep.subr.bf16.mxu0 0
        %982 = vmatpush2.bf16.msra.mxu0 0
        %983 = vmatprep.subr.bf16.mxu0 0
        %984 = vmatpush2.bf16.msra.mxu0 0
        %985 = vmatprep.subr.bf16.mxu0 0
        %986 = vmatpush2.bf16.msra.mxu0 0
        %987 = vmatprep.subr.bf16.mxu0 0
        %988 = vmatpush2.bf16.msra.mxu0 0
        %989 = vmatprep.subr.bf16.mxu0 0
        %990 = vmatpush2.bf16.msra.mxu0 0
        %991 = vmatprep.subr.bf16.mxu0 0
        %992 = vmatpush2.bf16.msra.mxu0 0
        %993 = vmatprep.mubr.bf16.mxu0 0
        %994 = vmatmul.mubr.bf16.gmra.mxu0 %v956
        %v995 = vpop.f32.mrf.mxu0
        %v996 = vadd.f32 0.0, %v995
        %v997 = vpop.f32.mrf.mxu0
        %v998 = vpop.f32.mrf.mxu0
        %v999 = vpop.f32.mrf.mxu0
        %1000 = vdwg.mxu0
        %1002 = vrot.lane.b32.xlu0 %v996, 24
        %v1003 = vpop.permute.xlu0 %1002
        %vm1005 = vcmask 261312
        %1006 = vst.msk [vmem:[#allocation3] sm:$0xff] %vm1005, %v1003
        %v1007 = vld [vmem:[#allocation3] sm:$0xff]
        %v1008 = vpack.c.bf16 %v1007, %v1007
        %v1009 = vld [vmem:[%s5] sm:$0xf]
        %v1010 = vld [vmem:[%s5 + $0x4] sm:$0xf]
        %v1011 = vld [vmem:[%s5 + $0x8] sm:$0xf]
        %v1012 = vld [vmem:[%s5 + $0xc] sm:$0xf]
        %v1017 = vunpack.c.l.b16 %v1009
        %v1018 = vunpack.c.l.b16 %v1010
        %v1019 = vunpack.c.l.b16 %v1011
        %v1020 = vunpack.c.l.b16 %v1012
        %v1021 = vpack.c.b16 %v1018, %v1017
        %v1022 = vpack.c.b16 %v1020, %v1019
        %v1026 = vsel %vm440, %v1008, 0
        %1028 = vmatprep.subr.bf16.mxu0 0
        %1029 = vmatpush1.bf16.msra.mxu0 0
        %1030 = vmatprep.subr.bf16.mxu0 0
        %1031 = vmatpush1.bf16.msra.mxu0 0
        %1032 = vmatprep.subr.bf16.mxu0 0
        %1033 = vmatpush1.bf16.msra.mxu0 0
        %1034 = vmatprep.subr.bf16.mxu0 0
        %1035 = vmatpush1.bf16.msra.mxu0 0
        %1036 = vmatprep.subr.bf16.mxu0 0
        %1037 = vmatpush1.bf16.msra.mxu0 0
        %1038 = vmatprep.subr.bf16.mxu0 0
        %1039 = vmatpush1.bf16.msra.mxu0 0
        %1040 = vmatprep.subr.bf16.mxu0 0
        %1041 = vmatpush1.bf16.msra.mxu0 %v1022
        %1042 = vmatprep.subr.bf16.mxu0 0
        %1043 = vmatpush1.bf16.msra.mxu0 %v1021
        %1044 = vmatprep.subr.bf16.mxu0 0
        %1045 = vmatpush2.bf16.msra.mxu0 0
        %1046 = vmatprep.subr.bf16.mxu0 0
        %1047 = vmatpush2.bf16.msra.mxu0 0
        %1048 = vmatprep.subr.bf16.mxu0 0
        %1049 = vmatpush2.bf16.msra.mxu0 0
        %1050 = vmatprep.subr.bf16.mxu0 0
        %1051 = vmatpush2.bf16.msra.mxu0 0
        %1052 = vmatprep.subr.bf16.mxu0 0
        %1053 = vmatpush2.bf16.msra.mxu0 0
        %1054 = vmatprep.subr.bf16.mxu0 0
        %1055 = vmatpush2.bf16.msra.mxu0 0
        %1056 = vmatprep.subr.bf16.mxu0 0
        %1057 = vmatpush2.bf16.msra.mxu0 0
        %1058 = vmatprep.subr.bf16.mxu0 0
        %1059 = vmatpush2.bf16.msra.mxu0 0
        %1060 = vmatprep.mubr.bf16.mxu0 0
        %1061 = vmatmul.mubr.bf16.gmra.mxu0 %v1026
        %v1062 = vpop.f32.mrf.mxu0
        %v1063 = vadd.f32 0.0, %v1062
        %v1064 = vpop.f32.mrf.mxu0
        %v1065 = vpop.f32.mrf.mxu0
        %v1066 = vpop.f32.mrf.mxu0
        %1067 = vdwg.mxu0
        %v1068 = vadd.f32 %v437, %v1063
        %v1069 = vld [vmem:[%s6] sm:$0x1]
        %v1071 = vlaneseq
        %v1072 = vshrl.u32 %v1071, 7
        %v1073 = vsub.s32 0, %v1072
        %v1074 = vrot.slane %v1069, %v1073
        %v1076 = vadd.f32 %v1068, %v1074
        %v1077 = vld [vmem:[%s7] sm:$0x1]
        %v1078 = vld [vmem:[%s8] sm:$0x1]
        %v1079 = vsel %vm440, %v1076, 0.0
        %1080 = vadd.xlane.f32.xlu0 %v1079
        %v1081 = vpop.xlane.xlu0 %1080
        %v1082 = vmul.f32 %v1081, %v444
        %v1083 = vsub.f32 %v1076, %v1082
        %v1084 = vmul.f32 %v1083, %v1083
        %v1085 = vsel %vm440, %v1084, 0.0
        %1086 = vadd.xlane.f32.xlu0 %v1085
        %v1087 = vpop.xlane.xlu0 %1086
        %v1088 = vmul.f32 %v1087, %v444
        %v1089 = vadd.f32 %v1088, 1e-05
        %v1090 = vrsqrt.pop %v1089
        %v1091 = vmul.f32 %v1083, %v1090
        %v1093 = vlaneseq
        %v1094 = vshrl.u32 %v1093, 7
        %v1095 = vsub.s32 0, %v1094
        %v1096 = vrot.slane %v1077, %v1095
        %v1098 = vmul.f32 %v1091, %v1096
        %v1100 = vlaneseq
        %v1101 = vshrl.u32 %v1100, 7
        %v1102 = vsub.s32 0, %v1101
        %v1103 = vrot.slane %v1078, %v1102
        %v1105 = vadd.f32 %v1098, %v1103
        %v1106 = vpack.c.bf16 %v1105, %v1105
        %v1107 = vld [vmem:[%s12] sm:$0x1]
        %v1109 = vlaneseq
        %v1110 = vshrl.u32 %v1109, 7
        %v1111 = vsub.s32 0, %v1110
        %v1112 = vrot.slane %v1107, %v1111
        %v1114 = vadd.f32 %v1076, %v1112
        %v1115 = vld [vmem:[%s9] sm:$0xf]
        %v1116 = vld [vmem:[%s9 + $0x4] sm:$0xf]
        %v1117 = vld [vmem:[%s9 + $0x8] sm:$0xf]
        %v1118 = vld [vmem:[%s9 + $0xc] sm:$0xf]
        %v1119 = vld [vmem:[%s10] sm:$0x1]
        %v1121 = vlaneseq
        %v1122 = vshrl.u32 %v1121, 7
        %v1123 = vsub.s32 0, %v1122
        %v1124 = vrot.slane %v1119, %v1123
        %v1130 = vunpack.c.l.b16 %v1115
        %v1131 = vunpack.c.l.b16 %v1116
        %v1132 = vunpack.c.l.b16 %v1117
        %v1133 = vunpack.c.l.b16 %v1118
        %v1134 = vpack.c.b16 %v1131, %v1130
        %v1135 = vpack.c.b16 %v1133, %v1132
        %v1139 = vsel %vm440, %v1106, 0
        %1141 = vmatprep.subr.bf16.mxu0 0
        %1142 = vmatpush1.bf16.msra.mxu0 0
        %1143 = vmatprep.subr.bf16.mxu0 0
        %1144 = vmatpush1.bf16.msra.mxu0 0
        %1145 = vmatprep.subr.bf16.mxu0 0
        %1146 = vmatpush1.bf16.msra.mxu0 0
        %1147 = vmatprep.subr.bf16.mxu0 0
        %1148 = vmatpush1.bf16.msra.mxu0 0
        %1149 = vmatprep.subr.bf16.mxu0 0
        %1150 = vmatpush1.bf16.msra.mxu0 0
        %1151 = vmatprep.subr.bf16.mxu0 0
        %1152 = vmatpush1.bf16.msra.mxu0 0
        %1153 = vmatprep.subr.bf16.mxu0 0
        %1154 = vmatpush1.bf16.msra.mxu0 %v1135
        %1155 = vmatprep.subr.bf16.mxu0 0
        %1156 = vmatpush1.bf16.msra.mxu0 %v1134
        %1157 = vmatprep.subr.bf16.mxu0 0
        %1158 = vmatpush2.bf16.msra.mxu0 0
        %1159 = vmatprep.subr.bf16.mxu0 0
        %1160 = vmatpush2.bf16.msra.mxu0 0
        %1161 = vmatprep.subr.bf16.mxu0 0
        %1162 = vmatpush2.bf16.msra.mxu0 0
        %1163 = vmatprep.subr.bf16.mxu0 0
        %1164 = vmatpush2.bf16.msra.mxu0 0
        %1165 = vmatprep.subr.bf16.mxu0 0
        %1166 = vmatpush2.bf16.msra.mxu0 0
        %1167 = vmatprep.subr.bf16.mxu0 0
        %1168 = vmatpush2.bf16.msra.mxu0 0
        %1169 = vmatprep.subr.bf16.mxu0 0
        %1170 = vmatpush2.bf16.msra.mxu0 0
        %1171 = vmatprep.subr.bf16.mxu0 0
        %1172 = vmatpush2.bf16.msra.mxu0 0
        %1173 = vmatprep.mubr.bf16.mxu0 0
        %1174 = vmatmul.mubr.bf16.gmra.mxu0 %v1139
        %v1175 = vpop.f32.mrf.mxu0
        %v1176 = vadd.f32 %v1124, %v1175
        %v1177 = vpop.f32.mrf.mxu0
        %v1178 = vpop.f32.mrf.mxu0
        %v1179 = vpop.f32.mrf.mxu0
        %1180 = vdwg.mxu0
        %v1181 = vmul.f32 %v1176, 0.5
        %v1182 = vmul.f32 %v1176, 0.70710677
        %v1183 = verf.f32.pop %v1182
        %v1184 = vadd.f32 %v1183, 1.0
        %v1185 = vmul.f32 %v1181, %v1184
        %v1186 = vpack.c.bf16 %v1185, %v1185
        %v1187 = vld [vmem:[%s11] sm:$0xf]
        %v1188 = vld [vmem:[%s11 + $0x4] sm:$0xf]
        %v1189 = vld [vmem:[%s11 + $0x8] sm:$0xf]
        %v1190 = vld [vmem:[%s11 + $0xc] sm:$0xf]
        %v1191 = vld [vmem:[%s11 + $0x10] sm:$0xf]
        %v1192 = vld [vmem:[%s11 + $0x14] sm:$0xf]
        %v1193 = vld [vmem:[%s11 + $0x18] sm:$0xf]
        %v1194 = vld [vmem:[%s11 + $0x1c] sm:$0xf]
        %v1195 = vld [vmem:[%s11 + $0x20] sm:$0xf]
        %v1196 = vld [vmem:[%s11 + $0x24] sm:$0xf]
        %v1197 = vld [vmem:[%s11 + $0x28] sm:$0xf]
        %v1198 = vld [vmem:[%s11 + $0x2c] sm:$0xf]
        %v1199 = vld [vmem:[%s11 + $0x30] sm:$0xf]
        %v1200 = vld [vmem:[%s11 + $0x34] sm:$0xf]
        %v1201 = vld [vmem:[%s11 + $0x38] sm:$0xf]
        %v1202 = vld [vmem:[%s11 + $0x3c] sm:$0xf]
        %v1219 = vunpack.c.l.b16 %v1187
        %v1220 = vunpack.c.l.b16 %v1188
        %v1221 = vunpack.c.l.b16 %v1189
        %v1222 = vunpack.c.l.b16 %v1190
        %v1223 = vunpack.c.l.b16 %v1191
        %v1224 = vunpack.c.l.b16 %v1192
        %v1225 = vunpack.c.l.b16 %v1193
        %v1226 = vunpack.c.l.b16 %v1194
        %v1227 = vunpack.c.l.b16 %v1195
        %v1228 = vunpack.c.l.b16 %v1196
        %v1229 = vunpack.c.l.b16 %v1197
        %v1230 = vunpack.c.l.b16 %v1198
        %v1231 = vunpack.c.l.b16 %v1199
        %v1232 = vunpack.c.l.b16 %v1200
        %v1233 = vunpack.c.l.b16 %v1201
        %v1234 = vunpack.c.l.b16 %v1202
        %v1235 = vpack.c.b16 %v1220, %v1219
        %v1236 = vpack.c.b16 %v1222, %v1221
        %v1237 = vpack.c.b16 %v1224, %v1223
        %v1238 = vpack.c.b16 %v1226, %v1225
        %v1239 = vpack.c.b16 %v1228, %v1227
        %v1240 = vpack.c.b16 %v1230, %v1229
        %v1241 = vpack.c.b16 %v1232, %v1231
        %v1242 = vpack.c.b16 %v1234, %v1233
        %1251 = vmatprep.subr.bf16.mxu0 0
        %1252 = vmatpush1.bf16.msra.mxu0 %v1242
        %1253 = vmatprep.subr.bf16.mxu0 0
        %1254 = vmatpush1.bf16.msra.mxu0 %v1241
        %1255 = vmatprep.subr.bf16.mxu0 0
        %1256 = vmatpush1.bf16.msra.mxu0 %v1240
        %1257 = vmatprep.subr.bf16.mxu0 0
        %1258 = vmatpush1.bf16.msra.mxu0 %v1239
        %1259 = vmatprep.subr.bf16.mxu0 0
        %1260 = vmatpush1.bf16.msra.mxu0 %v1238
        %1261 = vmatprep.subr.bf16.mxu0 0
        %1262 = vmatpush1.bf16.msra.mxu0 %v1237
        %1263 = vmatprep.subr.bf16.mxu0 0
        %1264 = vmatpush1.bf16.msra.mxu0 %v1236
        %1265 = vmatprep.subr.bf16.mxu0 0
        %1266 = vmatpush1.bf16.msra.mxu0 %v1235
        %1267 = vmatprep.subr.bf16.mxu0 0
        %1268 = vmatpush2.bf16.msra.mxu0 0
        %1269 = vmatprep.subr.bf16.mxu0 0
        %1270 = vmatpush2.bf16.msra.mxu0 0
        %1271 = vmatprep.subr.bf16.mxu0 0
        %1272 = vmatpush2.bf16.msra.mxu0 0
        %1273 = vmatprep.subr.bf16.mxu0 0
        %1274 = vmatpush2.bf16.msra.mxu0 0
        %1275 = vmatprep.subr.bf16.mxu0 0
        %1276 = vmatpush2.bf16.msra.mxu0 0
        %1277 = vmatprep.subr.bf16.mxu0 0
        %1278 = vmatpush2.bf16.msra.mxu0 0
        %1279 = vmatprep.subr.bf16.mxu0 0
        %1280 = vmatpush2.bf16.msra.mxu0 0
        %1281 = vmatprep.subr.bf16.mxu0 0
        %1282 = vmatpush2.bf16.msra.mxu0 0
        %1283 = vmatprep.mubr.bf16.mxu0 0
        %1284 = vmatmul.mubr.bf16.gmra.mxu0 %v1186
        %v1285 = vpop.f32.mrf.mxu0
        %v1286 = vadd.f32 0.0, %v1285
        %v1287 = vpop.f32.mrf.mxu0
        %v1288 = vpop.f32.mrf.mxu0
        %v1289 = vpop.f32.mrf.mxu0
        %1290 = vdwg.mxu0
        %v1291 = vadd.f32 %v1114, %v1286
        %1292 = vst.msk [vmem:[%s431] sm:$0xff] %vm440, %v1291
        %s1293 = sand.u32 %s313, 1
        %s1294 = scalar_lea.sflag [#allocation5], %s1293
        %s1295 = sand.u32 %s313, 1
        %s1296 = smul.addr %s1295, 8
        %s1297 = scalar_lea.vmem [#allocation4], %s1296
        // Predicated region
        $region73: #{tpu_custom_call.1} parent=71 // pred_check
          %p1298 = pneg %p323
        $region74: #{tpu_custom_call.1} parent=71 // pred_check_branch
          %1300 = sbr.rel (%p1298) target = $region76
        $region75: #{tpu_custom_call.1} parent=71 // pred_region
          %s1302 = ssub.s32 128, 128
          %1303 = vsyncadd %s1294, %s1302
          %s1304 = smul.addr %s27, 128
          %s1305 = scalar_lea.hbm %s13, %s1304
          %s1307 = sshll.u32 %s1297, 4
          %s1308 = int_to_ptr.vmem [resolvable:$true] %s1307
          %1310 = dma.vmem_to_hbm [thread:$0]  %s1308, 128, %s1305, %s1294
        $region76: #{tpu_custom_call.1} parent=71 // pred_fallthru
          _
      $region72: #{tpu_custom_call.1} parent=5 // pred_fallthru
        _
      %p1311 = scmp.le.s32.totalorder 2, %s22
      // Predicated region
      $region77: #{tpu_custom_call.1} parent=5 // pred_check
        %p1312 = pneg %p1311
      $region78: #{tpu_custom_call.1} parent=5 // pred_check_branch
        %1314 = sbr.rel (%p1312) target = $region80
      $region79: #{tpu_custom_call.1} parent=5 // pred_region
        %s1315 = ssub.s32 %s22, 2
        // Predicated region
        $region81: #{tpu_custom_call.1} parent=79 // pred_check
          %p1316 = pneg %p329
        $region82: #{tpu_custom_call.1} parent=79 // pred_check_branch
          %1318 = sbr.rel (%p1316) target = $region84
        $region83: #{tpu_custom_call.1} parent=79 // pred_region
          %s1319 = sand.u32 %s314, 1
          %s1320 = scalar_lea.sflag [#allocation5], %s1319
          %s1321 = sand.u32 %s314, 1
          %s1322 = smul.addr %s1321, 8
          %s1323 = scalar_lea.vmem [#allocation4], %s1322
          %1324 = dma.done %s1320, 128
        $region84: #{tpu_custom_call.1} parent=79 // pred_fallthru
          _
      $region80: #{tpu_custom_call.1} parent=5 // pred_fallthru
        _
    $region6: #{tpu_custom_call.1} parent=1 // loop_footer
      %s26 = sadd.s32 1, %s22
    $region7: #{tpu_custom_call.1} parent=1 // loop_footer_branch
      %21 = sbr.rel target = $region3
    $region8: #{tpu_custom_call.1} parent=1 // loop_exit
      _
    %1325 = vsyncpa [#allocation5], 1
    %s1326 = scalar_lea.sflag [#allocation5], 1
    %1327 = vsyncpa %s1326, 1

// kernel: tpu_custom_call.1
$region0: #{tpu_custom_call.1}
  #allocation0 [shape = 'u32[]', space=smem, size = 0x4, offset = 0x4, fixed_abs, tag = 'smem constant byte address 0x4 - core index']
  #allocation1 [shape = 'u32[144,128]{1,0:T(1,128)}', space=vmem, size = 0x12000, scoped, tag = 'internal scratch']
  #allocation2 [shape = 'bf16[8,96]{1,0:T(8,128)(2,1)}', space=vmem, size = 0x800, scoped, tag = 'scratch operand']
  #allocation3 [shape = 'f32[8,32]{1,0:T(8,128)}', space=vmem, size = 0x1000, scoped, tag = 'scratch operand']
  %s0 = inlined_call_operand.vmem [shape: f32[1,8], index: 0, kind: input, shape index: {}]
  %s1 = inlined_call_operand.vmem [shape: f32[16,32], index: 1, kind: input, shape index: {}]
  %s2 = inlined_call_operand.vmem [shape: f32[1,32], index: 2, kind: input, shape index: {}]
  %s3 = inlined_call_operand.vmem [shape: f32[1,32], index: 3, kind: input, shape index: {}]
  %s4 = inlined_call_operand.vmem [shape: bf16[32,96], index: 4, kind: input, shape index: {}]
  %s5 = inlined_call_operand.vmem [shape: bf16[32,32], index: 5, kind: input, shape index: {}]
  %s6 = inlined_call_operand.vmem [shape: f32[1,32], index: 6, kind: input, shape index: {}]
  %s7 = inlined_call_operand.vmem [shape: f32[1,32], index: 7, kind: input, shape index: {}]
  %s8 = inlined_call_operand.vmem [shape: f32[1,32], index: 8, kind: input, shape index: {}]
  %s9 = inlined_call_operand.vmem [shape: bf16[32,128], index: 9, kind: input, shape index: {}]
  %s10 = inlined_call_operand.vmem [shape: f32[1,128], index: 10, kind: input, shape index: {}]
  %s11 = inlined_call_operand.vmem [shape: bf16[128,32], index: 11, kind: input, shape index: {}]
  %s12 = inlined_call_operand.vmem [shape: f32[1,32], index: 12, kind: input, shape index: {}]
  %s13 = inlined_call_operand.hbm [shape: f32[16,32], index: 13, kind: output, shape index: {}]
  %s14 = sld [smem:[#allocation0]]
  $region85: #{tpu_custom_call.1} parent=0
    _
  %s16 = ssub.s32 1, %s14
  %s17 = scalar_select 0, %s16, %s14
  $region1: #{tpu_custom_call.1} parent=0
    #allocation4 [shape = 'u8[8192]{0}', space=vmem, size = 0x2000, scoped, tag = 'output window, operand 0']
    #allocation5 [shape = 's32[2]{0}', space=sflag, size = 0x8, scoped, tag = 'scoped memory for tpu_custom_call.1']
    %18 = vsyncpa [#allocation5], 0
    %s19 = scalar_lea.sflag [#allocation5], 1
    %20 = vsyncpa %s19, 0
    loop: start=0, step=1, limit=4
    $region2: #{tpu_custom_call.1} parent=1 // loop_pre_header
      _
    $region3: #{tpu_custom_call.1} parent=1 // loop_header
      %s22 = sphi 0, %s26
      %p23 = scmp.ge.s32.totalorder %s22, 4
      %s30 = sphi 0, %s30
      %s32 = sphi 0, %s30
      %s33 = sphi 0, %s32
      %s47 = sphi 0, %s33
      %s53 = sphi 0, %s55
      %s56 = sphi 0, %s53
      %s57 = sphi 0, %s56
      %s73 = sphi 0, %s57
      %s77 = sphi 0, %s77
      %s79 = sphi 0, %s77
      %s80 = sphi 0, %s79
      %s94 = sphi 0, %s80
      %s98 = sphi 0, %s98
      %s100 = sphi 0, %s98
      %s101 = sphi 0, %s100
      %s115 = sphi 0, %s101
      %s119 = sphi 0, %s119
      %s121 = sphi 0, %s119
      %s122 = sphi 0, %s121
      %s136 = sphi 0, %s122
      %s140 = sphi 0, %s140
      %s142 = sphi 0, %s140
      %s143 = sphi 0, %s142
      %s157 = sphi 0, %s143
      %s161 = sphi 0, %s161
      %s163 = sphi 0, %s161
      %s164 = sphi 0, %s163
      %s178 = sphi 0, %s164
      %s182 = sphi 0, %s182
      %s184 = sphi 0, %s182
      %s185 = sphi 0, %s184
      %s199 = sphi 0, %s185
      %s203 = sphi 0, %s203
      %s205 = sphi 0, %s203
      %s206 = sphi 0, %s205
      %s220 = sphi 0, %s206
      %s224 = sphi 0, %s224
      %s226 = sphi 0, %s224
      %s227 = sphi 0, %s226
      %s241 = sphi 0, %s227
      %s245 = sphi 0, %s245
      %s247 = sphi 0, %s245
      %s248 = sphi 0, %s247
      %s262 = sphi 0, %s248
      %s266 = sphi 0, %s266
      %s268 = sphi 0, %s266
      %s269 = sphi 0, %s268
      %s283 = sphi 0, %s269
      %s287 = sphi 0, %s287
      %s289 = sphi 0, %s287
      %s290 = sphi 0, %s289
      %s304 = sphi 0, %s290
      %s310 = sphi 0, %s312
      %s313 = sphi 0, %s310
      %s314 = sphi 0, %s313
      %s330 = sphi 0, %s314
    $region4: #{tpu_custom_call.1} parent=1 // loop_header_branch
      %25 = sbr.rel (%p23) target = $region8
    $region5: #{tpu_custom_call.1} parent=1 // loop_body
      %s27 = ssub.s32 %s22, 1
      %s28 = ssub.s32 %s22, 2
      %s29 = sadd.s32 %s22, 1
      %s31 = sadd.s32 %s30, 1
      %p34 = scmp.eq.s32.totalorder %s22, 1
      %p35 = scmp.ne.s32.totalorder %s30, %s32
      %p36 = scmp.eq.s32.totalorder %s22, 0
      %p37 = por %p35, %p36
      %p38 = scmp.ne.s32.totalorder %s30, %s32
      %p39 = scmp.eq.s32.totalorder %s27, 1
      %p40 = por %p38, %p39
      %p41 = scmp.ne.s32.totalorder %s32, %s33
      %p42 = scmp.eq.s32.totalorder %s27, 0
      %p43 = por %p41, %p42
      %p44 = scmp.ne.s32.totalorder %s32, %s33
      %p45 = scmp.eq.s32.totalorder %s28, 1
      %p46 = por %p44, %p45
      %p48 = scmp.ne.s32.totalorder %s33, %s47
      %p49 = scmp.eq.s32.totalorder %s28, 0
      %p50 = por %p48, %p49
      %s51 = ssub.s32 %s22, %s29
      %p52 = scmp.eq.s32.totalorder %s51, 0
      %s54 = sadd.s32 %s53, 1
      %s55 = scalar_select %p52, %s53, %s54
      %p58 = pneg %p52
      %p59 = scmp.eq.s32.totalorder %s22, 1
      %p60 = por %p58, %p59
      %p61 = scmp.ne.s32.totalorder %s53, %s56
      %p62 = scmp.eq.s32.totalorder %s22, 0
      %p63 = por %p61, %p62
      %p64 = scmp.ne.s32.totalorder %s53, %s56
      %p65 = scmp.eq.s32.totalorder %s27, 1
      %p66 = por %p64, %p65
      %p67 = scmp.ne.s32.totalorder %s56, %s57
      %p68 = scmp.eq.s32.totalorder %s27, 0
      %p69 = por %p67, %p68
      %p70 = scmp.ne.s32.totalorder %s56, %s57
      %p71 = scmp.eq.s32.totalorder %s28, 1
      %p72 = por %p70, %p71
      %p74 = scmp.ne.s32.totalorder %s57, %s73
      %p75 = scmp.eq.s32.totalorder %s28, 0
      %p76 = por %p74, %p75
      %s78 = sadd.s32 %s77, 1
      %p81 = scmp.eq.s32.totalorder %s22, 1
      %p82 = scmp.ne.s32.totalorder %s77, %s79
      %p83 = scmp.eq.s32.totalorder %s22, 0
      %p84 = por %p82, %p83
      %p85 = scmp.ne.s32.totalorder %s77, %s79
      %p86 = scmp.eq.s32.totalorder %s27, 1
      %p87 = por %p85, %p86
      %p88 = scmp.ne.s32.totalorder %s79, %s80
      %p89 = scmp.eq.s32.totalorder %s27, 0
      %p90 = por %p88, %p89
      %p91 = scmp.ne.s32.totalorder %s79, %s80
      %p92 = scmp.eq.s32.totalorder %s28, 1
      %p93 = por %p91, %p92
      %p95 = scmp.ne.s32.totalorder %s80, %s94
      %p96 = scmp.eq.s32.totalorder %s28, 0
      %p97 = por %p95, %p96
      %s99 = sadd.s32 %s98, 1
      %p102 = scmp.eq.s32.totalorder %s22, 1
      %p103 = scmp.ne.s32.totalorder %s98, %s100
      %p104 = scmp.eq.s32.totalorder %s22, 0
      %p105 = por %p103, %p104
      %p106 = scmp.ne.s32.totalorder %s98, %s100
      %p107 = scmp.eq.s32.totalorder %s27, 1
      %p108 = por %p106, %p107
      %p109 = scmp.ne.s32.totalorder %s100, %s101
      %p110 = scmp.eq.s32.totalorder %s27, 0
      %p111 = por %p109, %p110
      %p112 = scmp.ne.s32.totalorder %s100, %s101
      %p113 = scmp.eq.s32.totalorder %s28, 1
      %p114 = por %p112, %p113
      %p116 = scmp.ne.s32.totalorder %s101, %s115
      %p117 = scmp.eq.s32.totalorder %s28, 0
      %p118 = por %p116, %p117
      %s120 = sadd.s32 %s119, 1
      %p123 = scmp.eq.s32.totalorder %s22, 1
      %p124 = scmp.ne.s32.totalorder %s119, %s121
      %p125 = scmp.eq.s32.totalorder %s22, 0
      %p126 = por %p124, %p125
      %p127 = scmp.ne.s32.totalorder %s119, %s121
      %p128 = scmp.eq.s32.totalorder %s27, 1
      %p129 = por %p127, %p128
      %p130 = scmp.ne.s32.totalorder %s121, %s122
      %p131 = scmp.eq.s32.totalorder %s27, 0
      %p132 = por %p130, %p131
      %p133 = scmp.ne.s32.totalorder %s121, %s122
      %p134 = scmp.eq.s32.totalorder %s28, 1
      %p135 = por %p133, %p134
      %p137 = scmp.ne.s32.totalorder %s122, %s136
      %p138 = scmp.eq.s32.totalorder %s28, 0
      %p139 = por %p137, %p138
      %s141 = sadd.s32 %s140, 1
      %p144 = scmp.eq.s32.totalorder %s22, 1
      %p145 = scmp.ne.s32.totalorder %s140, %s142
      %p146 = scmp.eq.s32.totalorder %s22, 0
      %p147 = por %p145, %p146
      %p148 = scmp.ne.s32.totalorder %s140, %s142
      %p149 = scmp.eq.s32.totalorder %s27, 1
      %p150 = por %p148, %p149
      %p151 = scmp.ne.s32.totalorder %s142, %s143
      %p152 = scmp.eq.s32.totalorder %s27, 0
      %p153 = por %p151, %p152
      %p154 = scmp.ne.s32.totalorder %s142, %s143
      %p155 = scmp.eq.s32.totalorder %s28, 1
      %p156 = por %p154, %p155
      %p158 = scmp.ne.s32.totalorder %s143, %s157
      %p159 = scmp.eq.s32.totalorder %s28, 0
      %p160 = por %p158, %p159
      %s162 = sadd.s32 %s161, 1
      %p165 = scmp.eq.s32.totalorder %s22, 1
      %p166 = scmp.ne.s32.totalorder %s161, %s163
      %p167 = scmp.eq.s32.totalorder %s22, 0
      %p168 = por %p166, %p167
      %p169 = scmp.ne.s32.totalorder %s161, %s163
      %p170 = scmp.eq.s32.totalorder %s27, 1
      %p171 = por %p169, %p170
      %p172 = scmp.ne.s32.totalorder %s163, %s164
      %p173 = scmp.eq.s32.totalorder %s27, 0
      %p174 = por %p172, %p173
      %p175 = scmp.ne.s32.totalorder %s163, %s164
      %p176 = scmp.eq.s32.totalorder %s28, 1
      %p177 = por %p175, %p176
      %p179 = scmp.ne.s32.totalorder %s164, %s178
      %p180 = scmp.eq.s32.totalorder %s28, 0
      %p181 = por %p179, %p180
      %s183 = sadd.s32 %s182, 1
      %p186 = scmp.eq.s32.totalorder %s22, 1
      %p187 = scmp.ne.s32.totalorder %s182, %s184
      %p188 = scmp.eq.s32.totalorder %s22, 0
      %p189 = por %p187, %p188
      %p190 = scmp.ne.s32.totalorder %s182, %s184
      %p191 = scmp.eq.s32.totalorder %s27, 1
      %p192 = por %p190, %p191
      %p193 = scmp.ne.s32.totalorder %s184, %s185
      %p194 = scmp.eq.s32.totalorder %s27, 0
      %p195 = por %p193, %p194
      %p196 = scmp.ne.s32.totalorder %s184, %s185
      %p197 = scmp.eq.s32.totalorder %s28, 1
      %p198 = por %p196, %p197
      %p200 = scmp.ne.s32.totalorder %s185, %s199
      %p201 = scmp.eq.s32.totalorder %s28, 0
      %p202 = por %p200, %p201
      %s204 = sadd.s32 %s203, 1
      %p207 = scmp.eq.s32.totalorder %s22, 1
      %p208 = scmp.ne.s32.totalorder %s203, %s205
      %p209 = scmp.eq.s32.totalorder %s22, 0
      %p210 = por %p208, %p209
      %p211 = scmp.ne.s32.totalorder %s203, %s205
      %p212 = scmp.eq.s32.totalorder %s27, 1
      %p213 = por %p211, %p212
      %p214 = scmp.ne.s32.totalorder %s205, %s206
      %p215 = scmp.eq.s32.totalorder %s27, 0
      %p216 = por %p214, %p215
      %p217 = scmp.ne.s32.totalorder %s205, %s206
      %p218 = scmp.eq.s32.totalorder %s28, 1
      %p219 = por %p217, %p218
      %p221 = scmp.ne.s32.totalorder %s206, %s220
      %p222 = scmp.eq.s32.totalorder %s28, 0
      %p223 = por %p221, %p222
      %s225 = sadd.s32 %s224, 1
      %p228 = scmp.eq.s32.totalorder %s22, 1
      %p229 = scmp.ne.s32.totalorder %s224, %s226
      %p230 = scmp.eq.s32.totalorder %s22, 0
      %p231 = por %p229, %p230
      %p232 = scmp.ne.s32.totalorder %s224, %s226
      %p233 = scmp.eq.s32.totalorder %s27, 1
      %p234 = por %p232, %p233
      %p235 = scmp.ne.s32.totalorder %s226, %s227
      %p236 = scmp.eq.s32.totalorder %s27, 0
      %p237 = por %p235, %p236
      %p238 = scmp.ne.s32.totalorder %s226, %s227
      %p239 = scmp.eq.s32.totalorder %s28, 1
      %p240 = por %p238, %p239
      %p242 = scmp.ne.s32.totalorder %s227, %s241
      %p243 = scmp.eq.s32.totalorder %s28, 0
      %p244 = por %p242, %p243
      %s246 = sadd.s32 %s245, 1
      %p249 = scmp.eq.s32.totalorder %s22, 1
      %p250 = scmp.ne.s32.totalorder %s245, %s247
      %p251 = scmp.eq.s32.totalorder %s22, 0
      %p252 = por %p250, %p251
      %p253 = scmp.ne.s32.totalorder %s245, %s247
      %p254 = scmp.eq.s32.totalorder %s27, 1
      %p255 = por %p253, %p254
      %p256 = scmp.ne.s32.totalorder %s247, %s248
      %p257 = scmp.eq.s32.totalorder %s27, 0
      %p258 = por %p256, %p257
      %p259 = scmp.ne.s32.totalorder %s247, %s248
      %p260 = scmp.eq.s32.totalorder %s28, 1
      %p261 = por %p259, %p260
      %p263 = scmp.ne.s32.totalorder %s248, %s262
      %p264 = scmp.eq.s32.totalorder %s28, 0
      %p265 = por %p263, %p264
      %s267 = sadd.s32 %s266, 1
      %p270 = scmp.eq.s32.totalorder %s22, 1
      %p271 = scmp.ne.s32.totalorder %s266, %s268
      %p272 = scmp.eq.s32.totalorder %s22, 0
      %p273 = por %p271, %p272
      %p274 = scmp.ne.s32.totalorder %s266, %s268
      %p275 = scmp.eq.s32.totalorder %s27, 1
      %p276 = por %p274, %p275
      %p277 = scmp.ne.s32.totalorder %s268, %s269
      %p278 = scmp.eq.s32.totalorder %s27, 0
      %p279 = por %p277, %p278
      %p280 = scmp.ne.s32.totalorder %s268, %s269
      %p281 = scmp.eq.s32.totalorder %s28, 1
      %p282 = por %p280, %p281
      %p284 = scmp.ne.s32.totalorder %s269, %s283
      %p285 = scmp.eq.s32.totalorder %s28, 0
      %p286 = por %p284, %p285
      %s288 = sadd.s32 %s287, 1
      %p291 = scmp.eq.s32.totalorder %s22, 1
      %p292 = scmp.ne.s32.totalorder %s287, %s289
      %p293 = scmp.eq.s32.totalorder %s22, 0
      %p294 = por %p292, %p293
      %p295 = scmp.ne.s32.totalorder %s287, %s289
      %p296 = scmp.eq.s32.totalorder %s27, 1
      %p297 = por %p295, %p296
      %p298 = scmp.ne.s32.totalorder %s289, %s290
      %p299 = scmp.eq.s32.totalorder %s27, 0
      %p300 = por %p298, %p299
      %p301 = scmp.ne.s32.totalorder %s289, %s290
      %p302 = scmp.eq.s32.totalorder %s28, 1
      %p303 = por %p301, %p302
      %p305 = scmp.ne.s32.totalorder %s290, %s304
      %p306 = scmp.eq.s32.totalorder %s28, 0
      %p307 = por %p305, %p306
      %s308 = ssub.s32 %s22, %s29
      %p309 = scmp.eq.s32.totalorder %s308, 0
      %s311 = sadd.s32 %s310, 1
      %s312 = scalar_select %p309, %s310, %s311
      %p315 = pneg %p309
      %p316 = scmp.eq.s32.totalorder %s22, 1
      %p317 = por %p315, %p316
      %p318 = scmp.ne.s32.totalorder %s310, %s313
      %p319 = scmp.eq.s32.totalorder %s22, 0
      %p320 = por %p318, %p319
      %p321 = scmp.ne.s32.totalorder %s310, %s313
      %p322 = scmp.eq.s32.totalorder %s27, 1
      %p323 = por %p321, %p322
      %p324 = scmp.ne.s32.totalorder %s313, %s314
      %p325 = scmp.eq.s32.totalorder %s27, 0
      %p326 = por %p324, %p325
      %p327 = scmp.ne.s32.totalorder %s313, %s314
      %p328 = scmp.eq.s32.totalorder %s28, 1
      %p329 = por %p327, %p328
      %p331 = scmp.ne.s32.totalorder %s314, %s330
      %p332 = scmp.eq.s32.totalorder %s28, 0
      %p333 = por %p331, %p332
      %p334 = scmp.le.s32.totalorder 1, %s22
      %p335 = scmp.lt.s32.totalorder %s22, 3
      %p336 = pnand %p334, %p335
      %p337 = pneg %p336
      // Predicated region
      $region9: #{tpu_custom_call.1} parent=5 // pred_check
        _
      $region10: #{tpu_custom_call.1} parent=5 // pred_check_branch
        %339 = sbr.rel (%p336) target = $region12
      $region11: #{tpu_custom_call.1} parent=5 // pred_region
        %s340 = ssub.s32 %s22, 1
        // Predicated region
        $region13: #{tpu_custom_call.1} parent=11 // pred_check
          %p341 = pneg %p43
        $region14: #{tpu_custom_call.1} parent=11 // pred_check_branch
          %343 = sbr.rel (%p341) target = $region16
        $region15: #{tpu_custom_call.1} parent=11 // pred_region
          _
        $region16: #{tpu_custom_call.1} parent=11 // pred_fallthru
          _
        // Predicated region
        $region17: #{tpu_custom_call.1} parent=11 // pred_check
          %p344 = pneg %p90
        $region18: #{tpu_custom_call.1} parent=11 // pred_check_branch
          %346 = sbr.rel (%p344) target = $region20
        $region19: #{tpu_custom_call.1} parent=11 // pred_region
          _
        $region20: #{tpu_custom_call.1} parent=11 // pred_fallthru
          _
        // Predicated region
        $region21: #{tpu_custom_call.1} parent=11 // pred_check
          %p347 = pneg %p111
        $region22: #{tpu_custom_call.1} parent=11 // pred_check_branch
          %349 = sbr.rel (%p347) target = $region24
        $region23: #{tpu_custom_call.1} parent=11 // pred_region
          _
        $region24: #{tpu_custom_call.1} parent=11 // pred_fallthru
          _
        // Predicated region
        $region25: #{tpu_custom_call.1} parent=11 // pred_check
          %p350 = pneg %p132
        $region26: #{tpu_custom_call.1} parent=11 // pred_check_branch
          %352 = sbr.rel (%p350) target = $region28
        $region27: #{tpu_custom_call.1} parent=11 // pred_region
          _
        $region28: #{tpu_custom_call.1} parent=11 // pred_fallthru
          _
        // Predicated region
        $region29: #{tpu_custom_call.1} parent=11 // pred_check
          %p353 = pneg %p153
        $region30: #{tpu_custom_call.1} parent=11 // pred_check_branch
          %355 = sbr.rel (%p353) target = $region32
        $region31: #{tpu_custom_call.1} parent=11 // pred_region
          _
        $region32: #{tpu_custom_call.1} parent=11 // pred_fallthru
          _
        // Predicated region
        $region33: #{tpu_custom_call.1} parent=11 // pred_check
          %p356 = pneg %p174
        $region34: #{tpu_custom_call.1} parent=11 // pred_check_branch
          %358 = sbr.rel (%p356) target = $region36
        $region35: #{tpu_custom_call.1} parent=11 // pred_region
          _
        $region36: #{tpu_custom_call.1} parent=11 // pred_fallthru
          _
        // Predicated region
        $region37: #{tpu_custom_call.1} parent=11 // pred_check
          %p359 = pneg %p195
        $region38: #{tpu_custom_call.1} parent=11 // pred_check_branch
          %361 = sbr.rel (%p359) target = $region40
        $region39: #{tpu_custom_call.1} parent=11 // pred_region
          _
        $region40: #{tpu_custom_call.1} parent=11 // pred_fallthru
          _
        // Predicated region
        $region41: #{tpu_custom_call.1} parent=11 // pred_check
          %p362 = pneg %p216
        $region42: #{tpu_custom_call.1} parent=11 // pred_check_branch
          %364 = sbr.rel (%p362) target = $region44
        $region43: #{tpu_custom_call.1} parent=11 // pred_region
          _
        $region44: #{tpu_custom_call.1} parent=11 // pred_fallthru
          _
        // Predicated region
        $region45: #{tpu_custom_call.1} parent=11 // pred_check
          %p365 = pneg %p237
        $region46: #{tpu_custom_call.1} parent=11 // pred_check_branch
          %367 = sbr.rel (%p365) target = $region48
        $region47: #{tpu_custom_call.1} parent=11 // pred_region
          _
        $region48: #{tpu_custom_call.1} parent=11 // pred_fallthru
          _
        // Predicated region
        $region49: #{tpu_custom_call.1} parent=11 // pred_check
          %p368 = pneg %p258
        $region50: #{tpu_custom_call.1} parent=11 // pred_check_branch
          %370 = sbr.rel (%p368) target = $region52
        $region51: #{tpu_custom_call.1} parent=11 // pred_region
          _
        $region52: #{tpu_custom_call.1} parent=11 // pred_fallthru
          _
        // Predicated region
        $region53: #{tpu_custom_call.1} parent=11 // pred_check
          %p371 = pneg %p279
        $region54: #{tpu_custom_call.1} parent=11 // pred_check_branch
          %373 = sbr.rel (%p371) target = $region56
        $region55: #{tpu_custom_call.1} parent=11 // pred_region
          _
        $region56: #{tpu_custom_call.1} parent=11 // pred_fallthru
          _
        // Predicated region
        $region57: #{tpu_custom_call.1} parent=11 // pred_check
          %p374 = pneg %p300
        $region58: #{tpu_custom_call.1} parent=11 // pred_check_branch
          %376 = sbr.rel (%p374) target = $region60
        $region59: #{tpu_custom_call.1} parent=11 // pred_region
          _
        $region60: #{tpu_custom_call.1} parent=11 // pred_fallthru
          _
      $region12: #{tpu_custom_call.1} parent=5 // pred_fallthru
        _
      %p377 = scmp.lt.s32.totalorder %s22, 2
      // Predicated region
      $region61: #{tpu_custom_call.1} parent=5 // pred_check
        %p378 = pneg %p377
      $region62: #{tpu_custom_call.1} parent=5 // pred_check_branch
        %380 = sbr.rel (%p378) target = $region64
      $region63: #{tpu_custom_call.1} parent=5 // pred_region
        // Predicated region
        $region65: #{tpu_custom_call.1} parent=63 // pred_check
          %p381 = pneg %p63
        $region66: #{tpu_custom_call.1} parent=63 // pred_check_branch
          %383 = sbr.rel (%p381) target = $region68
        $region67: #{tpu_custom_call.1} parent=63 // pred_region
          %p384 = scmp.lt.s32.totalorder %s22, 1
          %s385 = scalar_select %p384, %s22, 1
          %s386 = smul.addr %s385, 8
          %s387 = scalar_lea.vmem %s1, %s386
        $region68: #{tpu_custom_call.1} parent=63 // pred_fallthru
          _
      $region64: #{tpu_custom_call.1} parent=5 // pred_fallthru
        _
      %p388 = scmp.le.s32.totalorder 1, %s22
      %p389 = scmp.lt.s32.totalorder %s22, 3
      %p390 = pnand %p388, %p389
      %p391 = pneg %p390
      // Predicated region
      $region69: #{tpu_custom_call.1} parent=5 // pred_check
        _
      $region70: #{tpu_custom_call.1} parent=5 // pred_check_branch
        %393 = sbr.rel (%p390) target = $region72
      $region71: #{tpu_custom_call.1} parent=5 // pred_region
        %s394 = ssub.s32 %s22, 1
        %p395 = pneg %p43
        %p396 = pneg %p40
        %p397 = scmp.lt.s32.totalorder %s27, 1
        %s398 = scalar_select %p397, %s27, 1
        %s399 = smul.addr %s398, 8
        %s400 = scalar_lea.vmem %s1, %s399
        %p401 = pneg %p69
        %p402 = pneg %p66
        %p403 = pneg %p90
        %p404 = pneg %p87
        %p405 = pneg %p111
        %p406 = pneg %p108
        %p407 = pneg %p132
        %p408 = pneg %p129
        %p409 = pneg %p153
        %p410 = pneg %p150
        %p411 = pneg %p174
        %p412 = pneg %p171
        %p413 = pneg %p195
        %p414 = pneg %p192
        %p415 = pneg %p216
        %p416 = pneg %p213
        %p417 = pneg %p237
        %p418 = pneg %p234
        %p419 = pneg %p258
        %p420 = pneg %p255
        %p421 = pneg %p279
        %p422 = pneg %p276
        %p423 = pneg %p300
        %p424 = pneg %p297
        %p425 = pneg %p326
        %p426 = pneg %p323
        %s427 = sand.u32 %s313, 1
        %s428 = scalar_lea.sflag [#allocation5], %s427
        %s429 = sand.u32 %s313, 1
        %s430 = smul.addr %s429, 8
        %s431 = scalar_lea.vmem [#allocation4], %s430
        %p432 = scmp.lt.s32.totalorder %s27, 1
        %s433 = scalar_select %p432, %s27, 1
        %s434 = smul.addr %s433, 8
        %s435 = scalar_lea.vmem %s1, %s434
        %v437 = vld [vmem:[%s435] sm:$0xff]
        %v438 = vld [vmem:[%s2] sm:$0x1]
        %v439 = vld [vmem:[%s3] sm:$0x1]
        %vm440 = vcmask 261120
        %v441 = vsel %vm440, %v437, 0.0
        %442 = vadd.xlane.f32.xlu0 %v441
        %v443 = vpop.xlane.xlu0 %442
        %v444 = vrcp.pop 32.0
        %v445 = vmul.f32 %v443, %v444
        %v446 = vsub.f32 %v437, %v445
        %v447 = vmul.f32 %v446, %v446
        %v448 = vsel %vm440, %v447, 0.0
        %449 = vadd.xlane.f32.xlu0 %v448
        %v450 = vpop.xlane.xlu0 %449
        %v451 = vmul.f32 %v450, %v444
        %v452 = vadd.f32 %v451, 1e-05
        %v453 = vrsqrt.pop %v452
        %v454 = vmul.f32 %v446, %v453
        %v456 = vlaneseq
        %v457 = vshrl.u32 %v456, 7
        %v458 = vsub.s32 0, %v457
        %v459 = vrot.slane %v438, %v458
        %v461 = vmul.f32 %v454, %v459
        %v463 = vlaneseq
        %v464 = vshrl.u32 %v463, 7
        %v465 = vsub.s32 0, %v464
        %v466 = vrot.slane %v439, %v465
        %v468 = vadd.f32 %v461, %v466
        %v469 = vpack.c.bf16 %v468, %v468
        %v470 = vld [vmem:[%s4] sm:$0xf]
        %v471 = vld [vmem:[%s4 + $0x4] sm:$0xf]
        %v472 = vld [vmem:[%s4 + $0x8] sm:$0xf]
        %v473 = vld [vmem:[%s4 + $0xc] sm:$0xf]
        %v478 = vunpack.c.l.b16 %v470
        %v479 = vunpack.c.l.b16 %v471
        %v480 = vunpack.c.l.b16 %v472
        %v481 = vunpack.c.l.b16 %v473
        %v482 = vpack.c.b16 %v479, %v478
        %v483 = vpack.c.b16 %v481, %v480
        %v487 = vsel %vm440, %v469, 0
        %489 = vmatprep.subr.bf16.mxu0 0
        %490 = vmatpush1.bf16.msra.mxu0 0
        %491 = vmatprep.subr.bf16.mxu0 0
        %492 = vmatpush1.bf16.msra.mxu0 0
        %493 = vmatprep.subr.bf16.mxu0 0
        %494 = vmatpush1.bf16.msra.mxu0 0
        %495 = vmatprep.subr.bf16.mxu0 0
        %496 = vmatpush1.bf16.msra.mxu0 0
        %497 = vmatprep.subr.bf16.mxu0 0
        %498 = vmatpush1.bf16.msra.mxu0 0
        %499 = vmatprep.subr.bf16.mxu0 0
        %500 = vmatpush1.bf16.msra.mxu0 0
        %501 = vmatprep.subr.bf16.mxu0 0
        %502 = vmatpush1.bf16.msra.mxu0 %v483
        %503 = vmatprep.subr.bf16.mxu0 0
        %504 = vmatpush1.bf16.msra.mxu0 %v482
        %505 = vmatprep.subr.bf16.mxu0 0
        %506 = vmatpush2.bf16.msra.mxu0 0
        %507 = vmatprep.subr.bf16.mxu0 0
        %508 = vmatpush2.bf16.msra.mxu0 0
        %509 = vmatprep.subr.bf16.mxu0 0
        %510 = vmatpush2.bf16.msra.mxu0 0
        %511 = vmatprep.subr.bf16.mxu0 0
        %512 = vmatpush2.bf16.msra.mxu0 0
        %513 = vmatprep.subr.bf16.mxu0 0
        %514 = vmatpush2.bf16.msra.mxu0 0
        %515 = vmatprep.subr.bf16.mxu0 0
        %516 = vmatpush2.bf16.msra.mxu0 0
        %517 = vmatprep.subr.bf16.mxu0 0
        %518 = vmatpush2.bf16.msra.mxu0 0
        %519 = vmatprep.subr.bf16.mxu0 0
        %520 = vmatpush2.bf16.msra.mxu0 0
        %521 = vmatprep.mubr.bf16.mxu0 0
        %522 = vmatmul.mubr.bf16.gmra.mxu0 %v487
        %v523 = vpop.f32.mrf.mxu0
        %v524 = vadd.f32 0.0, %v523
        %v525 = vpop.f32.mrf.mxu0
        %v526 = vpop.f32.mrf.mxu0
        %v527 = vpop.f32.mrf.mxu0
        %528 = vdwg.mxu0
        %v529 = vpack.c.bf16 %v524, %v524
        %vm530 = vcmask 781312
        %531 = vst.msk [vmem:[#allocation2] sm:$0xf] %vm530, %v529
        %v532 = vld [vmem:[#allocation2] sm:$0xf]
        %v534 = vunpack.c.l.b16 %v532
        %v535 = vpack.c.b16 %v534, %v534
        %536 = vrot.lane.b32.xlu0 %v535, 96
        %v537 = vpop.permute.xlu0 %536
        %vm538 = vcmask 64512
        %v540 = vsel %vm538, %v532, 0
        %v543 = vsel %vm538, %v537, 0
        %545 = vmatprep.subr.bf16.mxu0 0
        %546 = vmatpush1.bf16.xpose.msra.mxu0 0
        %547 = vmatprep.subr.bf16.mxu0 0
        %548 = vmatpush1.bf16.xpose.msra.mxu0 0
        %549 = vmatprep.subr.bf16.mxu0 0
        %550 = vmatpush1.bf16.xpose.msra.mxu0 0
        %551 = vmatprep.subr.bf16.mxu0 0
        %552 = vmatpush1.bf16.xpose.msra.mxu0 0
        %553 = vmatprep.subr.bf16.mxu0 0
        %554 = vmatpush1.bf16.xpose.msra.mxu0 0
        %555 = vmatprep.subr.bf16.mxu0 0
        %556 = vmatpush1.bf16.xpose.msra.mxu0 0
        %557 = vmatprep.subr.bf16.mxu0 0
        %558 = vmatpush1.bf16.xpose.msra.mxu0 0
        %559 = vmatprep.subr.bf16.mxu0 0
        %560 = vmatpush1.bf16.xpose.msra.mxu0 %v543
        %561 = vmatprep.subr.bf16.mxu0 0
        %562 = vmatpush2.bf16.xpose.msra.mxu0 0
        %563 = vmatprep.subr.bf16.mxu0 0
        %564 = vmatpush2.bf16.xpose.msra.mxu0 0
        %565 = vmatprep.subr.bf16.mxu0 0
        %566 = vmatpush2.bf16.xpose.msra.mxu0 0
        %567 = vmatprep.subr.bf16.mxu0 0
        %568 = vmatpush2.bf16.xpose.msra.mxu0 0
        %569 = vmatprep.subr.bf16.mxu0 0
        %570 = vmatpush2.bf16.xpose.msra.mxu0 0
        %571 = vmatprep.subr.bf16.mxu0 0
        %572 = vmatpush2.bf16.xpose.msra.mxu0 0
        %573 = vmatprep.subr.bf16.mxu0 0
        %574 = vmatpush2.bf16.xpose.msra.mxu0 0
        %575 = vmatprep.subr.bf16.mxu0 0
        %576 = vmatpush2.bf16.xpose.msra.mxu0 0
        %577 = vmatprep.mubr.bf16.mxu0 0
        %578 = vmatmul.mubr.bf16.gmra.mxu0 %v540
        %v579 = vpop.f32.mrf.mxu0
        %v580 = vadd.f32 0.0, %v579
        %v581 = vpop.f32.mrf.mxu0
        %v582 = vpop.f32.mrf.mxu0
        %v583 = vpop.f32.mrf.mxu0
        %584 = vdwg.mxu0
        %v585 = vsel %vm538, %v580, -inf
        %586 = vmax.xlane.f32.xlu0 %v585
        %v587 = vpop.xlane.xlu0 %586
        %v588 = vsub.f32 %v580, %v587
        %v589 = vmul.f32 %v588, 1.442695
        %v590 = vpow.pop %v589
        %v591 = vsel %vm538, %v590, 0.0
        %592 = vadd.xlane.f32.xlu0 %v591
        %v593 = vpop.xlane.xlu0 %592
        %v594 = vrcp.pop %v593
        %v595 = vmul.f32 %v590, %v594
        %v596 = vpack.c.bf16 %v595, %v595
        %597 = vrot.lane.b32.xlu0 %v535, 64
        %v598 = vpop.permute.xlu0 %597
        %v600 = vsel %vm538, %v596, 0
        %vm602 = vcmask 1043456
        %v604 = vsel %vm602, %v598, 0
        %606 = vmatprep.subr.bf16.mxu0 0
        %607 = vmatpush1.bf16.msra.mxu0 0
        %608 = vmatprep.subr.bf16.mxu0 0
        %609 = vmatpush1.bf16.msra.mxu0 0
        %610 = vmatprep.subr.bf16.mxu0 0
        %611 = vmatpush1.bf16.msra.mxu0 0
        %612 = vmatprep.subr.bf16.mxu0 0
        %613 = vmatpush1.bf16.msra.mxu0 0
        %614 = vmatprep.subr.bf16.mxu0 0
        %615 = vmatpush1.bf16.msra.mxu0 0
        %616 = vmatprep.subr.bf16.mxu0 0
        %617 = vmatpush1.bf16.msra.mxu0 0
        %618 = vmatprep.subr.bf16.mxu0 0
        %619 = vmatpush1.bf16.msra.mxu0 0
        %620 = vmatprep.subr.bf16.mxu0 0
        %621 = vmatpush1.bf16.msra.mxu0 %v604
        %622 = vmatprep.subr.bf16.mxu0 0
        %623 = vmatpush2.bf16.msra.mxu0 0
        %624 = vmatprep.subr.bf16.mxu0 0
        %625 = vmatpush2.bf16.msra.mxu0 0
        %626 = vmatprep.subr.bf16.mxu0 0
        %627 = vmatpush2.bf16.msra.mxu0 0
        %628 = vmatprep.subr.bf16.mxu0 0
        %629 = vmatpush2.bf16.msra.mxu0 0
        %630 = vmatprep.subr.bf16.mxu0 0
        %631 = vmatpush2.bf16.msra.mxu0 0
        %632 = vmatprep.subr.bf16.mxu0 0
        %633 = vmatpush2.bf16.msra.mxu0 0
        %634 = vmatprep.subr.bf16.mxu0 0
        %635 = vmatpush2.bf16.msra.mxu0 0
        %636 = vmatprep.subr.bf16.mxu0 0
        %637 = vmatpush2.bf16.msra.mxu0 0
        %638 = vmatprep.mubr.bf16.mxu0 0
        %639 = vmatmul.mubr.bf16.gmra.mxu0 %v600
        %v640 = vpop.f32.mrf.mxu0
        %v641 = vadd.f32 0.0, %v640
        %v642 = vpop.f32.mrf.mxu0
        %v643 = vpop.f32.mrf.mxu0
        %v644 = vpop.f32.mrf.mxu0
        %645 = vdwg.mxu0
        %646 = vst.msk [vmem:[#allocation3] sm:$0xff] %vm538, %v641
        %v647 = vld [vmem:[#allocation2] sm:$0xf]
        %v649 = vunpack.c.l.b16 %v647
        %v650 = vpack.c.b16 %v649, %v649
        %651 = vrot.lane.b32.xlu0 %v650, 120
        %v652 = vpop.permute.xlu0 %651
        %653 = vrot.lane.b32.xlu0 %v650, 88
        %v654 = vpop.permute.xlu0 %653
        %v656 = vsel %vm538, %v652, 0
        %v659 = vsel %vm538, %v654, 0
        %661 = vmatprep.subr.bf16.mxu0 0
        %662 = vmatpush1.bf16.xpose.msra.mxu0 0
        %663 = vmatprep.subr.bf16.mxu0 0
        %664 = vmatpush1.bf16.xpose.msra.mxu0 0
        %665 = vmatprep.subr.bf16.mxu0 0
        %666 = vmatpush1.bf16.xpose.msra.mxu0 0
        %667 = vmatprep.subr.bf16.mxu0 0
        %668 = vmatpush1.bf16.xpose.msra.mxu0 0
        %669 = vmatprep.subr.bf16.mxu0 0
        %670 = vmatpush1.bf16.xpose.msra.mxu0 0
        %671 = vmatprep.subr.bf16.mxu0 0
        %672 = vmatpush1.bf16.xpose.msra.mxu0 0
        %673 = vmatprep.subr.bf16.mxu0 0
        %674 = vmatpush1.bf16.xpose.msra.mxu0 0
        %675 = vmatprep.subr.bf16.mxu0 0
        %676 = vmatpush1.bf16.xpose.msra.mxu0 %v659
        %677 = vmatprep.subr.bf16.mxu0 0
        %678 = vmatpush2.bf16.xpose.msra.mxu0 0
        %679 = vmatprep.subr.bf16.mxu0 0
        %680 = vmatpush2.bf16.xpose.msra.mxu0 0
        %681 = vmatprep.subr.bf16.mxu0 0
        %682 = vmatpush2.bf16.xpose.msra.mxu0 0
        %683 = vmatprep.subr.bf16.mxu0 0
        %684 = vmatpush2.bf16.xpose.msra.mxu0 0
        %685 = vmatprep.subr.bf16.mxu0 0
        %686 = vmatpush2.bf16.xpose.msra.mxu0 0
        %687 = vmatprep.subr.bf16.mxu0 0
        %688 = vmatpush2.bf16.xpose.msra.mxu0 0
        %689 = vmatprep.subr.bf16.mxu0 0
        %690 = vmatpush2.bf16.xpose.msra.mxu0 0
        %691 = vmatprep.subr.bf16.mxu0 0
        %692 = vmatpush2.bf16.xpose.msra.mxu0 0
        %693 = vmatprep.mubr.bf16.mxu0 0
        %694 = vmatmul.mubr.bf16.gmra.mxu0 %v656
        %v695 = vpop.f32.mrf.mxu0
        %v696 = vadd.f32 0.0, %v695
        %v697 = vpop.f32.mrf.mxu0
        %v698 = vpop.f32.mrf.mxu0
        %v699 = vpop.f32.mrf.mxu0
        %700 = vdwg.mxu0
        %v701 = vsel %vm538, %v696, -inf
        %702 = vmax.xlane.f32.xlu0 %v701
        %v703 = vpop.xlane.xlu0 %702
        %v704 = vsub.f32 %v696, %v703
        %v705 = vmul.f32 %v704, 1.442695
        %v706 = vpow.pop %v705
        %v707 = vsel %vm538, %v706, 0.0
        %708 = vadd.xlane.f32.xlu0 %v707
        %v709 = vpop.xlane.xlu0 %708
        %v710 = vrcp.pop %v709
        %v711 = vmul.f32 %v706, %v710
        %v712 = vpack.c.bf16 %v711, %v711
        %713 = vrot.lane.b32.xlu0 %v650, 56
        %v714 = vpop.permute.xlu0 %713
        %v716 = vsel %vm538, %v712, 0
        %v719 = vsel %vm602, %v714, 0
        %721 = vmatprep.subr.bf16.mxu0 0
        %722 = vmatpush1.bf16.msra.mxu0 0
        %723 = vmatprep.subr.bf16.mxu0 0
        %724 = vmatpush1.bf16.msra.mxu0 0
        %725 = vmatprep.subr.bf16.mxu0 0
        %726 = vmatpush1.bf16.msra.mxu0 0
        %727 = vmatprep.subr.bf16.mxu0 0
        %728 = vmatpush1.bf16.msra.mxu0 0
        %729 = vmatprep.subr.bf16.mxu0 0
        %730 = vmatpush1.bf16.msra.mxu0 0
        %731 = vmatprep.subr.bf16.mxu0 0
        %732 = vmatpush1.bf16.msra.mxu0 0
        %733 = vmatprep.subr.bf16.mxu0 0
        %734 = vmatpush1.bf16.msra.mxu0 0
        %735 = vmatprep.subr.bf16.mxu0 0
        %736 = vmatpush1.bf16.msra.mxu0 %v719
        %737 = vmatprep.subr.bf16.mxu0 0
        %738 = vmatpush2.bf16.msra.mxu0 0
        %739 = vmatprep.subr.bf16.mxu0 0
        %740 = vmatpush2.bf16.msra.mxu0 0
        %741 = vmatprep.subr.bf16.mxu0 0
        %742 = vmatpush2.bf16.msra.mxu0 0
        %743 = vmatprep.subr.bf16.mxu0 0
        %744 = vmatpush2.bf16.msra.mxu0 0
        %745 = vmatprep.subr.bf16.mxu0 0
        %746 = vmatpush2.bf16.msra.mxu0 0
        %747 = vmatprep.subr.bf16.mxu0 0
        %748 = vmatpush2.bf16.msra.mxu0 0
        %749 = vmatprep.subr.bf16.mxu0 0
        %750 = vmatpush2.bf16.msra.mxu0 0
        %751 = vmatprep.subr.bf16.mxu0 0
        %752 = vmatpush2.bf16.msra.mxu0 0
        %753 = vmatprep.mubr.bf16.mxu0 0
        %754 = vmatmul.mubr.bf16.gmra.mxu0 %v716
        %v755 = vpop.f32.mrf.mxu0
        %v756 = vadd.f32 0.0, %v755
        %v757 = vpop.f32.mrf.mxu0
        %v758 = vpop.f32.mrf.mxu0
        %v759 = vpop.f32.mrf.mxu0
        %760 = vdwg.mxu0
        %762 = vrot.lane.b32.xlu0 %v756, 8
        %v763 = vpop.permute.xlu0 %762
        %vm765 = vcmask 130112
        %766 = vst.msk [vmem:[#allocation3] sm:$0xff] %vm765, %v763
        %v767 = vld [vmem:[#allocation2] sm:$0xf]
        %v769 = vunpack.c.l.b16 %v767
        %v770 = vpack.c.b16 %v769, %v769
        %771 = vrot.lane.b32.xlu0 %v770, 112
        %v772 = vpop.permute.xlu0 %771
        %773 = vrot.lane.b32.xlu0 %v770, 80
        %v774 = vpop.permute.xlu0 %773
        %v776 = vsel %vm538, %v772, 0
        %v779 = vsel %vm538, %v774, 0
        %781 = vmatprep.subr.bf16.mxu0 0
        %782 = vmatpush1.bf16.xpose.msra.mxu0 0
        %783 = vmatprep.subr.bf16.mxu0 0
        %784 = vmatpush1.bf16.xpose.msra.mxu0 0
        %785 = vmatprep.subr.bf16.mxu0 0
        %786 = vmatpush1.bf16.xpose.msra.mxu0 0
        %787 = vmatprep.subr.bf16.mxu0 0
        %788 = vmatpush1.bf16.xpose.msra.mxu0 0
        %789 = vmatprep.subr.bf16.mxu0 0
        %790 = vmatpush1.bf16.xpose.msra.mxu0 0
        %791 = vmatprep.subr.bf16.mxu0 0
        %792 = vmatpush1.bf16.xpose.msra.mxu0 0
        %793 = vmatprep.subr.bf16.mxu0 0
        %794 = vmatpush1.bf16.xpose.msra.mxu0 0
        %795 = vmatprep.subr.bf16.mxu0 0
        %796 = vmatpush1.bf16.xpose.msra.mxu0 %v779
        %797 = vmatprep.subr.bf16.mxu0 0
        %798 = vmatpush2.bf16.xpose.msra.mxu0 0
        %799 = vmatprep.subr.bf16.mxu0 0
        %800 = vmatpush2.bf16.xpose.msra.mxu0 0
        %801 = vmatprep.subr.bf16.mxu0 0
        %802 = vmatpush2.bf16.xpose.msra.mxu0 0
        %803 = vmatprep.subr.bf16.mxu0 0
        %804 = vmatpush2.bf16.xpose.msra.mxu0 0
        %805 = vmatprep.subr.bf16.mxu0 0
        %806 = vmatpush2.bf16.xpose.msra.mxu0 0
        %807 = vmatprep.subr.bf16.mxu0 0
        %808 = vmatpush2.bf16.xpose.msra.mxu0 0
        %809 = vmatprep.subr.bf16.mxu0 0
        %810 = vmatpush2.bf16.xpose.msra.mxu0 0
        %811 = vmatprep.subr.bf16.mxu0 0
        %812 = vmatpush2.bf16.xpose.msra.mxu0 0
        %813 = vmatprep.mubr.bf16.mxu0 0
        %814 = vmatmul.mubr.bf16.gmra.mxu0 %v776
        %v815 = vpop.f32.mrf.mxu0
        %v816 = vadd.f32 0.0, %v815
        %v817 = vpop.f32.mrf.mxu0
        %v818 = vpop.f32.mrf.mxu0
        %v819 = vpop.f32.mrf.mxu0
        %820 = vdwg.mxu0
        %v821 = vsel %vm538, %v816, -inf
        %822 = vmax.xlane.f32.xlu0 %v821
        %v823 = vpop.xlane.xlu0 %822
        %v824 = vsub.f32 %v816, %v823
        %v825 = vmul.f32 %v824, 1.442695
        %v826 = vpow.pop %v825
        %v827 = vsel %vm538, %v826, 0.0
        %828 = vadd.xlane.f32.xlu0 %v827
        %v829 = vpop.xlane.xlu0 %828
        %v830 = vrcp.pop %v829
        %v831 = vmul.f32 %v826, %v830
        %v832 = vpack.c.bf16 %v831, %v831
        %833 = vrot.lane.b32.xlu0 %v770, 48
        %v834 = vpop.permute.xlu0 %833
        %v836 = vsel %vm538, %v832, 0
        %v839 = vsel %vm602, %v834, 0
        %841 = vmatprep.subr.bf16.mxu0 0
        %842 = vmatpush1.bf16.msra.mxu0 0
        %843 = vmatprep.subr.bf16.mxu0 0
        %844 = vmatpush1.bf16.msra.mxu0 0
        %845 = vmatprep.subr.bf16.mxu0 0
        %846 = vmatpush1.bf16.msra.mxu0 0
        %847 = vmatprep.subr.bf16.mxu0 0
        %848 = vmatpush1.bf16.msra.mxu0 0
        %849 = vmatprep.subr.bf16.mxu0 0
        %850 = vmatpush1.bf16.msra.mxu0 0
        %851 = vmatprep.subr.bf16.mxu0 0
        %852 = vmatpush1.bf16.msra.mxu0 0
        %853 = vmatprep.subr.bf16.mxu0 0
        %854 = vmatpush1.bf16.msra.mxu0 0
        %855 = vmatprep.subr.bf16.mxu0 0
        %856 = vmatpush1.bf16.msra.mxu0 %v839
        %857 = vmatprep.subr.bf16.mxu0 0
        %858 = vmatpush2.bf16.msra.mxu0 0
        %859 = vmatprep.subr.bf16.mxu0 0
        %860 = vmatpush2.bf16.msra.mxu0 0
        %861 = vmatprep.subr.bf16.mxu0 0
        %862 = vmatpush2.bf16.msra.mxu0 0
        %863 = vmatprep.subr.bf16.mxu0 0
        %864 = vmatpush2.bf16.msra.mxu0 0
        %865 = vmatprep.subr.bf16.mxu0 0
        %866 = vmatpush2.bf16.msra.mxu0 0
        %867 = vmatprep.subr.bf16.mxu0 0
        %868 = vmatpush2.bf16.msra.mxu0 0
        %869 = vmatprep.subr.bf16.mxu0 0
        %870 = vmatpush2.bf16.msra.mxu0 0
        %871 = vmatprep.subr.bf16.mxu0 0
        %872 = vmatpush2.bf16.msra.mxu0 0
        %873 = vmatprep.mubr.bf16.mxu0 0
        %874 = vmatmul.mubr.bf16.gmra.mxu0 %v836
        %v875 = vpop.f32.mrf.mxu0
        %v876 = vadd.f32 0.0, %v875
        %v877 = vpop.f32.mrf.mxu0
        %v878 = vpop.f32.mrf.mxu0
        %v879 = vpop.f32.mrf.mxu0
        %880 = vdwg.mxu0
        %882 = vrot.lane.b32.xlu0 %v876, 16
        %v883 = vpop.permute.xlu0 %882
        %vm885 = vcmask 195712
        %886 = vst.msk [vmem:[#allocation3] sm:$0xff] %vm885, %v883
        %v887 = vld [vmem:[#allocation2] sm:$0xf]
        %v889 = vunpack.c.l.b16 %v887
        %v890 = vpack.c.b16 %v889, %v889
        %891 = vrot.lane.b32.xlu0 %v890, 104
        %v892 = vpop.permute.xlu0 %891
        %893 = vrot.lane.b32.xlu0 %v890, 72
        %v894 = vpop.permute.xlu0 %893
        %v896 = vsel %vm538, %v892, 0
        %v899 = vsel %vm538, %v894, 0
        %901 = vmatprep.subr.bf16.mxu0 0
        %902 = vmatpush1.bf16.xpose.msra.mxu0 0
        %903 = vmatprep.subr.bf16.mxu0 0
        %904 = vmatpush1.bf16.xpose.msra.mxu0 0
        %905 = vmatprep.subr.bf16.mxu0 0
        %906 = vmatpush1.bf16.xpose.msra.mxu0 0
        %907 = vmatprep.subr.bf16.mxu0 0
        %908 = vmatpush1.bf16.xpose.msra.mxu0 0
        %909 = vmatprep.subr.bf16.mxu0 0
        %910 = vmatpush1.bf16.xpose.msra.mxu0 0
        %911 = vmatprep.subr.bf16.mxu0 0
        %912 = vmatpush1.bf16.xpose.msra.mxu0 0
        %913 = vmatprep.subr.bf16.mxu0 0
        %914 = vmatpush1.bf16.xpose.msra.mxu0 0
        %915 = vmatprep.subr.bf16.mxu0 0
        %916 = vmatpush1.bf16.xpose.msra.mxu0 %v899
        %917 = vmatprep.subr.bf16.mxu0 0
        %918 = vmatpush2.bf16.xpose.msra.mxu0 0
        %919 = vmatprep.subr.bf16.mxu0 0
        %920 = vmatpush2.bf16.xpose.msra.mxu0 0
        %921 = vmatprep.subr.bf16.mxu0 0
        %922 = vmatpush2.bf16.xpose.msra.mxu0 0
        %923 = vmatprep.subr.bf16.mxu0 0
        %924 = vmatpush2.bf16.xpose.msra.mxu0 0
        %925 = vmatprep.subr.bf16.mxu0 0
        %926 = vmatpush2.bf16.xpose.msra.mxu0 0
        %927 = vmatprep.subr.bf16.mxu0 0
        %928 = vmatpush2.bf16.xpose.msra.mxu0 0
        %929 = vmatprep.subr.bf16.mxu0 0
        %930 = vmatpush2.bf16.xpose.msra.mxu0 0
        %931 = vmatprep.subr.bf16.mxu0 0
        %932 = vmatpush2.bf16.xpose.msra.mxu0 0
        %933 = vmatprep.mubr.bf16.mxu0 0
        %934 = vmatmul.mubr.bf16.gmra.mxu0 %v896
        %v935 = vpop.f32.mrf.mxu0
        %v936 = vadd.f32 0.0, %v935
        %v937 = vpop.f32.mrf.mxu0
        %v938 = vpop.f32.mrf.mxu0
        %v939 = vpop.f32.mrf.mxu0
        %940 = vdwg.mxu0
        %v941 = vsel %vm538, %v936, -inf
        %942 = vmax.xlane.f32.xlu0 %v941
        %v943 = vpop.xlane.xlu0 %942
        %v944 = vsub.f32 %v936, %v943
        %v945 = vmul.f32 %v944, 1.442695
        %v946 = vpow.pop %v945
        %v947 = vsel %vm538, %v946, 0.0
        %948 = vadd.xlane.f32.xlu0 %v947
        %v949 = vpop.xlane.xlu0 %948
        %v950 = vrcp.pop %v949
        %v951 = vmul.f32 %v946, %v950
        %v952 = vpack.c.bf16 %v951, %v951
        %953 = vrot.lane.b32.xlu0 %v890, 40
        %v954 = vpop.permute.xlu0 %953
        %v956 = vsel %vm538, %v952, 0
        %v959 = vsel %vm602, %v954, 0
        %961 = vmatprep.subr.bf16.mxu0 0
        %962 = vmatpush1.bf16.msra.mxu0 0
        %963 = vmatprep.subr.bf16.mxu0 0
        %964 = vmatpush1.bf16.msra.mxu0 0
        %965 = vmatprep.subr.bf16.mxu0 0
        %966 = vmatpush1.bf16.msra.mxu0 0
        %967 = vmatprep.subr.bf16.mxu0 0
        %968 = vmatpush1.bf16.msra.mxu0 0
        %969 = vmatprep.subr.bf16.mxu0 0
        %970 = vmatpush1.bf16.msra.mxu0 0
        %971 = vmatprep.subr.bf16.mxu0 0
        %972 = vmatpush1.bf16.msra.mxu0 0
        %973 = vmatprep.subr.bf16.mxu0 0
        %974 = vmatpush1.bf16.msra.mxu0 0
        %975 = vmatprep.subr.bf16.mxu0 0
        %976 = vmatpush1.bf16.msra.mxu0 %v959
        %977 = vmatprep.subr.bf16.mxu0 0
        %978 = vmatpush2.bf16.msra.mxu0 0
        %979 = vmatprep.subr.bf16.mxu0 0
        %980 = vmatpush2.bf16.msra.mxu0 0
        %981 = vmatprep.subr.bf16.mxu0 0
        %982 = vmatpush2.bf16.msra.mxu0 0
        %983 = vmatprep.subr.bf16.mxu0 0
        %984 = vmatpush2.bf16.msra.mxu0 0
        %985 = vmatprep.subr.bf16.mxu0 0
        %986 = vmatpush2.bf16.msra.mxu0 0
        %987 = vmatprep.subr.bf16.mxu0 0
        %988 = vmatpush2.bf16.msra.mxu0 0
        %989 = vmatprep.subr.bf16.mxu0 0
        %990 = vmatpush2.bf16.msra.mxu0 0
        %991 = vmatprep.subr.bf16.mxu0 0
        %992 = vmatpush2.bf16.msra.mxu0 0
        %993 = vmatprep.mubr.bf16.mxu0 0
        %994 = vmatmul.mubr.bf16.gmra.mxu0 %v956
        %v995 = vpop.f32.mrf.mxu0
        %v996 = vadd.f32 0.0, %v995
        %v997 = vpop.f32.mrf.mxu0
        %v998 = vpop.f32.mrf.mxu0
        %v999 = vpop.f32.mrf.mxu0
        %1000 = vdwg.mxu0
        %1002 = vrot.lane.b32.xlu0 %v996, 24
        %v1003 = vpop.permute.xlu0 %1002
        %vm1005 = vcmask 261312
        %1006 = vst.msk [vmem:[#allocation3] sm:$0xff] %vm1005, %v1003
        %v1007 = vld [vmem:[#allocation3] sm:$0xff]
        %v1008 = vpack.c.bf16 %v1007, %v1007
        %v1009 = vld [vmem:[%s5] sm:$0xf]
        %v1010 = vld [vmem:[%s5 + $0x4] sm:$0xf]
        %v1011 = vld [vmem:[%s5 + $0x8] sm:$0xf]
        %v1012 = vld [vmem:[%s5 + $0xc] sm:$0xf]
        %v1017 = vunpack.c.l.b16 %v1009
        %v1018 = vunpack.c.l.b16 %v1010
        %v1019 = vunpack.c.l.b16 %v1011
        %v1020 = vunpack.c.l.b16 %v1012
        %v1021 = vpack.c.b16 %v1018, %v1017
        %v1022 = vpack.c.b16 %v1020, %v1019
        %v1026 = vsel %vm440, %v1008, 0
        %1028 = vmatprep.subr.bf16.mxu0 0
        %1029 = vmatpush1.bf16.msra.mxu0 0
        %1030 = vmatprep.subr.bf16.mxu0 0
        %1031 = vmatpush1.bf16.msra.mxu0 0
        %1032 = vmatprep.subr.bf16.mxu0 0
        %1033 = vmatpush1.bf16.msra.mxu0 0
        %1034 = vmatprep.subr.bf16.mxu0 0
        %1035 = vmatpush1.bf16.msra.mxu0 0
        %1036 = vmatprep.subr.bf16.mxu0 0
        %1037 = vmatpush1.bf16.msra.mxu0 0
        %1038 = vmatprep.subr.bf16.mxu0 0
        %1039 = vmatpush1.bf16.msra.mxu0 0
        %1040 = vmatprep.subr.bf16.mxu0 0
        %1041 = vmatpush1.bf16.msra.mxu0 %v1022
        %1042 = vmatprep.subr.bf16.mxu0 0
        %1043 = vmatpush1.bf16.msra.mxu0 %v1021
        %1044 = vmatprep.subr.bf16.mxu0 0
        %1045 = vmatpush2.bf16.msra.mxu0 0
        %1046 = vmatprep.subr.bf16.mxu0 0
        %1047 = vmatpush2.bf16.msra.mxu0 0
        %1048 = vmatprep.subr.bf16.mxu0 0
        %1049 = vmatpush2.bf16.msra.mxu0 0
        %1050 = vmatprep.subr.bf16.mxu0 0
        %1051 = vmatpush2.bf16.msra.mxu0 0
        %1052 = vmatprep.subr.bf16.mxu0 0
        %1053 = vmatpush2.bf16.msra.mxu0 0
        %1054 = vmatprep.subr.bf16.mxu0 0
        %1055 = vmatpush2.bf16.msra.mxu0 0
        %1056 = vmatprep.subr.bf16.mxu0 0
        %1057 = vmatpush2.bf16.msra.mxu0 0
        %1058 = vmatprep.subr.bf16.mxu0 0
        %1059 = vmatpush2.bf16.msra.mxu0 0
        %1060 = vmatprep.mubr.bf16.mxu0 0
        %1061 = vmatmul.mubr.bf16.gmra.mxu0 %v1026
        %v1062 = vpop.f32.mrf.mxu0
        %v1063 = vadd.f32 0.0, %v1062
        %v1064 = vpop.f32.mrf.mxu0
        %v1065 = vpop.f32.mrf.mxu0
        %v1066 = vpop.f32.mrf.mxu0
        %1067 = vdwg.mxu0
        %v1068 = vadd.f32 %v437, %v1063
        %v1069 = vld [vmem:[%s6] sm:$0x1]
        %v1071 = vlaneseq
        %v1072 = vshrl.u32 %v1071, 7
        %v1073 = vsub.s32 0, %v1072
        %v1074 = vrot.slane %v1069, %v1073
        %v1076 = vadd.f32 %v1068, %v1074
        %v1077 = vld [vmem:[%s7] sm:$0x1]
        %v1078 = vld [vmem:[%s8] sm:$0x1]
        %v1079 = vsel %vm440, %v1076, 0.0
        %1080 = vadd.xlane.f32.xlu0 %v1079
        %v1081 = vpop.xlane.xlu0 %1080
        %v1082 = vmul.f32 %v1081, %v444
        %v1083 = vsub.f32 %v1076, %v1082
        %v1084 = vmul.f32 %v1083, %v1083
        %v1085 = vsel %vm440, %v1084, 0.0
        %1086 = vadd.xlane.f32.xlu0 %v1085
        %v1087 = vpop.xlane.xlu0 %1086
        %v1088 = vmul.f32 %v1087, %v444
        %v1089 = vadd.f32 %v1088, 1e-05
        %v1090 = vrsqrt.pop %v1089
        %v1091 = vmul.f32 %v1083, %v1090
        %v1093 = vlaneseq
        %v1094 = vshrl.u32 %v1093, 7
        %v1095 = vsub.s32 0, %v1094
        %v1096 = vrot.slane %v1077, %v1095
        %v1098 = vmul.f32 %v1091, %v1096
        %v1100 = vlaneseq
        %v1101 = vshrl.u32 %v1100, 7
        %v1102 = vsub.s32 0, %v1101
        %v1103 = vrot.slane %v1078, %v1102
        %v1105 = vadd.f32 %v1098, %v1103
        %v1106 = vpack.c.bf16 %v1105, %v1105
        %v1107 = vld [vmem:[%s12] sm:$0x1]
        %v1109 = vlaneseq
        %v1110 = vshrl.u32 %v1109, 7
        %v1111 = vsub.s32 0, %v1110
        %v1112 = vrot.slane %v1107, %v1111
        %v1114 = vadd.f32 %v1076, %v1112
        %v1115 = vld [vmem:[%s9] sm:$0xf]
        %v1116 = vld [vmem:[%s9 + $0x4] sm:$0xf]
        %v1117 = vld [vmem:[%s9 + $0x8] sm:$0xf]
        %v1118 = vld [vmem:[%s9 + $0xc] sm:$0xf]
        %v1119 = vld [vmem:[%s10] sm:$0x1]
        %v1121 = vlaneseq
        %v1122 = vshrl.u32 %v1121, 7
        %v1123 = vsub.s32 0, %v1122
        %v1124 = vrot.slane %v1119, %v1123
        %v1130 = vunpack.c.l.b16 %v1115
        %v1131 = vunpack.c.l.b16 %v1116
        %v1132 = vunpack.c.l.b16 %v1117
        %v1133 = vunpack.c.l.b16 %v1118
        %v1134 = vpack.c.b16 %v1131, %v1130
        %v1135 = vpack.c.b16 %v1133, %v1132
        %v1139 = vsel %vm440, %v1106, 0
        %1141 = vmatprep.subr.bf16.mxu0 0
        %1142 = vmatpush1.bf16.msra.mxu0 0
        %1143 = vmatprep.subr.bf16.mxu0 0
        %1144 = vmatpush1.bf16.msra.mxu0 0
        %1145 = vmatprep.subr.bf16.mxu0 0
        %1146 = vmatpush1.bf16.msra.mxu0 0
        %1147 = vmatprep.subr.bf16.mxu0 0
        %1148 = vmatpush1.bf16.msra.mxu0 0
        %1149 = vmatprep.subr.bf16.mxu0 0
        %1150 = vmatpush1.bf16.msra.mxu0 0
        %1151 = vmatprep.subr.bf16.mxu0 0
        %1152 = vmatpush1.bf16.msra.mxu0 0
        %1153 = vmatprep.subr.bf16.mxu0 0
        %1154 = vmatpush1.bf16.msra.mxu0 %v1135
        %1155 = vmatprep.subr.bf16.mxu0 0
        %1156 = vmatpush1.bf16.msra.mxu0 %v1134
        %1157 = vmatprep.subr.bf16.mxu0 0
        %1158 = vmatpush2.bf16.msra.mxu0 0
        %1159 = vmatprep.subr.bf16.mxu0 0
        %1160 = vmatpush2.bf16.msra.mxu0 0
        %1161 = vmatprep.subr.bf16.mxu0 0
        %1162 = vmatpush2.bf16.msra.mxu0 0
        %1163 = vmatprep.subr.bf16.mxu0 0
        %1164 = vmatpush2.bf16.msra.mxu0 0
        %1165 = vmatprep.subr.bf16.mxu0 0
        %1166 = vmatpush2.bf16.msra.mxu0 0
        %1167 = vmatprep.subr.bf16.mxu0 0
        %1168 = vmatpush2.bf16.msra.mxu0 0
        %1169 = vmatprep.subr.bf16.mxu0 0
        %1170 = vmatpush2.bf16.msra.mxu0 0
        %1171 = vmatprep.subr.bf16.mxu0 0
        %1172 = vmatpush2.bf16.msra.mxu0 0
        %1173 = vmatprep.mubr.bf16.mxu0 0
        %1174 = vmatmul.mubr.bf16.gmra.mxu0 %v1139
        %v1175 = vpop.f32.mrf.mxu0
        %v1176 = vadd.f32 %v1124, %v1175
        %v1177 = vpop.f32.mrf.mxu0
        %v1178 = vpop.f32.mrf.mxu0
        %v1179 = vpop.f32.mrf.mxu0
        %1180 = vdwg.mxu0
        %v1181 = vmul.f32 %v1176, 0.5
        %v1182 = vmul.f32 %v1176, 0.70710677
        %v1183 = verf.f32.pop %v1182
        %v1184 = vadd.f32 %v1183, 1.0
        %v1185 = vmul.f32 %v1181, %v1184
        %v1186 = vpack.c.bf16 %v1185, %v1185
        %v1187 = vld [vmem:[%s11] sm:$0xf]
        %v1188 = vld [vmem:[%s11 + $0x4] sm:$0xf]
        %v1189 = vld [vmem:[%s11 + $0x8] sm:$0xf]
        %v1190 = vld [vmem:[%s11 + $0xc] sm:$0xf]
        %v1191 = vld [vmem:[%s11 + $0x10] sm:$0xf]
        %v1192 = vld [vmem:[%s11 + $0x14] sm:$0xf]
        %v1193 = vld [vmem:[%s11 + $0x18] sm:$0xf]
        %v1194 = vld [vmem:[%s11 + $0x1c] sm:$0xf]
        %v1195 = vld [vmem:[%s11 + $0x20] sm:$0xf]
        %v1196 = vld [vmem:[%s11 + $0x24] sm:$0xf]
        %v1197 = vld [vmem:[%s11 + $0x28] sm:$0xf]
        %v1198 = vld [vmem:[%s11 + $0x2c] sm:$0xf]
        %v1199 = vld [vmem:[%s11 + $0x30] sm:$0xf]
        %v1200 = vld [vmem:[%s11 + $0x34] sm:$0xf]
        %v1201 = vld [vmem:[%s11 + $0x38] sm:$0xf]
        %v1202 = vld [vmem:[%s11 + $0x3c] sm:$0xf]
        %v1219 = vunpack.c.l.b16 %v1187
        %v1220 = vunpack.c.l.b16 %v1188
        %v1221 = vunpack.c.l.b16 %v1189
        %v1222 = vunpack.c.l.b16 %v1190
        %v1223 = vunpack.c.l.b16 %v1191
        %v1224 = vunpack.c.l.b16 %v1192
        %v1225 = vunpack.c.l.b16 %v1193
        %v1226 = vunpack.c.l.b16 %v1194
        %v1227 = vunpack.c.l.b16 %v1195
        %v1228 = vunpack.c.l.b16 %v1196
        %v1229 = vunpack.c.l.b16 %v1197
        %v1230 = vunpack.c.l.b16 %v1198
        %v1231 = vunpack.c.l.b16 %v1199
        %v1232 = vunpack.c.l.b16 %v1200
        %v1233 = vunpack.c.l.b16 %v1201
        %v1234 = vunpack.c.l.b16 %v1202
        %v1235 = vpack.c.b16 %v1220, %v1219
        %v1236 = vpack.c.b16 %v1222, %v1221
        %v1237 = vpack.c.b16 %v1224, %v1223
        %v1238 = vpack.c.b16 %v1226, %v1225
        %v1239 = vpack.c.b16 %v1228, %v1227
        %v1240 = vpack.c.b16 %v1230, %v1229
        %v1241 = vpack.c.b16 %v1232, %v1231
        %v1242 = vpack.c.b16 %v1234, %v1233
        %1251 = vmatprep.subr.bf16.mxu0 0
        %1252 = vmatpush1.bf16.msra.mxu0 %v1242
        %1253 = vmatprep.subr.bf16.mxu0 0
        %1254 = vmatpush1.bf16.msra.mxu0 %v1241
        %1255 = vmatprep.subr.bf16.mxu0 0
        %1256 = vmatpush1.bf16.msra.mxu0 %v1240
        %1257 = vmatprep.subr.bf16.mxu0 0
        %1258 = vmatpush1.bf16.msra.mxu0 %v1239
        %1259 = vmatprep.subr.bf16.mxu0 0
        %1260 = vmatpush1.bf16.msra.mxu0 %v1238
        %1261 = vmatprep.subr.bf16.mxu0 0
        %1262 = vmatpush1.bf16.msra.mxu0 %v1237
        %1263 = vmatprep.subr.bf16.mxu0 0
        %1264 = vmatpush1.bf16.msra.mxu0 %v1236
        %1265 = vmatprep.subr.bf16.mxu0 0
        %1266 = vmatpush1.bf16.msra.mxu0 %v1235
        %1267 = vmatprep.subr.bf16.mxu0 0
        %1268 = vmatpush2.bf16.msra.mxu0 0
        %1269 = vmatprep.subr.bf16.mxu0 0
        %1270 = vmatpush2.bf16.msra.mxu0 0
        %1271 = vmatprep.subr.bf16.mxu0 0
        %1272 = vmatpush2.bf16.msra.mxu0 0
        %1273 = vmatprep.subr.bf16.mxu0 0
        %1274 = vmatpush2.bf16.msra.mxu0 0
        %1275 = vmatprep.subr.bf16.mxu0 0
        %1276 = vmatpush2.bf16.msra.mxu0 0
        %1277 = vmatprep.subr.bf16.mxu0 0
        %1278 = vmatpush2.bf16.msra.mxu0 0
        %1279 = vmatprep.subr.bf16.mxu0 0
        %1280 = vmatpush2.bf16.msra.mxu0 0
        %1281 = vmatprep.subr.bf16.mxu0 0
        %1282 = vmatpush2.bf16.msra.mxu0 0
        %1283 = vmatprep.mubr.bf16.mxu0 0
        %1284 = vmatmul.mubr.bf16.gmra.mxu0 %v1186
        %v1285 = vpop.f32.mrf.mxu0
        %v1286 = vadd.f32 0.0, %v1285
        %v1287 = vpop.f32.mrf.mxu0
        %v1288 = vpop.f32.mrf.mxu0
        %v1289 = vpop.f32.mrf.mxu0
        %1290 = vdwg.mxu0
        %v1291 = vadd.f32 %v1114, %v1286
        %1292 = vst.msk [vmem:[%s431] sm:$0xff] %vm440, %v1291
        %s1293 = sand.u32 %s313, 1
        %s1294 = scalar_lea.sflag [#allocation5], %s1293
        %s1295 = sand.u32 %s313, 1
        %s1296 = smul.addr %s1295, 8
        %s1297 = scalar_lea.vmem [#allocation4], %s1296
        // Predicated region
        $region73: #{tpu_custom_call.1} parent=71 // pred_check
          %p1298 = pneg %p323
        $region74: #{tpu_custom_call.1} parent=71 // pred_check_branch
          %1300 = sbr.rel (%p1298) target = $region76
        $region75: #{tpu_custom_call.1} parent=71 // pred_region
          %s1302 = ssub.s32 128, 128
          %1303 = vsyncadd %s1294, %s1302
          %s1304 = smul.addr %s27, 128
          %s1305 = scalar_lea.hbm %s13, %s1304
          %s1307 = sshll.u32 %s1297, 4
          %s1308 = int_to_ptr.vmem [resolvable:$true] %s1307
          %1310 = dma.vmem_to_hbm [thread:$0]  %s1308, 128, %s1305, %s1294
        $region76: #{tpu_custom_call.1} parent=71 // pred_fallthru
          _
      $region72: #{tpu_custom_call.1} parent=5 // pred_fallthru
        _
      %p1311 = scmp.le.s32.totalorder 2, %s22
      // Predicated region
      $region77: #{tpu_custom_call.1} parent=5 // pred_check
        %p1312 = pneg %p1311
      $region78: #{tpu_custom_call.1} parent=5 // pred_check_branch
        %1314 = sbr.rel (%p1312) target = $region80
      $region79: #{tpu_custom_call.1} parent=5 // pred_region
        %s1315 = ssub.s32 %s22, 2
        // Predicated region
        $region81: #{tpu_custom_call.1} parent=79 // pred_check
          %p1316 = pneg %p329
        $region82: #{tpu_custom_call.1} parent=79 // pred_check_branch
          %1318 = sbr.rel (%p1316) target = $region84
        $region83: #{tpu_custom_call.1} parent=79 // pred_region
          %s1319 = sand.u32 %s314, 1
          %s1320 = scalar_lea.sflag [#allocation5], %s1319
          %s1321 = sand.u32 %s314, 1
          %s1322 = smul.addr %s1321, 8
          %s1323 = scalar_lea.vmem [#allocation4], %s1322
          %1324 = dma.done %s1320, 128
        $region84: #{tpu_custom_call.1} parent=79 // pred_fallthru
          _
      $region80: #{tpu_custom_call.1} parent=5 // pred_fallthru
        _
    $region6: #{tpu_custom_call.1} parent=1 // loop_footer
      %s26 = sadd.s32 1, %s22
    $region7: #{tpu_custom_call.1} parent=1 // loop_footer_branch
      %21 = sbr.rel target = $region3
    $region8: #{tpu_custom_call.1} parent=1 // loop_exit
      _
    %1325 = vsyncpa [#allocation5], 1
    %s1326 = scalar_lea.sflag [#allocation5], 1
    %1327 = vsyncpa %s1326, 1

</llo_original>
